<compile_context>
chip_gen: v6e
topology: v6e:2x2x1
jax: 0.10.0
libtpu: 0.0.40
codegen_flags: <defaults>
</compile_context>

<pallas_src>
import functools

import jax
import jax.numpy as jnp
from jax.experimental import pallas as pl
from jax.experimental.pallas import tpu as pltpu


def _conv_bn_relu_kernel(x_ref, w_ref, shift_ref, o_ref, *, kh, kw, wp, l_out):
    """One image per grid step: conv (as shifted matmuls) + BN shift + ReLU.

    x_ref:     (1, L_in, Cin)      bf16  zero-padded, spatially flattened NHWC
    w_ref:     (KH*KW, Cin, Cpad)  bf16  conv weight with BN scale folded in
    shift_ref: (1, Cpad)           f32   folded BN shift (includes conv bias)
    o_ref:     (1, L_out, Cpad)    f32   flattened (H_out, Wp) x Cpad output
    """
    cpad = o_ref.shape[-1]
    acc = jnp.zeros((l_out, cpad), jnp.float32)
    for ki in range(kh):                      # static, unrolled (KH*KW matmuls)
        for kj in range(kw):
            start = ki * wp + kj              # static row offset of this tap
            window = x_ref[0, pl.ds(start, l_out), :]        # (L_out, Cin) bf16
            acc = acc + jnp.dot(window, w_ref[ki * kw + kj],
                                preferred_element_type=jnp.float32)
    y = acc + shift_ref[...]                  # broadcast (1, Cpad) shift
    o_ref[0] = jnp.maximum(y, 0.0).astype(o_ref.dtype)


def basic_conv2d(x, weight, bias, gamma, beta, running_mean, running_var,
                 *, padding=1, eps=1e-5):
    """Conv2d(stride=1, padding=padding) + BatchNorm2d(eval) + ReLU.

    x:      (N, Cin, H, W)  float32 (NCHW, same as PyTorch)
    weight: (Cout, Cin, KH, KW)
    returns (N, Cout, H_out, W_out)  float32 (NCHW, module parity)
    """
    n, cin, h, w = x.shape
    cout, cin_w, kh, kw = weight.shape
    assert cin_w == cin, "channel mismatch"
    pad = padding

    h_out = h + 2 * pad - kh + 1
    w_out = w + 2 * pad - kw + 1
    wp = w + 2 * pad                     # padded width (lane of the spatial grid)
    hp_ext = h + 2 * pad + 1             # +1 zero row so wrapped tap reads stay in-bounds
    l_in = hp_ext * wp
    l_out = h_out * wp                   # outputs computed on padded width; junk cols sliced
    lane = 128
    cpad = -(-cout // lane) * lane       # lane-dense output channel count

    # ---- glue (plain JAX, one cheap pass): NCHW -> NHWC, pad, flatten, bf16 ----
    x_nhwc = jnp.transpose(x, (0, 2, 3, 1))                       # (N, H, W, Cin)
    xp = jnp.pad(x_nhwc, ((0, 0), (pad, pad + 1), (pad, pad), (0, 0)))
    x_flat = xp.reshape(n, l_in, cin).astype(jnp.bfloat16)        # (N, L_in, Cin)

    # ---- fold BN: scale into the weights, shift kept for the epilogue ----
    inv_std = jax.lax.rsqrt(running_var + eps)
    scale = gamma * inv_std                                       # (Cout,)
    shift = beta + scale * (bias - running_mean)                  # (Cout,)
    w_hwio = jnp.transpose(weight, (2, 3, 1, 0))                  # (KH, KW, Cin, Cout)
    w_scaled = w_hwio * scale[None, None, None, :]                # fold in f32
    w_k = w_scaled.reshape(kh * kw, cin, cout)
    w_k = jnp.pad(w_k, ((0, 0), (0, 0), (0, cpad - cout))).astype(jnp.bfloat16)
    shift_p = jnp.pad(shift, (0, cpad - cout)).reshape(1, cpad).astype(jnp.float32)

    # ---- VMEM budget: raise the scoped limit only when actually needed ----
    cin_lanes = -(-cin // lane) * lane
    vmem_needed = (2 * l_in * cin_lanes * 2          # double-buffered bf16 input slab
                   + 2 * l_out * cpad * 4            # double-buffered f32 output slab
                   + kh * kw * cin_lanes * cpad * 2  # resident weights
                   + cpad * 4
                   + l_out * cpad * 4                # f32 accumulator
                   + 2 * l_out * cin_lanes * 2)      # shifted-window copies
    vmem_limit = None
    if vmem_needed > 24 * 1024 * 1024:
        # TODO(synk): cap below 64 MiB (and tile H) when targeting v7x's smaller VMEM.
        vmem_limit = min(int(1.5 * vmem_needed), 110 * 1024 * 1024)

    kernel = functools.partial(_conv_bn_relu_kernel,
                               kh=kh, kw=kw, wp=wp, l_out=l_out)

    out = pl.pallas_call(
        kernel,
        out_shape=jax.ShapeDtypeStruct((n, l_out, cpad), jnp.float32),
        grid_spec=pltpu.PrefetchScalarGridSpec(
            num_scalar_prefetch=0,
            grid=(n,),
            in_specs=[
                pl.BlockSpec((1, l_in, cin), lambda i: (i, 0, 0)),
                pl.BlockSpec((kh * kw, cin, cpad), lambda i: (0, 0, 0)),
                pl.BlockSpec((1, cpad), lambda i: (0, 0)),
            ],
            out_specs=pl.BlockSpec((1, l_out, cpad), lambda i: (i, 0, 0)),
        ),
        compiler_params=pltpu.CompilerParams(
            dimension_semantics=("parallel",),
            vmem_limit_bytes=vmem_limit),
    )(x_flat, w_k, shift_p)

    # (N, L_out, Cpad) -> (N, H_out, Wp, Cpad) -> drop junk cols / pad channels.
    out = out.reshape(n, h_out, wp, cpad)[:, :, :w_out, :cout]
    # NCHW for PyTorch-module parity.  Downstream NHWC consumers can skip this
    # transpose entirely (the kernel's natural output layout is NHWC).
    return jnp.transpose(out, (0, 3, 1, 2))


if __name__ == "__main__":
    # Small shapes consistent with BasicConv2d(4, 8, kernel_size=3, padding=1)
    N, Cin, H, W = 2, 4, 16, 16
    Cout, KH, KW = 8, 3, 3

    key = jax.random.PRNGKey(0)
    k0, k1, k2, k3, k4, k5, k6 = jax.random.split(key, 7)

    x = jax.random.normal(k0, (N, Cin, H, W), dtype=jnp.float32)
    weight = jax.random.normal(k1, (Cout, Cin, KH, KW), dtype=jnp.float32) * 0.1
    bias = jax.random.normal(k2, (Cout,), dtype=jnp.float32) * 0.1
    gamma = 1.0 + 0.1 * jax.random.normal(k3, (Cout,), dtype=jnp.float32)
    beta = 0.1 * jax.random.normal(k4, (Cout,), dtype=jnp.float32)
    running_mean = 0.1 * jax.random.normal(k5, (Cout,), dtype=jnp.float32)
    running_var = jnp.abs(jax.random.normal(k6, (Cout,), dtype=jnp.float32)) + 0.5

    fn = jax.jit(functools.partial(basic_conv2d, padding=1))
    out = fn(x, weight, bias, gamma, beta, running_mean, running_var)
    jax.block_until_ready(out)
    assert out.shape == (N, Cout, H, W), f"bad output shape {out.shape}"

    # Reference with the same bf16 operand quantization the kernel uses
    # (scale folded into weights in f32, then rounded to bf16; f32 accumulate).
    scale = gamma / jnp.sqrt(running_var + 1e-5)
    w_folded = (weight * scale[:, None, None, None]
                ).astype(jnp.bfloat16).astype(jnp.float32)
    x_q = x.astype(jnp.bfloat16).astype(jnp.float32)
    ref_conv = jax.lax.conv_general_dilated(
        x_q, w_folded, window_strides=(1, 1), padding=((1, 1), (1, 1)),
        dimension_numbers=("NCHW", "OIHW", "NCHW"),
        precision=jax.lax.Precision.HIGHEST)
    shift = beta + scale * (bias - running_mean)
    ref = jnp.maximum(ref_conv + shift[None, :, None, None], 0.0)
    assert jnp.allclose(out, ref, atol=2e-3, rtol=2e-3), "mismatch vs reference"

    print("KERNEL_OK")
</pallas_src>

<mosaic_0001>
module attributes {stable_mosaic.version = 11 : i64} {
  func.func @_conv_bn_relu_kernel(%arg0: i32, %arg1: memref<1x342x4xbf16, #tpu.memory_space<vmem>>, %arg2: memref<9x4x128xbf16, #tpu.memory_space<vmem>>, %arg3: memref<1x128xf32, #tpu.memory_space<vmem>>, %arg4: memref<1x288x128xf32, #tpu.memory_space<vmem>>) attributes {dimension_semantics = [#tpu.dimension_semantics<parallel>], iteration_bounds = array<i64: 2>, scalar_prefetch = 0 : i64, scratch_operands = 0 : i64, tpu.core_type = #tpu.core_type<tc>, window_params = [{transform_indices = @transform_0, window_bounds = array<i64: 1, 342, 4>}, {pipeline_mode = #tpu.pipeline_mode<synchronous>, transform_indices = @transform_1, window_bounds = array<i64: 9, 4, 128>}, {pipeline_mode = #tpu.pipeline_mode<synchronous>, transform_indices = @transform_2, window_bounds = array<i64: 1, 128>}, {transform_indices = @transform_3, window_bounds = array<i64: 1, 288, 128>}]} {
    %cst = arith.constant 0.000000e+00 : f32
    %0 = vector.broadcast %cst : f32 to vector<288x128xf32>
    %c0 = arith.constant 0 : index
    %c0_0 = arith.constant 0 : index
    %c0_1 = arith.constant 0 : index
    %1 = vector.load %arg1[%c0, %c0_0, %c0_1] : memref<1x342x4xbf16, #tpu.memory_space<vmem>>, vector<1x288x4xbf16>
    %2 = vector.shape_cast %1 : vector<1x288x4xbf16> to vector<288x4xbf16>
    %c0_2 = arith.constant 0 : index
    %c0_3 = arith.constant 0 : index
    %c0_4 = arith.constant 0 : index
    %3 = vector.load %arg2[%c0_2, %c0_3, %c0_4] : memref<9x4x128xbf16, #tpu.memory_space<vmem>>, vector<1x4x128xbf16>
    %4 = vector.shape_cast %3 : vector<1x4x128xbf16> to vector<4x128xbf16>
    %cst_5 = arith.constant dense<0.000000e+00> : vector<288x128xf32>
    %5 = tpu.matmul %2, %4, %cst_5 {dimension_numbers = #tpu.dot_dimension_numbers<[1], [0], [0], [1], [0, 0, 1, 1], [], []>} : vector<288x4xbf16>, vector<4x128xbf16>, vector<288x128xf32> -> vector<288x128xf32>
    %6 = arith.addf %0, %5 : vector<288x128xf32>
    %c0_6 = arith.constant 0 : index
    %c1 = arith.constant 1 : index
    %c0_7 = arith.constant 0 : index
    %7 = vector.load %arg1[%c0_6, %c1, %c0_7] : memref<1x342x4xbf16, #tpu.memory_space<vmem>>, vector<1x288x4xbf16>
    %8 = vector.shape_cast %7 : vector<1x288x4xbf16> to vector<288x4xbf16>
    %c1_8 = arith.constant 1 : index
    %c0_9 = arith.constant 0 : index
    %c0_10 = arith.constant 0 : index
    %9 = vector.load %arg2[%c1_8, %c0_9, %c0_10] : memref<9x4x128xbf16, #tpu.memory_space<vmem>>, vector<1x4x128xbf16>
    %10 = vector.shape_cast %9 : vector<1x4x128xbf16> to vector<4x128xbf16>
    %cst_11 = arith.constant dense<0.000000e+00> : vector<288x128xf32>
    %11 = tpu.matmul %8, %10, %cst_11 {dimension_numbers = #tpu.dot_dimension_numbers<[1], [0], [0], [1], [0, 0, 1, 1], [], []>} : vector<288x4xbf16>, vector<4x128xbf16>, vector<288x128xf32> -> vector<288x128xf32>
    %12 = arith.addf %6, %11 : vector<288x128xf32>
    %c0_12 = arith.constant 0 : index
    %c2 = arith.constant 2 : index
    %c0_13 = arith.constant 0 : index
    %13 = vector.load %arg1[%c0_12, %c2, %c0_13] : memref<1x342x4xbf16, #tpu.memory_space<vmem>>, vector<1x288x4xbf16>
    %14 = vector.shape_cast %13 : vector<1x288x4xbf16> to vector<288x4xbf16>
    %c2_14 = arith.constant 2 : index
    %c0_15 = arith.constant 0 : index
    %c0_16 = arith.constant 0 : index
    %15 = vector.load %arg2[%c2_14, %c0_15, %c0_16] : memref<9x4x128xbf16, #tpu.memory_space<vmem>>, vector<1x4x128xbf16>
    %16 = vector.shape_cast %15 : vector<1x4x128xbf16> to vector<4x128xbf16>
    %cst_17 = arith.constant dense<0.000000e+00> : vector<288x128xf32>
    %17 = tpu.matmul %14, %16, %cst_17 {dimension_numbers = #tpu.dot_dimension_numbers<[1], [0], [0], [1], [0, 0, 1, 1], [], []>} : vector<288x4xbf16>, vector<4x128xbf16>, vector<288x128xf32> -> vector<288x128xf32>
    %18 = arith.addf %12, %17 : vector<288x128xf32>
    %c0_18 = arith.constant 0 : index
    %c18 = arith.constant 18 : index
    %c0_19 = arith.constant 0 : index
    %19 = vector.load %arg1[%c0_18, %c18, %c0_19] : memref<1x342x4xbf16, #tpu.memory_space<vmem>>, vector<1x288x4xbf16>
    %20 = vector.shape_cast %19 : vector<1x288x4xbf16> to vector<288x4xbf16>
    %c3 = arith.constant 3 : index
    %c0_20 = arith.constant 0 : index
    %c0_21 = arith.constant 0 : index
    %21 = vector.load %arg2[%c3, %c0_20, %c0_21] : memref<9x4x128xbf16, #tpu.memory_space<vmem>>, vector<1x4x128xbf16>
    %22 = vector.shape_cast %21 : vector<1x4x128xbf16> to vector<4x128xbf16>
    %cst_22 = arith.constant dense<0.000000e+00> : vector<288x128xf32>
    %23 = tpu.matmul %20, %22, %cst_22 {dimension_numbers = #tpu.dot_dimension_numbers<[1], [0], [0], [1], [0, 0, 1, 1], [], []>} : vector<288x4xbf16>, vector<4x128xbf16>, vector<288x128xf32> -> vector<288x128xf32>
    %24 = arith.addf %18, %23 : vector<288x128xf32>
    %c0_23 = arith.constant 0 : index
    %c19 = arith.constant 19 : index
    %c0_24 = arith.constant 0 : index
    %25 = vector.load %arg1[%c0_23, %c19, %c0_24] : memref<1x342x4xbf16, #tpu.memory_space<vmem>>, vector<1x288x4xbf16>
    %26 = vector.shape_cast %25 : vector<1x288x4xbf16> to vector<288x4xbf16>
    %c4 = arith.constant 4 : index
    %c0_25 = arith.constant 0 : index
    %c0_26 = arith.constant 0 : index
    %27 = vector.load %arg2[%c4, %c0_25, %c0_26] : memref<9x4x128xbf16, #tpu.memory_space<vmem>>, vector<1x4x128xbf16>
    %28 = vector.shape_cast %27 : vector<1x4x128xbf16> to vector<4x128xbf16>
    %cst_27 = arith.constant dense<0.000000e+00> : vector<288x128xf32>
    %29 = tpu.matmul %26, %28, %cst_27 {dimension_numbers = #tpu.dot_dimension_numbers<[1], [0], [0], [1], [0, 0, 1, 1], [], []>} : vector<288x4xbf16>, vector<4x128xbf16>, vector<288x128xf32> -> vector<288x128xf32>
    %30 = arith.addf %24, %29 : vector<288x128xf32>
    %c0_28 = arith.constant 0 : index
    %c20 = arith.constant 20 : index
    %c0_29 = arith.constant 0 : index
    %31 = vector.load %arg1[%c0_28, %c20, %c0_29] : memref<1x342x4xbf16, #tpu.memory_space<vmem>>, vector<1x288x4xbf16>
    %32 = vector.shape_cast %31 : vector<1x288x4xbf16> to vector<288x4xbf16>
    %c5 = arith.constant 5 : index
    %c0_30 = arith.constant 0 : index
    %c0_31 = arith.constant 0 : index
    %33 = vector.load %arg2[%c5, %c0_30, %c0_31] : memref<9x4x128xbf16, #tpu.memory_space<vmem>>, vector<1x4x128xbf16>
    %34 = vector.shape_cast %33 : vector<1x4x128xbf16> to vector<4x128xbf16>
    %cst_32 = arith.constant dense<0.000000e+00> : vector<288x128xf32>
    %35 = tpu.matmul %32, %34, %cst_32 {dimension_numbers = #tpu.dot_dimension_numbers<[1], [0], [0], [1], [0, 0, 1, 1], [], []>} : vector<288x4xbf16>, vector<4x128xbf16>, vector<288x128xf32> -> vector<288x128xf32>
    %36 = arith.addf %30, %35 : vector<288x128xf32>
    %c0_33 = arith.constant 0 : index
    %c36 = arith.constant 36 : index
    %c0_34 = arith.constant 0 : index
    %37 = vector.load %arg1[%c0_33, %c36, %c0_34] : memref<1x342x4xbf16, #tpu.memory_space<vmem>>, vector<1x288x4xbf16>
    %38 = vector.shape_cast %37 : vector<1x288x4xbf16> to vector<288x4xbf16>
    %c6 = arith.constant 6 : index
    %c0_35 = arith.constant 0 : index
    %c0_36 = arith.constant 0 : index
    %39 = vector.load %arg2[%c6, %c0_35, %c0_36] : memref<9x4x128xbf16, #tpu.memory_space<vmem>>, vector<1x4x128xbf16>
    %40 = vector.shape_cast %39 : vector<1x4x128xbf16> to vector<4x128xbf16>
    %cst_37 = arith.constant dense<0.000000e+00> : vector<288x128xf32>
    %41 = tpu.matmul %38, %40, %cst_37 {dimension_numbers = #tpu.dot_dimension_numbers<[1], [0], [0], [1], [0, 0, 1, 1], [], []>} : vector<288x4xbf16>, vector<4x128xbf16>, vector<288x128xf32> -> vector<288x128xf32>
    %42 = arith.addf %36, %41 : vector<288x128xf32>
    %c0_38 = arith.constant 0 : index
    %c37 = arith.constant 37 : index
    %c0_39 = arith.constant 0 : index
    %43 = vector.load %arg1[%c0_38, %c37, %c0_39] : memref<1x342x4xbf16, #tpu.memory_space<vmem>>, vector<1x288x4xbf16>
    %44 = vector.shape_cast %43 : vector<1x288x4xbf16> to vector<288x4xbf16>
    %c7 = arith.constant 7 : index
    %c0_40 = arith.constant 0 : index
    %c0_41 = arith.constant 0 : index
    %45 = vector.load %arg2[%c7, %c0_40, %c0_41] : memref<9x4x128xbf16, #tpu.memory_space<vmem>>, vector<1x4x128xbf16>
    %46 = vector.shape_cast %45 : vector<1x4x128xbf16> to vector<4x128xbf16>
    %cst_42 = arith.constant dense<0.000000e+00> : vector<288x128xf32>
    %47 = tpu.matmul %44, %46, %cst_42 {dimension_numbers = #tpu.dot_dimension_numbers<[1], [0], [0], [1], [0, 0, 1, 1], [], []>} : vector<288x4xbf16>, vector<4x128xbf16>, vector<288x128xf32> -> vector<288x128xf32>
    %48 = arith.addf %42, %47 : vector<288x128xf32>
    %c0_43 = arith.constant 0 : index
    %c38 = arith.constant 38 : index
    %c0_44 = arith.constant 0 : index
    %49 = vector.load %arg1[%c0_43, %c38, %c0_44] : memref<1x342x4xbf16, #tpu.memory_space<vmem>>, vector<1x288x4xbf16>
    %50 = vector.shape_cast %49 : vector<1x288x4xbf16> to vector<288x4xbf16>
    %c8 = arith.constant 8 : index
    %c0_45 = arith.constant 0 : index
    %c0_46 = arith.constant 0 : index
    %51 = vector.load %arg2[%c8, %c0_45, %c0_46] : memref<9x4x128xbf16, #tpu.memory_space<vmem>>, vector<1x4x128xbf16>
    %52 = vector.shape_cast %51 : vector<1x4x128xbf16> to vector<4x128xbf16>
    %cst_47 = arith.constant dense<0.000000e+00> : vector<288x128xf32>
    %53 = tpu.matmul %50, %52, %cst_47 {dimension_numbers = #tpu.dot_dimension_numbers<[1], [0], [0], [1], [0, 0, 1, 1], [], []>} : vector<288x4xbf16>, vector<4x128xbf16>, vector<288x128xf32> -> vector<288x128xf32>
    %54 = arith.addf %48, %53 : vector<288x128xf32>
    %c0_48 = arith.constant 0 : index
    %c0_49 = arith.constant 0 : index
    %55 = vector.load %arg3[%c0_48, %c0_49] : memref<1x128xf32, #tpu.memory_space<vmem>>, vector<1x128xf32>
    %56 = vector.broadcast %55 : vector<1x128xf32> to vector<288x128xf32>
    %57 = arith.addf %54, %56 : vector<288x128xf32>
    %cst_50 = arith.constant 0.000000e+00 : f32
    %58 = vector.broadcast %cst_50 : f32 to vector<288x128xf32>
    %59 = arith.maximumf %57, %58 : vector<288x128xf32>
    %c0_51 = arith.constant 0 : index
    %c0_52 = arith.constant 0 : index
    %c0_53 = arith.constant 0 : index
    %60 = vector.load %arg4[%c0_51, %c0_52, %c0_53] : memref<1x288x128xf32, #tpu.memory_space<vmem>>, vector<1x288x128xf32>
    %61 = vector.shape_cast %60 : vector<1x288x128xf32> to vector<288x128xf32>
    %62 = vector.shape_cast %59 : vector<288x128xf32> to vector<1x288x128xf32>
    tpu.vector_store %arg4[%c0_51, %c0_52, %c0_53], %62 {strides = array<i32>} : memref<1x288x128xf32, #tpu.memory_space<vmem>>, vector<1x288x128xf32>,
    return
  }
  func.func @transform_0(%arg0: i32) -> (i32, i32, i32) {
    %c0_i32 = arith.constant 0 : i32
    %c0_i32_0 = arith.constant 0 : i32
    %c0_i32_1 = arith.constant 0 : i32
    return %arg0, %c0_i32, %c0_i32_0 : i32, i32, i32
  }
  func.func @transform_1(%arg0: i32) -> (i32, i32, i32) {
    %c0_i32 = arith.constant 0 : i32
    %c0_i32_0 = arith.constant 0 : i32
    %c0_i32_1 = arith.constant 0 : i32
    %c0_i32_2 = arith.constant 0 : i32
    return %c0_i32, %c0_i32_0, %c0_i32_1 : i32, i32, i32
  }
  func.func @transform_2(%arg0: i32) -> (i32, i32) {
    %c0_i32 = arith.constant 0 : i32
    %c0_i32_0 = arith.constant 0 : i32
    %c0_i32_1 = arith.constant 0 : i32
    return %c0_i32, %c0_i32_0 : i32, i32
  }
  func.func @transform_3(%arg0: i32) -> (i32, i32, i32) {
    %c0_i32 = arith.constant 0 : i32
    %c0_i32_0 = arith.constant 0 : i32
    %c0_i32_1 = arith.constant 0 : i32
    return %arg0, %c0_i32, %c0_i32_0 : i32, i32, i32
  }
}

</mosaic_0001>

<llo_original>
// kernel: basic_conv2d.1
$region0: #{basic_conv2d.1}
  #allocation0 [shape = 'u32[]', space=smem, size = 0x4, offset = 0x4, fixed_abs, tag = 'smem constant byte address 0x4 - core index']
  #allocation1 [shape = 'u32[144,128]{1,0:T(1,128)}', space=vmem, size = 0x12000, scoped, tag = 'internal scratch']
  %s0 = inlined_call_operand.vmem [shape: bf16[2,342,4], index: 0, kind: input, shape index: {}]
  %s1 = inlined_call_operand.vmem [shape: bf16[9,4,128], index: 1, kind: input, shape index: {}]
  %s2 = inlined_call_operand.vmem [shape: f32[1,128], index: 2, kind: input, shape index: {}]
  %s3 = inlined_call_operand.vmem [shape: f32[2,288,128], index: 3, kind: output, shape index: {}]
  %s4 = sld [smem:[#allocation0]]
  $region45: #{basic_conv2d.1} parent=0
    _
  %s6 = ssub.s32 1, %s4
  %s7 = scalar_select 0, %s6, %s4
  loop: start=0, step=1, limit=4
  $region2: #{basic_conv2d.1} parent=0 // loop_pre_header
    _
  $region3: #{basic_conv2d.1} parent=0 // loop_header
    %s9 = sphi 0, %s13
    %p10 = scmp.ge.s32.totalorder %s9, 4
    %s19 = sphi 0, %s21
    %s22 = sphi 0, %s19
    %s23 = sphi 0, %s22
    %s39 = sphi 0, %s23
    %s43 = sphi 0, %s43
    %s45 = sphi 0, %s43
    %s46 = sphi 0, %s45
    %s60 = sphi 0, %s46
    %s64 = sphi 0, %s64
    %s66 = sphi 0, %s64
    %s67 = sphi 0, %s66
    %s81 = sphi 0, %s67
    %s87 = sphi 0, %s89
    %s90 = sphi 0, %s87
    %s91 = sphi 0, %s90
    %s107 = sphi 0, %s91
  $region4: #{basic_conv2d.1} parent=0 // loop_header_branch
    %12 = sbr.rel (%p10) target = $region8
  $region5: #{basic_conv2d.1} parent=0 // loop_body
    %s14 = ssub.s32 %s9, 1
    %s15 = ssub.s32 %s9, 2
    %s16 = sadd.s32 %s9, 1
    %s17 = ssub.s32 %s9, %s16
    %p18 = scmp.eq.s32.totalorder %s17, 0
    %s20 = sadd.s32 %s19, 1
    %s21 = scalar_select %p18, %s19, %s20
    %p24 = pneg %p18
    %p25 = scmp.eq.s32.totalorder %s9, 1
    %p26 = por %p24, %p25
    %p27 = scmp.ne.s32.totalorder %s19, %s22
    %p28 = scmp.eq.s32.totalorder %s9, 0
    %p29 = por %p27, %p28
    %p30 = scmp.ne.s32.totalorder %s19, %s22
    %p31 = scmp.eq.s32.totalorder %s14, 1
    %p32 = por %p30, %p31
    %p33 = scmp.ne.s32.totalorder %s22, %s23
    %p34 = scmp.eq.s32.totalorder %s14, 0
    %p35 = por %p33, %p34
    %p36 = scmp.ne.s32.totalorder %s22, %s23
    %p37 = scmp.eq.s32.totalorder %s15, 1
    %p38 = por %p36, %p37
    %p40 = scmp.ne.s32.totalorder %s23, %s39
    %p41 = scmp.eq.s32.totalorder %s15, 0
    %p42 = por %p40, %p41
    %s44 = sadd.s32 %s43, 1
    %p47 = scmp.eq.s32.totalorder %s9, 1
    %p48 = scmp.ne.s32.totalorder %s43, %s45
    %p49 = scmp.eq.s32.totalorder %s9, 0
    %p50 = por %p48, %p49
    %p51 = scmp.ne.s32.totalorder %s43, %s45
    %p52 = scmp.eq.s32.totalorder %s14, 1
    %p53 = por %p51, %p52
    %p54 = scmp.ne.s32.totalorder %s45, %s46
    %p55 = scmp.eq.s32.totalorder %s14, 0
    %p56 = por %p54, %p55
    %p57 = scmp.ne.s32.totalorder %s45, %s46
    %p58 = scmp.eq.s32.totalorder %s15, 1
    %p59 = por %p57, %p58
    %p61 = scmp.ne.s32.totalorder %s46, %s60
    %p62 = scmp.eq.s32.totalorder %s15, 0
    %p63 = por %p61, %p62
    %s65 = sadd.s32 %s64, 1
    %p68 = scmp.eq.s32.totalorder %s9, 1
    %p69 = scmp.ne.s32.totalorder %s64, %s66
    %p70 = scmp.eq.s32.totalorder %s9, 0
    %p71 = por %p69, %p70
    %p72 = scmp.ne.s32.totalorder %s64, %s66
    %p73 = scmp.eq.s32.totalorder %s14, 1
    %p74 = por %p72, %p73
    %p75 = scmp.ne.s32.totalorder %s66, %s67
    %p76 = scmp.eq.s32.totalorder %s14, 0
    %p77 = por %p75, %p76
    %p78 = scmp.ne.s32.totalorder %s66, %s67
    %p79 = scmp.eq.s32.totalorder %s15, 1
    %p80 = por %p78, %p79
    %p82 = scmp.ne.s32.totalorder %s67, %s81
    %p83 = scmp.eq.s32.totalorder %s15, 0
    %p84 = por %p82, %p83
    %s85 = ssub.s32 %s9, %s16
    %p86 = scmp.eq.s32.totalorder %s85, 0
    %s88 = sadd.s32 %s87, 1
    %s89 = scalar_select %p86, %s87, %s88
    %p92 = pneg %p86
    %p93 = scmp.eq.s32.totalorder %s9, 1
    %p94 = por %p92, %p93
    %p95 = scmp.ne.s32.totalorder %s87, %s90
    %p96 = scmp.eq.s32.totalorder %s9, 0
    %p97 = por %p95, %p96
    %p98 = scmp.ne.s32.totalorder %s87, %s90
    %p99 = scmp.eq.s32.totalorder %s14, 1
    %p100 = por %p98, %p99
    %p101 = scmp.ne.s32.totalorder %s90, %s91
    %p102 = scmp.eq.s32.totalorder %s14, 0
    %p103 = por %p101, %p102
    %p104 = scmp.ne.s32.totalorder %s90, %s91
    %p105 = scmp.eq.s32.totalorder %s15, 1
    %p106 = por %p104, %p105
    %p108 = scmp.ne.s32.totalorder %s91, %s107
    %p109 = scmp.eq.s32.totalorder %s15, 0
    %p110 = por %p108, %p109
    %p111 = scmp.le.s32.totalorder 1, %s9
    %p112 = scmp.lt.s32.totalorder %s9, 3
    %p113 = pnand %p111, %p112
    %p114 = pneg %p113
    // Predicated region
    $region9: #{basic_conv2d.1} parent=5 // pred_check
      _
    $region10: #{basic_conv2d.1} parent=5 // pred_check_branch
      %116 = sbr.rel (%p113) target = $region12
    $region11: #{basic_conv2d.1} parent=5 // pred_region
      %s117 = ssub.s32 %s9, 1
      // Predicated region
      $region13: #{basic_conv2d.1} parent=11 // pred_check
        %p118 = pneg %p56
      $region14: #{basic_conv2d.1} parent=11 // pred_check_branch
        %120 = sbr.rel (%p118) target = $region16
      $region15: #{basic_conv2d.1} parent=11 // pred_region
        _
      $region16: #{basic_conv2d.1} parent=11 // pred_fallthru
        _
      // Predicated region
      $region17: #{basic_conv2d.1} parent=11 // pred_check
        %p121 = pneg %p77
      $region18: #{basic_conv2d.1} parent=11 // pred_check_branch
        %123 = sbr.rel (%p121) target = $region20
      $region19: #{basic_conv2d.1} parent=11 // pred_region
        _
      $region20: #{basic_conv2d.1} parent=11 // pred_fallthru
        _
    $region12: #{basic_conv2d.1} parent=5 // pred_fallthru
      _
    %p124 = scmp.lt.s32.totalorder %s9, 2
    // Predicated region
    $region21: #{basic_conv2d.1} parent=5 // pred_check
      %p125 = pneg %p124
    $region22: #{basic_conv2d.1} parent=5 // pred_check_branch
      %127 = sbr.rel (%p125) target = $region24
    $region23: #{basic_conv2d.1} parent=5 // pred_region
      // Predicated region
      $region25: #{basic_conv2d.1} parent=23 // pred_check
        %p128 = pneg %p29
      $region26: #{basic_conv2d.1} parent=23 // pred_check_branch
        %130 = sbr.rel (%p128) target = $region28
      $region27: #{basic_conv2d.1} parent=23 // pred_region
        %p131 = scmp.lt.s32.totalorder %s9, 1
        %s132 = scalar_select %p131, %s9, 1
        %s133 = smul.addr %s132, 43
        %s134 = smul.addr %s133, 4
        %s135 = scalar_lea.vmem %s0, %s134
      $region28: #{basic_conv2d.1} parent=23 // pred_fallthru
        _
    $region24: #{basic_conv2d.1} parent=5 // pred_fallthru
      _
    %p136 = scmp.le.s32.totalorder 1, %s9
    %p137 = scmp.lt.s32.totalorder %s9, 3
    %p138 = pnand %p136, %p137
    %p139 = pneg %p138
    // Predicated region
    $region29: #{basic_conv2d.1} parent=5 // pred_check
      _
    $region30: #{basic_conv2d.1} parent=5 // pred_check_branch
      %141 = sbr.rel (%p138) target = $region32
    $region31: #{basic_conv2d.1} parent=5 // pred_region
      %s142 = ssub.s32 %s9, 1
      %p143 = scmp.lt.s32.totalorder %s14, 1
      %s144 = scalar_select %p143, %s14, 1
      %s145 = smul.addr %s144, 43
      %s146 = smul.addr %s145, 4
      %s147 = scalar_lea.vmem %s0, %s146
      %p148 = pneg %p35
      %p149 = pneg %p32
      %p150 = pneg %p56
      %p151 = pneg %p53
      %p152 = pneg %p77
      %p153 = pneg %p74
      %p154 = pneg %p103
      %p155 = pneg %p100
      %p156 = scmp.lt.s32.totalorder %s14, 1
      %s157 = scalar_select %p156, %s14, 1
      %s158 = smul.addr %s157, 36
      %s159 = smul.addr %s158, 8
      %s160 = scalar_lea.vmem %s3, %s159
      %p161 = scmp.lt.s32.totalorder %s14, 1
      %s162 = scalar_select %p161, %s14, 1
      %s163 = smul.addr %s162, 43
      %s164 = smul.addr %s163, 4
      %s165 = scalar_lea.vmem %s0, %s164
      %p166 = scmp.lt.s32.totalorder %s14, 1
      %s167 = scalar_select %p166, %s14, 1
      %s168 = smul.addr %s167, 36
      %s169 = smul.addr %s168, 8
      %s170 = scalar_lea.vmem %s3, %s169
      %v172 = vld [vmem:[%s165] sm:$0xf]
      %v173 = vld [vmem:[%s165 + $0x4] sm:$0xf]
      %v174 = vld [vmem:[%s165 + $0x8] sm:$0xf]
      %v175 = vld [vmem:[%s165 + $0xc] sm:$0xf]
      %v176 = vld [vmem:[%s165 + $0x10] sm:$0xf]
      %v177 = vld [vmem:[%s165 + $0x14] sm:$0xf]
      %v178 = vld [vmem:[%s165 + $0x18] sm:$0xf]
      %v179 = vld [vmem:[%s165 + $0x1c] sm:$0xf]
      %v180 = vld [vmem:[%s165 + $0x20] sm:$0xf]
      %v181 = vld [vmem:[%s165 + $0x24] sm:$0xf]
      %v182 = vld [vmem:[%s165 + $0x28] sm:$0xf]
      %v183 = vld [vmem:[%s165 + $0x2c] sm:$0xf]
      %v184 = vld [vmem:[%s165 + $0x30] sm:$0xf]
      %v185 = vld [vmem:[%s165 + $0x34] sm:$0xf]
      %v186 = vld [vmem:[%s165 + $0x38] sm:$0xf]
      %v187 = vld [vmem:[%s165 + $0x3c] sm:$0xf]
      %v188 = vld [vmem:[%s165 + $0x40] sm:$0xf]
      %v189 = vld [vmem:[%s165 + $0x44] sm:$0xf]
      %v190 = vld [vmem:[%s165 + $0x48] sm:$0xf]
      %v191 = vld [vmem:[%s165 + $0x4c] sm:$0xf]
      %v192 = vld [vmem:[%s165 + $0x50] sm:$0xf]
      %v193 = vld [vmem:[%s165 + $0x54] sm:$0xf]
      %v194 = vld [vmem:[%s165 + $0x58] sm:$0xf]
      %v195 = vld [vmem:[%s165 + $0x5c] sm:$0xf]
      %v196 = vld [vmem:[%s165 + $0x60] sm:$0xf]
      %v197 = vld [vmem:[%s165 + $0x64] sm:$0xf]
      %v198 = vld [vmem:[%s165 + $0x68] sm:$0xf]
      %v199 = vld [vmem:[%s165 + $0x6c] sm:$0xf]
      %v200 = vld [vmem:[%s165 + $0x70] sm:$0xf]
      %v201 = vld [vmem:[%s165 + $0x74] sm:$0xf]
      %v202 = vld [vmem:[%s165 + $0x78] sm:$0xf]
      %v203 = vld [vmem:[%s165 + $0x7c] sm:$0xf]
      %v204 = vld [vmem:[%s165 + $0x80] sm:$0xf]
      %v205 = vld [vmem:[%s165 + $0x84] sm:$0xf]
      %v206 = vld [vmem:[%s165 + $0x88] sm:$0xf]
      %v207 = vld [vmem:[%s165 + $0x8c] sm:$0xf]
      %v208 = vld [vmem:[%s1] sm:$0x3]
      %v209 = vld [vmem:[%s165 + $0x90] sm:$0x1]
      %s210 = scalar_lea.vmem %s1, 2
      %v211 = vld [vmem:[%s210] sm:$0x3]
      %v249 = vunpack.c.l.b16 %v172
      %v250 = vunpack.c.l.b16 %v173
      %v251 = vunpack.c.l.b16 %v174
      %v252 = vunpack.c.l.b16 %v175
      %v253 = vunpack.c.l.b16 %v176
      %v254 = vunpack.c.l.b16 %v177
      %v255 = vunpack.c.l.b16 %v178
      %v256 = vunpack.c.l.b16 %v179
      %v257 = vunpack.c.l.b16 %v180
      %v258 = vunpack.c.l.b16 %v181
      %v259 = vunpack.c.l.b16 %v182
      %v260 = vunpack.c.l.b16 %v183
      %v261 = vunpack.c.l.b16 %v184
      %v262 = vunpack.c.l.b16 %v185
      %v263 = vunpack.c.l.b16 %v186
      %v264 = vunpack.c.l.b16 %v187
      %v265 = vunpack.c.l.b16 %v188
      %v266 = vunpack.c.l.b16 %v189
      %v267 = vunpack.c.l.b16 %v190
      %v268 = vunpack.c.l.b16 %v191
      %v269 = vunpack.c.l.b16 %v192
      %v270 = vunpack.c.l.b16 %v193
      %v271 = vunpack.c.l.b16 %v194
      %v272 = vunpack.c.l.b16 %v195
      %v273 = vunpack.c.l.b16 %v196
      %v274 = vunpack.c.l.b16 %v197
      %v275 = vunpack.c.l.b16 %v198
      %v276 = vunpack.c.l.b16 %v199
      %v277 = vunpack.c.l.b16 %v200
      %v278 = vunpack.c.l.b16 %v201
      %v279 = vunpack.c.l.b16 %v202
      %v280 = vunpack.c.l.b16 %v203
      %v281 = vunpack.c.l.b16 %v204
      %v282 = vunpack.c.l.b16 %v205
      %v283 = vunpack.c.l.b16 %v206
      %v284 = vunpack.c.l.b16 %v207
      %v285 = vunpack.c.l.b16 %v209
      %v286 = vpack.c.b16 %v250, %v249
      %v287 = vpack.c.b16 %v252, %v251
      %v288 = vpack.c.b16 %v254, %v253
      %v289 = vpack.c.b16 %v256, %v255
      %v290 = vpack.c.b16 %v258, %v257
      %v291 = vpack.c.b16 %v260, %v259
      %v292 = vpack.c.b16 %v262, %v261
      %v293 = vpack.c.b16 %v264, %v263
      %v294 = vpack.c.b16 %v266, %v265
      %v295 = vpack.c.b16 %v268, %v267
      %v296 = vpack.c.b16 %v270, %v269
      %v297 = vpack.c.b16 %v272, %v271
      %v298 = vpack.c.b16 %v274, %v273
      %v299 = vpack.c.b16 %v276, %v275
      %v300 = vpack.c.b16 %v278, %v277
      %v301 = vpack.c.b16 %v280, %v279
      %v302 = vpack.c.b16 %v282, %v281
      %v303 = vpack.c.b16 %v284, %v283
      %v304 = vpack.c.b16 %v285, %v285
      %vm305 = vsmask.f32 7424
      %v307 = vshrl.u32 %v286, 16
      %v309 = vshll.u32 %v286, 16
      %v311 = vrot.slane %v309, 1
      %v312 = vor.u32 %v307, %v311
      %v314 = vshll.u32 %v287, 16
      %v316 = vrot.slane %v314, 1
      %v317 = vsel %vm305, %v312, %v316
      %v318 = vshrl.u32 %v287, 16
      %v320 = vor.u32 %v318, %v316
      %v322 = vshll.u32 %v288, 16
      %v324 = vrot.slane %v322, 1
      %v325 = vsel %vm305, %v320, %v324
      %v326 = vshrl.u32 %v288, 16
      %v328 = vor.u32 %v326, %v324
      %v330 = vshll.u32 %v289, 16
      %v332 = vrot.slane %v330, 1
      %v333 = vsel %vm305, %v328, %v332
      %v334 = vshrl.u32 %v289, 16
      %v336 = vor.u32 %v334, %v332
      %v338 = vshll.u32 %v290, 16
      %v340 = vrot.slane %v338, 1
      %v341 = vsel %vm305, %v336, %v340
      %v342 = vshrl.u32 %v290, 16
      %v344 = vor.u32 %v342, %v340
      %v346 = vshll.u32 %v291, 16
      %v348 = vrot.slane %v346, 1
      %v349 = vsel %vm305, %v344, %v348
      %v350 = vshrl.u32 %v291, 16
      %v352 = vor.u32 %v350, %v348
      %v354 = vshll.u32 %v292, 16
      %v356 = vrot.slane %v354, 1
      %v357 = vsel %vm305, %v352, %v356
      %v358 = vshrl.u32 %v292, 16
      %v360 = vor.u32 %v358, %v356
      %v362 = vshll.u32 %v293, 16
      %v364 = vrot.slane %v362, 1
      %v365 = vsel %vm305, %v360, %v364
      %v366 = vshrl.u32 %v293, 16
      %v368 = vor.u32 %v366, %v364
      %v370 = vshll.u32 %v294, 16
      %v372 = vrot.slane %v370, 1
      %v373 = vsel %vm305, %v368, %v372
      %v374 = vshrl.u32 %v294, 16
      %v376 = vor.u32 %v374, %v372
      %v378 = vshll.u32 %v295, 16
      %v380 = vrot.slane %v378, 1
      %v381 = vsel %vm305, %v376, %v380
      %v382 = vshrl.u32 %v295, 16
      %v384 = vor.u32 %v382, %v380
      %v386 = vshll.u32 %v296, 16
      %v388 = vrot.slane %v386, 1
      %v389 = vsel %vm305, %v384, %v388
      %v390 = vshrl.u32 %v296, 16
      %v392 = vor.u32 %v390, %v388
      %v394 = vshll.u32 %v297, 16
      %v396 = vrot.slane %v394, 1
      %v397 = vsel %vm305, %v392, %v396
      %v398 = vshrl.u32 %v297, 16
      %v400 = vor.u32 %v398, %v396
      %v402 = vshll.u32 %v298, 16
      %v404 = vrot.slane %v402, 1
      %v405 = vsel %vm305, %v400, %v404
      %v406 = vshrl.u32 %v298, 16
      %v408 = vor.u32 %v406, %v404
      %v410 = vshll.u32 %v299, 16
      %v412 = vrot.slane %v410, 1
      %v413 = vsel %vm305, %v408, %v412
      %v414 = vshrl.u32 %v299, 16
      %v416 = vor.u32 %v414, %v412
      %v418 = vshll.u32 %v300, 16
      %v420 = vrot.slane %v418, 1
      %v421 = vsel %vm305, %v416, %v420
      %v422 = vshrl.u32 %v300, 16
      %v424 = vor.u32 %v422, %v420
      %v426 = vshll.u32 %v301, 16
      %v428 = vrot.slane %v426, 1
      %v429 = vsel %vm305, %v424, %v428
      %v430 = vshrl.u32 %v301, 16
      %v432 = vor.u32 %v430, %v428
      %v434 = vshll.u32 %v302, 16
      %v436 = vrot.slane %v434, 1
      %v437 = vsel %vm305, %v432, %v436
      %v438 = vshrl.u32 %v302, 16
      %v440 = vor.u32 %v438, %v436
      %v442 = vshll.u32 %v303, 16
      %v444 = vrot.slane %v442, 1
      %v445 = vsel %vm305, %v440, %v444
      %v446 = vshrl.u32 %v303, 16
      %v448 = vor.u32 %v446, %v444
      %v450 = vshll.u32 %v304, 16
      %v452 = vrot.slane %v450, 1
      %v453 = vsel %vm305, %v448, %v452
      %vm454 = vcmask 31744
      %v456 = vsel %vm454, %v317, 0
      %v459 = vsel %vm454, %v325, 0
      %v462 = vsel %vm454, %v333, 0
      %v465 = vsel %vm454, %v341, 0
      %v468 = vsel %vm454, %v349, 0
      %v471 = vsel %vm454, %v357, 0
      %v474 = vsel %vm454, %v365, 0
      %v477 = vsel %vm454, %v373, 0
      %v480 = vsel %vm454, %v381, 0
      %v483 = vsel %vm454, %v389, 0
      %v486 = vsel %vm454, %v397, 0
      %v489 = vsel %vm454, %v405, 0
      %v492 = vsel %vm454, %v413, 0
      %v495 = vsel %vm454, %v421, 0
      %v498 = vsel %vm454, %v429, 0
      %v501 = vsel %vm454, %v437, 0
      %v504 = vsel %vm454, %v445, 0
      %v507 = vsel %vm454, %v453, 0
      %vm509 = vcmask 1041408
      %v511 = vsel %vm509, %v211, 0
      %513 = vmatprep.subr.bf16.mxu0 0
      %514 = vmatpush1.bf16.msra.mxu0 0
      %515 = vmatprep.subr.bf16.mxu0 0
      %516 = vmatpush1.bf16.msra.mxu0 0
      %517 = vmatprep.subr.bf16.mxu0 0
      %518 = vmatpush1.bf16.msra.mxu0 0
      %519 = vmatprep.subr.bf16.mxu0 0
      %520 = vmatpush1.bf16.msra.mxu0 0
      %521 = vmatprep.subr.bf16.mxu0 0
      %522 = vmatpush1.bf16.msra.mxu0 0
      %523 = vmatprep.subr.bf16.mxu0 0
      %524 = vmatpush1.bf16.msra.mxu0 0
      %525 = vmatprep.subr.bf16.mxu0 0
      %526 = vmatpush1.bf16.msra.mxu0 0
      %527 = vmatprep.subr.bf16.mxu0 0
      %528 = vmatpush1.bf16.msra.mxu0 %v511
      %529 = vmatprep.subr.bf16.mxu0 0
      %530 = vmatpush2.bf16.msra.mxu0 0
      %531 = vmatprep.subr.bf16.mxu0 0
      %532 = vmatpush2.bf16.msra.mxu0 0
      %533 = vmatprep.subr.bf16.mxu0 0
      %534 = vmatpush2.bf16.msra.mxu0 0
      %535 = vmatprep.subr.bf16.mxu0 0
      %536 = vmatpush2.bf16.msra.mxu0 0
      %537 = vmatprep.subr.bf16.mxu0 0
      %538 = vmatpush2.bf16.msra.mxu0 0
      %539 = vmatprep.subr.bf16.mxu0 0
      %540 = vmatpush2.bf16.msra.mxu0 0
      %541 = vmatprep.subr.bf16.mxu0 0
      %542 = vmatpush2.bf16.msra.mxu0 0
      %543 = vmatprep.subr.bf16.mxu0 0
      %544 = vmatpush2.bf16.msra.mxu0 0
      %545 = vmatprep.mubr.bf16.mxu0 0
      %546 = vmatmul.mubr.bf16.gmra.mxu0 %v456
      %v547 = vpop.f32.mrf.mxu0
      %v548 = vadd.f32 0.0, %v547
      %v549 = vpop.f32.mrf.mxu0
      %v550 = vpop.f32.mrf.mxu0
      %v551 = vadd.f32 0.0, %v550
      %v552 = vpop.f32.mrf.mxu0
      %553 = vmatprep.mubr.bf16.mxu0 0
      %554 = vmatmul.mubr.bf16.gmra.mxu0 %v459
      %v555 = vpop.f32.mrf.mxu0
      %v556 = vadd.f32 0.0, %v555
      %v557 = vpop.f32.mrf.mxu0
      %v558 = vpop.f32.mrf.mxu0
      %v559 = vadd.f32 0.0, %v558
      %v560 = vpop.f32.mrf.mxu0
      %561 = vmatprep.mubr.bf16.mxu0 0
      %562 = vmatmul.mubr.bf16.gmra.mxu0 %v462
      %v563 = vpop.f32.mrf.mxu0
      %v564 = vadd.f32 0.0, %v563
      %v565 = vpop.f32.mrf.mxu0
      %v566 = vpop.f32.mrf.mxu0
      %v567 = vadd.f32 0.0, %v566
      %v568 = vpop.f32.mrf.mxu0
      %569 = vmatprep.mubr.bf16.mxu0 0
      %570 = vmatmul.mubr.bf16.gmra.mxu0 %v465
      %v571 = vpop.f32.mrf.mxu0
      %v572 = vadd.f32 0.0, %v571
      %v573 = vpop.f32.mrf.mxu0
      %v574 = vpop.f32.mrf.mxu0
      %v575 = vadd.f32 0.0, %v574
      %v576 = vpop.f32.mrf.mxu0
      %577 = vmatprep.mubr.bf16.mxu0 0
      %578 = vmatmul.mubr.bf16.gmra.mxu0 %v468
      %v579 = vpop.f32.mrf.mxu0
      %v580 = vadd.f32 0.0, %v579
      %v581 = vpop.f32.mrf.mxu0
      %v582 = vpop.f32.mrf.mxu0
      %v583 = vadd.f32 0.0, %v582
      %v584 = vpop.f32.mrf.mxu0
      %585 = vmatprep.mubr.bf16.mxu0 0
      %586 = vmatmul.mubr.bf16.gmra.mxu0 %v471
      %v587 = vpop.f32.mrf.mxu0
      %v588 = vadd.f32 0.0, %v587
      %v589 = vpop.f32.mrf.mxu0
      %v590 = vpop.f32.mrf.mxu0
      %v591 = vadd.f32 0.0, %v590
      %v592 = vpop.f32.mrf.mxu0
      %593 = vmatprep.mubr.bf16.mxu0 0
      %594 = vmatmul.mubr.bf16.gmra.mxu0 %v474
      %v595 = vpop.f32.mrf.mxu0
      %v596 = vadd.f32 0.0, %v595
      %v597 = vpop.f32.mrf.mxu0
      %v598 = vpop.f32.mrf.mxu0
      %v599 = vadd.f32 0.0, %v598
      %v600 = vpop.f32.mrf.mxu0
      %601 = vmatprep.mubr.bf16.mxu0 0
      %602 = vmatmul.mubr.bf16.gmra.mxu0 %v477
      %v603 = vpop.f32.mrf.mxu0
      %v604 = vadd.f32 0.0, %v603
      %v605 = vpop.f32.mrf.mxu0
      %v606 = vpop.f32.mrf.mxu0
      %v607 = vadd.f32 0.0, %v606
      %v608 = vpop.f32.mrf.mxu0
      %609 = vmatprep.mubr.bf16.mxu0 0
      %610 = vmatmul.mubr.bf16.gmra.mxu0 %v480
      %v611 = vpop.f32.mrf.mxu0
      %v612 = vadd.f32 0.0, %v611
      %v613 = vpop.f32.mrf.mxu0
      %v614 = vpop.f32.mrf.mxu0
      %v615 = vadd.f32 0.0, %v614
      %v616 = vpop.f32.mrf.mxu0
      %617 = vmatprep.mubr.bf16.mxu0 0
      %618 = vmatmul.mubr.bf16.gmra.mxu0 %v483
      %v619 = vpop.f32.mrf.mxu0
      %v620 = vadd.f32 0.0, %v619
      %v621 = vpop.f32.mrf.mxu0
      %v622 = vpop.f32.mrf.mxu0
      %v623 = vadd.f32 0.0, %v622
      %v624 = vpop.f32.mrf.mxu0
      %625 = vmatprep.mubr.bf16.mxu0 0
      %626 = vmatmul.mubr.bf16.gmra.mxu0 %v486
      %v627 = vpop.f32.mrf.mxu0
      %v628 = vadd.f32 0.0, %v627
      %v629 = vpop.f32.mrf.mxu0
      %v630 = vpop.f32.mrf.mxu0
      %v631 = vadd.f32 0.0, %v630
      %v632 = vpop.f32.mrf.mxu0
      %633 = vmatprep.mubr.bf16.mxu0 0
      %634 = vmatmul.mubr.bf16.gmra.mxu0 %v489
      %v635 = vpop.f32.mrf.mxu0
      %v636 = vadd.f32 0.0, %v635
      %v637 = vpop.f32.mrf.mxu0
      %v638 = vpop.f32.mrf.mxu0
      %v639 = vadd.f32 0.0, %v638
      %v640 = vpop.f32.mrf.mxu0
      %641 = vmatprep.mubr.bf16.mxu0 0
      %642 = vmatmul.mubr.bf16.gmra.mxu0 %v492
      %v643 = vpop.f32.mrf.mxu0
      %v644 = vadd.f32 0.0, %v643
      %v645 = vpop.f32.mrf.mxu0
      %v646 = vpop.f32.mrf.mxu0
      %v647 = vadd.f32 0.0, %v646
      %v648 = vpop.f32.mrf.mxu0
      %649 = vmatprep.mubr.bf16.mxu0 0
      %650 = vmatmul.mubr.bf16.gmra.mxu0 %v495
      %v651 = vpop.f32.mrf.mxu0
      %v652 = vadd.f32 0.0, %v651
      %v653 = vpop.f32.mrf.mxu0
      %v654 = vpop.f32.mrf.mxu0
      %v655 = vadd.f32 0.0, %v654
      %v656 = vpop.f32.mrf.mxu0
      %657 = vmatprep.mubr.bf16.mxu0 0
      %658 = vmatmul.mubr.bf16.gmra.mxu0 %v498
      %v659 = vpop.f32.mrf.mxu0
      %v660 = vadd.f32 0.0, %v659
      %v661 = vpop.f32.mrf.mxu0
      %v662 = vpop.f32.mrf.mxu0
      %v663 = vadd.f32 0.0, %v662
      %v664 = vpop.f32.mrf.mxu0
      %665 = vmatprep.mubr.bf16.mxu0 0
      %666 = vmatmul.mubr.bf16.gmra.mxu0 %v501
      %v667 = vpop.f32.mrf.mxu0
      %v668 = vadd.f32 0.0, %v667
      %v669 = vpop.f32.mrf.mxu0
      %v670 = vpop.f32.mrf.mxu0
      %v671 = vadd.f32 0.0, %v670
      %v672 = vpop.f32.mrf.mxu0
      %673 = vmatprep.mubr.bf16.mxu0 0
      %674 = vmatmul.mubr.bf16.gmra.mxu0 %v504
      %v675 = vpop.f32.mrf.mxu0
      %v676 = vadd.f32 0.0, %v675
      %v677 = vpop.f32.mrf.mxu0
      %v678 = vpop.f32.mrf.mxu0
      %v679 = vadd.f32 0.0, %v678
      %v680 = vpop.f32.mrf.mxu0
      %681 = vmatprep.mubr.bf16.mxu0 0
      %682 = vmatmul.mubr.bf16.gmra.mxu0 %v507
      %v683 = vpop.f32.mrf.mxu0
      %v684 = vadd.f32 0.0, %v683
      %v685 = vpop.f32.mrf.mxu0
      %v686 = vpop.f32.mrf.mxu0
      %v687 = vadd.f32 0.0, %v686
      %v688 = vpop.f32.mrf.mxu0
      %689 = vdwg.mxu0
      %v690 = vsel %vm454, %v286, 0
      %v692 = vsel %vm454, %v287, 0
      %v694 = vsel %vm454, %v288, 0
      %v696 = vsel %vm454, %v289, 0
      %v698 = vsel %vm454, %v290, 0
      %v700 = vsel %vm454, %v291, 0
      %v702 = vsel %vm454, %v292, 0
      %v704 = vsel %vm454, %v293, 0
      %v706 = vsel %vm454, %v294, 0
      %v708 = vsel %vm454, %v295, 0
      %v710 = vsel %vm454, %v296, 0
      %v712 = vsel %vm454, %v297, 0
      %v714 = vsel %vm454, %v298, 0
      %v716 = vsel %vm454, %v299, 0
      %v718 = vsel %vm454, %v300, 0
      %v720 = vsel %vm454, %v301, 0
      %v722 = vsel %vm454, %v302, 0
      %v724 = vsel %vm454, %v303, 0
      %v727 = vsel %vm509, %v208, 0
      %729 = vmatprep.subr.bf16.mxu0 0
      %730 = vmatpush1.bf16.msra.mxu0 0
      %731 = vmatprep.subr.bf16.mxu0 0
      %732 = vmatpush1.bf16.msra.mxu0 0
      %733 = vmatprep.subr.bf16.mxu0 0
      %734 = vmatpush1.bf16.msra.mxu0 0
      %735 = vmatprep.subr.bf16.mxu0 0
      %736 = vmatpush1.bf16.msra.mxu0 0
      %737 = vmatprep.subr.bf16.mxu0 0
      %738 = vmatpush1.bf16.msra.mxu0 0
      %739 = vmatprep.subr.bf16.mxu0 0
      %740 = vmatpush1.bf16.msra.mxu0 0
      %741 = vmatprep.subr.bf16.mxu0 0
      %742 = vmatpush1.bf16.msra.mxu0 0
      %743 = vmatprep.subr.bf16.mxu0 0
      %744 = vmatpush1.bf16.msra.mxu0 %v727
      %745 = vmatprep.subr.bf16.mxu0 0
      %746 = vmatpush2.bf16.msra.mxu0 0
      %747 = vmatprep.subr.bf16.mxu0 0
      %748 = vmatpush2.bf16.msra.mxu0 0
      %749 = vmatprep.subr.bf16.mxu0 0
      %750 = vmatpush2.bf16.msra.mxu0 0
      %751 = vmatprep.subr.bf16.mxu0 0
      %752 = vmatpush2.bf16.msra.mxu0 0
      %753 = vmatprep.subr.bf16.mxu0 0
      %754 = vmatpush2.bf16.msra.mxu0 0
      %755 = vmatprep.subr.bf16.mxu0 0
      %756 = vmatpush2.bf16.msra.mxu0 0
      %757 = vmatprep.subr.bf16.mxu0 0
      %758 = vmatpush2.bf16.msra.mxu0 0
      %759 = vmatprep.subr.bf16.mxu0 0
      %760 = vmatpush2.bf16.msra.mxu0 0
      %761 = vmatprep.mubr.bf16.mxu0 0
      %762 = vmatmul.mubr.bf16.gmra.mxu0 %v690
      %v763 = vpop.f32.mrf.mxu0
      %v764 = vadd.f32 %v548, %v763
      %v765 = vpop.f32.mrf.mxu0
      %v766 = vpop.f32.mrf.mxu0
      %v767 = vadd.f32 %v551, %v766
      %v768 = vpop.f32.mrf.mxu0
      %769 = vmatprep.mubr.bf16.mxu0 0
      %770 = vmatmul.mubr.bf16.gmra.mxu0 %v692
      %v771 = vpop.f32.mrf.mxu0
      %v772 = vadd.f32 %v556, %v771
      %v773 = vpop.f32.mrf.mxu0
      %v774 = vpop.f32.mrf.mxu0
      %v775 = vadd.f32 %v559, %v774
      %v776 = vpop.f32.mrf.mxu0
      %777 = vmatprep.mubr.bf16.mxu0 0
      %778 = vmatmul.mubr.bf16.gmra.mxu0 %v694
      %v779 = vpop.f32.mrf.mxu0
      %v780 = vadd.f32 %v564, %v779
      %v781 = vpop.f32.mrf.mxu0
      %v782 = vpop.f32.mrf.mxu0
      %v783 = vadd.f32 %v567, %v782
      %v784 = vpop.f32.mrf.mxu0
      %785 = vmatprep.mubr.bf16.mxu0 0
      %786 = vmatmul.mubr.bf16.gmra.mxu0 %v696
      %v787 = vpop.f32.mrf.mxu0
      %v788 = vadd.f32 %v572, %v787
      %v789 = vpop.f32.mrf.mxu0
      %v790 = vpop.f32.mrf.mxu0
      %v791 = vadd.f32 %v575, %v790
      %v792 = vpop.f32.mrf.mxu0
      %793 = vmatprep.mubr.bf16.mxu0 0
      %794 = vmatmul.mubr.bf16.gmra.mxu0 %v698
      %v795 = vpop.f32.mrf.mxu0
      %v796 = vadd.f32 %v580, %v795
      %v797 = vpop.f32.mrf.mxu0
      %v798 = vpop.f32.mrf.mxu0
      %v799 = vadd.f32 %v583, %v798
      %v800 = vpop.f32.mrf.mxu0
      %801 = vmatprep.mubr.bf16.mxu0 0
      %802 = vmatmul.mubr.bf16.gmra.mxu0 %v700
      %v803 = vpop.f32.mrf.mxu0
      %v804 = vadd.f32 %v588, %v803
      %v805 = vpop.f32.mrf.mxu0
      %v806 = vpop.f32.mrf.mxu0
      %v807 = vadd.f32 %v591, %v806
      %v808 = vpop.f32.mrf.mxu0
      %809 = vmatprep.mubr.bf16.mxu0 0
      %810 = vmatmul.mubr.bf16.gmra.mxu0 %v702
      %v811 = vpop.f32.mrf.mxu0
      %v812 = vadd.f32 %v596, %v811
      %v813 = vpop.f32.mrf.mxu0
      %v814 = vpop.f32.mrf.mxu0
      %v815 = vadd.f32 %v599, %v814
      %v816 = vpop.f32.mrf.mxu0
      %817 = vmatprep.mubr.bf16.mxu0 0
      %818 = vmatmul.mubr.bf16.gmra.mxu0 %v704
      %v819 = vpop.f32.mrf.mxu0
      %v820 = vadd.f32 %v604, %v819
      %v821 = vpop.f32.mrf.mxu0
      %v822 = vpop.f32.mrf.mxu0
      %v823 = vadd.f32 %v607, %v822
      %v824 = vpop.f32.mrf.mxu0
      %825 = vmatprep.mubr.bf16.mxu0 0
      %826 = vmatmul.mubr.bf16.gmra.mxu0 %v706
      %v827 = vpop.f32.mrf.mxu0
      %v828 = vadd.f32 %v612, %v827
      %v829 = vpop.f32.mrf.mxu0
      %v830 = vpop.f32.mrf.mxu0
      %v831 = vadd.f32 %v615, %v830
      %v832 = vpop.f32.mrf.mxu0
      %833 = vmatprep.mubr.bf16.mxu0 0
      %834 = vmatmul.mubr.bf16.gmra.mxu0 %v708
      %v835 = vpop.f32.mrf.mxu0
      %v836 = vadd.f32 %v620, %v835
      %v837 = vpop.f32.mrf.mxu0
      %v838 = vpop.f32.mrf.mxu0
      %v839 = vadd.f32 %v623, %v838
      %v840 = vpop.f32.mrf.mxu0
      %841 = vmatprep.mubr.bf16.mxu0 0
      %842 = vmatmul.mubr.bf16.gmra.mxu0 %v710
      %v843 = vpop.f32.mrf.mxu0
      %v844 = vadd.f32 %v628, %v843
      %v845 = vpop.f32.mrf.mxu0
      %v846 = vpop.f32.mrf.mxu0
      %v847 = vadd.f32 %v631, %v846
      %v848 = vpop.f32.mrf.mxu0
      %849 = vmatprep.mubr.bf16.mxu0 0
      %850 = vmatmul.mubr.bf16.gmra.mxu0 %v712
      %v851 = vpop.f32.mrf.mxu0
      %v852 = vadd.f32 %v636, %v851
      %v853 = vpop.f32.mrf.mxu0
      %v854 = vpop.f32.mrf.mxu0
      %v855 = vadd.f32 %v639, %v854
      %v856 = vpop.f32.mrf.mxu0
      %857 = vmatprep.mubr.bf16.mxu0 0
      %858 = vmatmul.mubr.bf16.gmra.mxu0 %v714
      %v859 = vpop.f32.mrf.mxu0
      %v860 = vadd.f32 %v644, %v859
      %v861 = vpop.f32.mrf.mxu0
      %v862 = vpop.f32.mrf.mxu0
      %v863 = vadd.f32 %v647, %v862
      %v864 = vpop.f32.mrf.mxu0
      %865 = vmatprep.mubr.bf16.mxu0 0
      %866 = vmatmul.mubr.bf16.gmra.mxu0 %v716
      %v867 = vpop.f32.mrf.mxu0
      %v868 = vadd.f32 %v652, %v867
      %v869 = vpop.f32.mrf.mxu0
      %v870 = vpop.f32.mrf.mxu0
      %v871 = vadd.f32 %v655, %v870
      %v872 = vpop.f32.mrf.mxu0
      %873 = vmatprep.mubr.bf16.mxu0 0
      %874 = vmatmul.mubr.bf16.gmra.mxu0 %v718
      %v875 = vpop.f32.mrf.mxu0
      %v876 = vadd.f32 %v660, %v875
      %v877 = vpop.f32.mrf.mxu0
      %v878 = vpop.f32.mrf.mxu0
      %v879 = vadd.f32 %v663, %v878
      %v880 = vpop.f32.mrf.mxu0
      %881 = vmatprep.mubr.bf16.mxu0 0
      %882 = vmatmul.mubr.bf16.gmra.mxu0 %v720
      %v883 = vpop.f32.mrf.mxu0
      %v884 = vadd.f32 %v668, %v883
      %v885 = vpop.f32.mrf.mxu0
      %v886 = vpop.f32.mrf.mxu0
      %v887 = vadd.f32 %v671, %v886
      %v888 = vpop.f32.mrf.mxu0
      %889 = vmatprep.mubr.bf16.mxu0 0
      %890 = vmatmul.mubr.bf16.gmra.mxu0 %v722
      %v891 = vpop.f32.mrf.mxu0
      %v892 = vadd.f32 %v676, %v891
      %v893 = vpop.f32.mrf.mxu0
      %v894 = vpop.f32.mrf.mxu0
      %v895 = vadd.f32 %v679, %v894
      %v896 = vpop.f32.mrf.mxu0
      %897 = vmatprep.mubr.bf16.mxu0 0
      %898 = vmatmul.mubr.bf16.gmra.mxu0 %v724
      %v899 = vpop.f32.mrf.mxu0
      %v900 = vadd.f32 %v684, %v899
      %v901 = vpop.f32.mrf.mxu0
      %v902 = vpop.f32.mrf.mxu0
      %v903 = vadd.f32 %v687, %v902
      %v904 = vpop.f32.mrf.mxu0
      %905 = vdwg.mxu0
      %v906 = vld [vmem:[%s165] sm:$0xe]
      %s907 = scalar_lea.vmem %s1, 4
      %v908 = vld [vmem:[%s907] sm:$0x3]
      %v910 = vunpack.c.l.b16 %v906
      %v911 = vpack.c.b16 %v250, %v910
      %vm912 = vcmask 1046528
      %v913 = vrot.slane %v911, 1
      %v914 = vrot.slane %v287, 1
      %v915 = vsel %vm912, %v913, %v914
      %v916 = vrot.slane %v288, 1
      %v917 = vsel %vm912, %v914, %v916
      %v918 = vrot.slane %v289, 1
      %v919 = vsel %vm912, %v916, %v918
      %v920 = vrot.slane %v290, 1
      %v921 = vsel %vm912, %v918, %v920
      %v922 = vrot.slane %v291, 1
      %v923 = vsel %vm912, %v920, %v922
      %v924 = vrot.slane %v292, 1
      %v925 = vsel %vm912, %v922, %v924
      %v926 = vrot.slane %v293, 1
      %v927 = vsel %vm912, %v924, %v926
      %v928 = vrot.slane %v294, 1
      %v929 = vsel %vm912, %v926, %v928
      %v930 = vrot.slane %v295, 1
      %v931 = vsel %vm912, %v928, %v930
      %v932 = vrot.slane %v296, 1
      %v933 = vsel %vm912, %v930, %v932
      %v934 = vrot.slane %v297, 1
      %v935 = vsel %vm912, %v932, %v934
      %v936 = vrot.slane %v298, 1
      %v937 = vsel %vm912, %v934, %v936
      %v938 = vrot.slane %v299, 1
      %v939 = vsel %vm912, %v936, %v938
      %v940 = vrot.slane %v300, 1
      %v941 = vsel %vm912, %v938, %v940
      %v942 = vrot.slane %v301, 1
      %v943 = vsel %vm912, %v940, %v942
      %v944 = vrot.slane %v302, 1
      %v945 = vsel %vm912, %v942, %v944
      %v946 = vrot.slane %v303, 1
      %v947 = vsel %vm912, %v944, %v946
      %v948 = vrot.slane %v304, 1
      %v949 = vsel %vm912, %v946, %v948
      %v951 = vsel %vm454, %v915, 0
      %v954 = vsel %vm454, %v917, 0
      %v957 = vsel %vm454, %v919, 0
      %v960 = vsel %vm454, %v921, 0
      %v963 = vsel %vm454, %v923, 0
      %v966 = vsel %vm454, %v925, 0
      %v969 = vsel %vm454, %v927, 0
      %v972 = vsel %vm454, %v929, 0
      %v975 = vsel %vm454, %v931, 0
      %v978 = vsel %vm454, %v933, 0
      %v981 = vsel %vm454, %v935, 0
      %v984 = vsel %vm454, %v937, 0
      %v987 = vsel %vm454, %v939, 0
      %v990 = vsel %vm454, %v941, 0
      %v993 = vsel %vm454, %v943, 0
      %v996 = vsel %vm454, %v945, 0
      %v999 = vsel %vm454, %v947, 0
      %v1002 = vsel %vm454, %v949, 0
      %v1005 = vsel %vm509, %v908, 0
      %1007 = vmatprep.subr.bf16.mxu0 0
      %1008 = vmatpush1.bf16.msra.mxu0 0
      %1009 = vmatprep.subr.bf16.mxu0 0
      %1010 = vmatpush1.bf16.msra.mxu0 0
      %1011 = vmatprep.subr.bf16.mxu0 0
      %1012 = vmatpush1.bf16.msra.mxu0 0
      %1013 = vmatprep.subr.bf16.mxu0 0
      %1014 = vmatpush1.bf16.msra.mxu0 0
      %1015 = vmatprep.subr.bf16.mxu0 0
      %1016 = vmatpush1.bf16.msra.mxu0 0
      %1017 = vmatprep.subr.bf16.mxu0 0
      %1018 = vmatpush1.bf16.msra.mxu0 0
      %1019 = vmatprep.subr.bf16.mxu0 0
      %1020 = vmatpush1.bf16.msra.mxu0 0
      %1021 = vmatprep.subr.bf16.mxu0 0
      %1022 = vmatpush1.bf16.msra.mxu0 %v1005
      %1023 = vmatprep.subr.bf16.mxu0 0
      %1024 = vmatpush2.bf16.msra.mxu0 0
      %1025 = vmatprep.subr.bf16.mxu0 0
      %1026 = vmatpush2.bf16.msra.mxu0 0
      %1027 = vmatprep.subr.bf16.mxu0 0
      %1028 = vmatpush2.bf16.msra.mxu0 0
      %1029 = vmatprep.subr.bf16.mxu0 0
      %1030 = vmatpush2.bf16.msra.mxu0 0
      %1031 = vmatprep.subr.bf16.mxu0 0
      %1032 = vmatpush2.bf16.msra.mxu0 0
      %1033 = vmatprep.subr.bf16.mxu0 0
      %1034 = vmatpush2.bf16.msra.mxu0 0
      %1035 = vmatprep.subr.bf16.mxu0 0
      %1036 = vmatpush2.bf16.msra.mxu0 0
      %1037 = vmatprep.subr.bf16.mxu0 0
      %1038 = vmatpush2.bf16.msra.mxu0 0
      %1039 = vmatprep.mubr.bf16.mxu0 0
      %1040 = vmatmul.mubr.bf16.gmra.mxu0 %v951
      %v1041 = vpop.f32.mrf.mxu0
      %v1042 = vadd.f32 0.0, %v1041
      %v1043 = vpop.f32.mrf.mxu0
      %v1044 = vpop.f32.mrf.mxu0
      %v1045 = vadd.f32 0.0, %v1044
      %v1046 = vpop.f32.mrf.mxu0
      %1047 = vmatprep.mubr.bf16.mxu0 0
      %1048 = vmatmul.mubr.bf16.gmra.mxu0 %v954
      %v1049 = vpop.f32.mrf.mxu0
      %v1050 = vadd.f32 0.0, %v1049
      %v1051 = vpop.f32.mrf.mxu0
      %v1052 = vpop.f32.mrf.mxu0
      %v1053 = vadd.f32 0.0, %v1052
      %v1054 = vpop.f32.mrf.mxu0
      %1055 = vmatprep.mubr.bf16.mxu0 0
      %1056 = vmatmul.mubr.bf16.gmra.mxu0 %v957
      %v1057 = vpop.f32.mrf.mxu0
      %v1058 = vadd.f32 0.0, %v1057
      %v1059 = vpop.f32.mrf.mxu0
      %v1060 = vpop.f32.mrf.mxu0
      %v1061 = vadd.f32 0.0, %v1060
      %v1062 = vpop.f32.mrf.mxu0
      %1063 = vmatprep.mubr.bf16.mxu0 0
      %1064 = vmatmul.mubr.bf16.gmra.mxu0 %v960
      %v1065 = vpop.f32.mrf.mxu0
      %v1066 = vadd.f32 0.0, %v1065
      %v1067 = vpop.f32.mrf.mxu0
      %v1068 = vpop.f32.mrf.mxu0
      %v1069 = vadd.f32 0.0, %v1068
      %v1070 = vpop.f32.mrf.mxu0
      %1071 = vmatprep.mubr.bf16.mxu0 0
      %1072 = vmatmul.mubr.bf16.gmra.mxu0 %v963
      %v1073 = vpop.f32.mrf.mxu0
      %v1074 = vadd.f32 0.0, %v1073
      %v1075 = vpop.f32.mrf.mxu0
      %v1076 = vpop.f32.mrf.mxu0
      %v1077 = vadd.f32 0.0, %v1076
      %v1078 = vpop.f32.mrf.mxu0
      %1079 = vmatprep.mubr.bf16.mxu0 0
      %1080 = vmatmul.mubr.bf16.gmra.mxu0 %v966
      %v1081 = vpop.f32.mrf.mxu0
      %v1082 = vadd.f32 0.0, %v1081
      %v1083 = vpop.f32.mrf.mxu0
      %v1084 = vpop.f32.mrf.mxu0
      %v1085 = vadd.f32 0.0, %v1084
      %v1086 = vpop.f32.mrf.mxu0
      %1087 = vmatprep.mubr.bf16.mxu0 0
      %1088 = vmatmul.mubr.bf16.gmra.mxu0 %v969
      %v1089 = vpop.f32.mrf.mxu0
      %v1090 = vadd.f32 0.0, %v1089
      %v1091 = vpop.f32.mrf.mxu0
      %v1092 = vpop.f32.mrf.mxu0
      %v1093 = vadd.f32 0.0, %v1092
      %v1094 = vpop.f32.mrf.mxu0
      %1095 = vmatprep.mubr.bf16.mxu0 0
      %1096 = vmatmul.mubr.bf16.gmra.mxu0 %v972
      %v1097 = vpop.f32.mrf.mxu0
      %v1098 = vadd.f32 0.0, %v1097
      %v1099 = vpop.f32.mrf.mxu0
      %v1100 = vpop.f32.mrf.mxu0
      %v1101 = vadd.f32 0.0, %v1100
      %v1102 = vpop.f32.mrf.mxu0
      %1103 = vmatprep.mubr.bf16.mxu0 0
      %1104 = vmatmul.mubr.bf16.gmra.mxu0 %v975
      %v1105 = vpop.f32.mrf.mxu0
      %v1106 = vadd.f32 0.0, %v1105
      %v1107 = vpop.f32.mrf.mxu0
      %v1108 = vpop.f32.mrf.mxu0
      %v1109 = vadd.f32 0.0, %v1108
      %v1110 = vpop.f32.mrf.mxu0
      %1111 = vmatprep.mubr.bf16.mxu0 0
      %1112 = vmatmul.mubr.bf16.gmra.mxu0 %v978
      %v1113 = vpop.f32.mrf.mxu0
      %v1114 = vadd.f32 0.0, %v1113
      %v1115 = vpop.f32.mrf.mxu0
      %v1116 = vpop.f32.mrf.mxu0
      %v1117 = vadd.f32 0.0, %v1116
      %v1118 = vpop.f32.mrf.mxu0
      %1119 = vmatprep.mubr.bf16.mxu0 0
      %1120 = vmatmul.mubr.bf16.gmra.mxu0 %v981
      %v1121 = vpop.f32.mrf.mxu0
      %v1122 = vadd.f32 0.0, %v1121
      %v1123 = vpop.f32.mrf.mxu0
      %v1124 = vpop.f32.mrf.mxu0
      %v1125 = vadd.f32 0.0, %v1124
      %v1126 = vpop.f32.mrf.mxu0
      %1127 = vmatprep.mubr.bf16.mxu0 0
      %1128 = vmatmul.mubr.bf16.gmra.mxu0 %v984
      %v1129 = vpop.f32.mrf.mxu0
      %v1130 = vadd.f32 0.0, %v1129
      %v1131 = vpop.f32.mrf.mxu0
      %v1132 = vpop.f32.mrf.mxu0
      %v1133 = vadd.f32 0.0, %v1132
      %v1134 = vpop.f32.mrf.mxu0
      %1135 = vmatprep.mubr.bf16.mxu0 0
      %1136 = vmatmul.mubr.bf16.gmra.mxu0 %v987
      %v1137 = vpop.f32.mrf.mxu0
      %v1138 = vadd.f32 0.0, %v1137
      %v1139 = vpop.f32.mrf.mxu0
      %v1140 = vpop.f32.mrf.mxu0
      %v1141 = vadd.f32 0.0, %v1140
      %v1142 = vpop.f32.mrf.mxu0
      %1143 = vmatprep.mubr.bf16.mxu0 0
      %1144 = vmatmul.mubr.bf16.gmra.mxu0 %v990
      %v1145 = vpop.f32.mrf.mxu0
      %v1146 = vadd.f32 0.0, %v1145
      %v1147 = vpop.f32.mrf.mxu0
      %v1148 = vpop.f32.mrf.mxu0
      %v1149 = vadd.f32 0.0, %v1148
      %v1150 = vpop.f32.mrf.mxu0
      %1151 = vmatprep.mubr.bf16.mxu0 0
      %1152 = vmatmul.mubr.bf16.gmra.mxu0 %v993
      %v1153 = vpop.f32.mrf.mxu0
      %v1154 = vadd.f32 0.0, %v1153
      %v1155 = vpop.f32.mrf.mxu0
      %v1156 = vpop.f32.mrf.mxu0
      %v1157 = vadd.f32 0.0, %v1156
      %v1158 = vpop.f32.mrf.mxu0
      %1159 = vmatprep.mubr.bf16.mxu0 0
      %1160 = vmatmul.mubr.bf16.gmra.mxu0 %v996
      %v1161 = vpop.f32.mrf.mxu0
      %v1162 = vadd.f32 0.0, %v1161
      %v1163 = vpop.f32.mrf.mxu0
      %v1164 = vpop.f32.mrf.mxu0
      %v1165 = vadd.f32 0.0, %v1164
      %v1166 = vpop.f32.mrf.mxu0
      %1167 = vmatprep.mubr.bf16.mxu0 0
      %1168 = vmatmul.mubr.bf16.gmra.mxu0 %v999
      %v1169 = vpop.f32.mrf.mxu0
      %v1170 = vadd.f32 0.0, %v1169
      %v1171 = vpop.f32.mrf.mxu0
      %v1172 = vpop.f32.mrf.mxu0
      %v1173 = vadd.f32 0.0, %v1172
      %v1174 = vpop.f32.mrf.mxu0
      %1175 = vmatprep.mubr.bf16.mxu0 0
      %1176 = vmatmul.mubr.bf16.gmra.mxu0 %v1002
      %v1177 = vpop.f32.mrf.mxu0
      %v1178 = vadd.f32 0.0, %v1177
      %v1179 = vpop.f32.mrf.mxu0
      %v1180 = vpop.f32.mrf.mxu0
      %v1181 = vadd.f32 0.0, %v1180
      %v1182 = vpop.f32.mrf.mxu0
      %1183 = vdwg.mxu0
      %v1184 = vadd.f32 %v764, %v1042
      %v1185 = vadd.f32 %v767, %v1045
      %v1186 = vadd.f32 %v772, %v1050
      %v1187 = vadd.f32 %v775, %v1053
      %v1188 = vadd.f32 %v780, %v1058
      %v1189 = vadd.f32 %v783, %v1061
      %v1190 = vadd.f32 %v788, %v1066
      %v1191 = vadd.f32 %v791, %v1069
      %v1192 = vadd.f32 %v796, %v1074
      %v1193 = vadd.f32 %v799, %v1077
      %v1194 = vadd.f32 %v804, %v1082
      %v1195 = vadd.f32 %v807, %v1085
      %v1196 = vadd.f32 %v812, %v1090
      %v1197 = vadd.f32 %v815, %v1093
      %v1198 = vadd.f32 %v820, %v1098
      %v1199 = vadd.f32 %v823, %v1101
      %v1200 = vadd.f32 %v828, %v1106
      %v1201 = vadd.f32 %v831, %v1109
      %v1202 = vadd.f32 %v836, %v1114
      %v1203 = vadd.f32 %v839, %v1117
      %v1204 = vadd.f32 %v844, %v1122
      %v1205 = vadd.f32 %v847, %v1125
      %v1206 = vadd.f32 %v852, %v1130
      %v1207 = vadd.f32 %v855, %v1133
      %v1208 = vadd.f32 %v860, %v1138
      %v1209 = vadd.f32 %v863, %v1141
      %v1210 = vadd.f32 %v868, %v1146
      %v1211 = vadd.f32 %v871, %v1149
      %v1212 = vadd.f32 %v876, %v1154
      %v1213 = vadd.f32 %v879, %v1157
      %v1214 = vadd.f32 %v884, %v1162
      %v1215 = vadd.f32 %v887, %v1165
      %v1216 = vadd.f32 %v892, %v1170
      %v1217 = vadd.f32 %v895, %v1173
      %v1218 = vadd.f32 %v900, %v1178
      %v1219 = vadd.f32 %v903, %v1181
      %v1220 = vld [vmem:[%s165 + $0x8] sm:$0xe]
      %v1221 = vld [vmem:[%s165 + $0xc] sm:$0xf]
      %v1222 = vld [vmem:[%s165 + $0x10] sm:$0xf]
      %v1223 = vld [vmem:[%s165 + $0x14] sm:$0xf]
      %v1224 = vld [vmem:[%s165 + $0x18] sm:$0xf]
      %v1225 = vld [vmem:[%s165 + $0x1c] sm:$0xf]
      %v1226 = vld [vmem:[%s165 + $0x20] sm:$0xf]
      %v1227 = vld [vmem:[%s165 + $0x24] sm:$0xf]
      %v1228 = vld [vmem:[%s165 + $0x28] sm:$0xf]
      %v1229 = vld [vmem:[%s165 + $0x2c] sm:$0xf]
      %v1230 = vld [vmem:[%s165 + $0x30] sm:$0xf]
      %v1231 = vld [vmem:[%s165 + $0x34] sm:$0xf]
      %v1232 = vld [vmem:[%s165 + $0x38] sm:$0xf]
      %v1233 = vld [vmem:[%s165 + $0x3c] sm:$0xf]
      %v1234 = vld [vmem:[%s165 + $0x40] sm:$0xf]
      %v1235 = vld [vmem:[%s165 + $0x44] sm:$0xf]
      %v1236 = vld [vmem:[%s165 + $0x48] sm:$0xf]
      %v1237 = vld [vmem:[%s165 + $0x4c] sm:$0xf]
      %v1238 = vld [vmem:[%s165 + $0x50] sm:$0xf]
      %v1239 = vld [vmem:[%s165 + $0x54] sm:$0xf]
      %v1240 = vld [vmem:[%s165 + $0x58] sm:$0xf]
      %v1241 = vld [vmem:[%s165 + $0x5c] sm:$0xf]
      %v1242 = vld [vmem:[%s165 + $0x60] sm:$0xf]
      %v1243 = vld [vmem:[%s165 + $0x64] sm:$0xf]
      %v1244 = vld [vmem:[%s165 + $0x68] sm:$0xf]
      %v1245 = vld [vmem:[%s165 + $0x6c] sm:$0xf]
      %v1246 = vld [vmem:[%s165 + $0x70] sm:$0xf]
      %v1247 = vld [vmem:[%s165 + $0x74] sm:$0xf]
      %v1248 = vld [vmem:[%s165 + $0x78] sm:$0xf]
      %v1249 = vld [vmem:[%s165 + $0x7c] sm:$0xf]
      %v1250 = vld [vmem:[%s165 + $0x80] sm:$0xf]
      %v1251 = vld [vmem:[%s165 + $0x84] sm:$0xf]
      %v1252 = vld [vmem:[%s165 + $0x88] sm:$0xf]
      %v1253 = vld [vmem:[%s165 + $0x8c] sm:$0xf]
      %v1254 = vld [vmem:[%s165 + $0x90] sm:$0xf]
      %v1255 = vld [vmem:[%s165 + $0x94] sm:$0xf]
      %v1256 = vld [vmem:[%s165 + $0x98] sm:$0x1]
      %s1257 = scalar_lea.vmem %s1, 6
      %v1258 = vld [vmem:[%s1257] sm:$0x3]
      %v1296 = vunpack.c.l.b16 %v1220
      %v1297 = vunpack.c.l.b16 %v1221
      %v1298 = vunpack.c.l.b16 %v1222
      %v1299 = vunpack.c.l.b16 %v1223
      %v1300 = vunpack.c.l.b16 %v1224
      %v1301 = vunpack.c.l.b16 %v1225
      %v1302 = vunpack.c.l.b16 %v1226
      %v1303 = vunpack.c.l.b16 %v1227
      %v1304 = vunpack.c.l.b16 %v1228
      %v1305 = vunpack.c.l.b16 %v1229
      %v1306 = vunpack.c.l.b16 %v1230
      %v1307 = vunpack.c.l.b16 %v1231
      %v1308 = vunpack.c.l.b16 %v1232
      %v1309 = vunpack.c.l.b16 %v1233
      %v1310 = vunpack.c.l.b16 %v1234
      %v1311 = vunpack.c.l.b16 %v1235
      %v1312 = vunpack.c.l.b16 %v1236
      %v1313 = vunpack.c.l.b16 %v1237
      %v1314 = vunpack.c.l.b16 %v1238
      %v1315 = vunpack.c.l.b16 %v1239
      %v1316 = vunpack.c.l.b16 %v1240
      %v1317 = vunpack.c.l.b16 %v1241
      %v1318 = vunpack.c.l.b16 %v1242
      %v1319 = vunpack.c.l.b16 %v1243
      %v1320 = vunpack.c.l.b16 %v1244
      %v1321 = vunpack.c.l.b16 %v1245
      %v1322 = vunpack.c.l.b16 %v1246
      %v1323 = vunpack.c.l.b16 %v1247
      %v1324 = vunpack.c.l.b16 %v1248
      %v1325 = vunpack.c.l.b16 %v1249
      %v1326 = vunpack.c.l.b16 %v1250
      %v1327 = vunpack.c.l.b16 %v1251
      %v1328 = vunpack.c.l.b16 %v1252
      %v1329 = vunpack.c.l.b16 %v1253
      %v1330 = vunpack.c.l.b16 %v1254
      %v1331 = vunpack.c.l.b16 %v1255
      %v1332 = vunpack.c.l.b16 %v1256
      %v1333 = vpack.c.b16 %v1297, %v1296
      %v1334 = vpack.c.b16 %v1299, %v1298
      %v1335 = vpack.c.b16 %v1301, %v1300
      %v1336 = vpack.c.b16 %v1303, %v1302
      %v1337 = vpack.c.b16 %v1305, %v1304
      %v1338 = vpack.c.b16 %v1307, %v1306
      %v1339 = vpack.c.b16 %v1309, %v1308
      %v1340 = vpack.c.b16 %v1311, %v1310
      %v1341 = vpack.c.b16 %v1313, %v1312
      %v1342 = vpack.c.b16 %v1315, %v1314
      %v1343 = vpack.c.b16 %v1317, %v1316
      %v1344 = vpack.c.b16 %v1319, %v1318
      %v1345 = vpack.c.b16 %v1321, %v1320
      %v1346 = vpack.c.b16 %v1323, %v1322
      %v1347 = vpack.c.b16 %v1325, %v1324
      %v1348 = vpack.c.b16 %v1327, %v1326
      %v1349 = vpack.c.b16 %v1329, %v1328
      %v1350 = vpack.c.b16 %v1331, %v1330
      %v1351 = vpack.c.b16 %v1332, %v1332
      %v1352 = vrot.slane %v1333, 1
      %v1353 = vrot.slane %v1334, 1
      %v1354 = vsel %vm912, %v1352, %v1353
      %v1355 = vrot.slane %v1335, 1
      %v1356 = vsel %vm912, %v1353, %v1355
      %v1357 = vrot.slane %v1336, 1
      %v1358 = vsel %vm912, %v1355, %v1357
      %v1359 = vrot.slane %v1337, 1
      %v1360 = vsel %vm912, %v1357, %v1359
      %v1361 = vrot.slane %v1338, 1
      %v1362 = vsel %vm912, %v1359, %v1361
      %v1363 = vrot.slane %v1339, 1
      %v1364 = vsel %vm912, %v1361, %v1363
      %v1365 = vrot.slane %v1340, 1
      %v1366 = vsel %vm912, %v1363, %v1365
      %v1367 = vrot.slane %v1341, 1
      %v1368 = vsel %vm912, %v1365, %v1367
      %v1369 = vrot.slane %v1342, 1
      %v1370 = vsel %vm912, %v1367, %v1369
      %v1371 = vrot.slane %v1343, 1
      %v1372 = vsel %vm912, %v1369, %v1371
      %v1373 = vrot.slane %v1344, 1
      %v1374 = vsel %vm912, %v1371, %v1373
      %v1375 = vrot.slane %v1345, 1
      %v1376 = vsel %vm912, %v1373, %v1375
      %v1377 = vrot.slane %v1346, 1
      %v1378 = vsel %vm912, %v1375, %v1377
      %v1379 = vrot.slane %v1347, 1
      %v1380 = vsel %vm912, %v1377, %v1379
      %v1381 = vrot.slane %v1348, 1
      %v1382 = vsel %vm912, %v1379, %v1381
      %v1383 = vrot.slane %v1349, 1
      %v1384 = vsel %vm912, %v1381, %v1383
      %v1385 = vrot.slane %v1350, 1
      %v1386 = vsel %vm912, %v1383, %v1385
      %v1387 = vrot.slane %v1351, 1
      %v1388 = vsel %vm912, %v1385, %v1387
      %v1390 = vsel %vm454, %v1354, 0
      %v1393 = vsel %vm454, %v1356, 0
      %v1396 = vsel %vm454, %v1358, 0
      %v1399 = vsel %vm454, %v1360, 0
      %v1402 = vsel %vm454, %v1362, 0
      %v1405 = vsel %vm454, %v1364, 0
      %v1408 = vsel %vm454, %v1366, 0
      %v1411 = vsel %vm454, %v1368, 0
      %v1414 = vsel %vm454, %v1370, 0
      %v1417 = vsel %vm454, %v1372, 0
      %v1420 = vsel %vm454, %v1374, 0
      %v1423 = vsel %vm454, %v1376, 0
      %v1426 = vsel %vm454, %v1378, 0
      %v1429 = vsel %vm454, %v1380, 0
      %v1432 = vsel %vm454, %v1382, 0
      %v1435 = vsel %vm454, %v1384, 0
      %v1438 = vsel %vm454, %v1386, 0
      %v1441 = vsel %vm454, %v1388, 0
      %v1444 = vsel %vm509, %v1258, 0
      %1446 = vmatprep.subr.bf16.mxu0 0
      %1447 = vmatpush1.bf16.msra.mxu0 0
      %1448 = vmatprep.subr.bf16.mxu0 0
      %1449 = vmatpush1.bf16.msra.mxu0 0
      %1450 = vmatprep.subr.bf16.mxu0 0
      %1451 = vmatpush1.bf16.msra.mxu0 0
      %1452 = vmatprep.subr.bf16.mxu0 0
      %1453 = vmatpush1.bf16.msra.mxu0 0
      %1454 = vmatprep.subr.bf16.mxu0 0
      %1455 = vmatpush1.bf16.msra.mxu0 0
      %1456 = vmatprep.subr.bf16.mxu0 0
      %1457 = vmatpush1.bf16.msra.mxu0 0
      %1458 = vmatprep.subr.bf16.mxu0 0
      %1459 = vmatpush1.bf16.msra.mxu0 0
      %1460 = vmatprep.subr.bf16.mxu0 0
      %1461 = vmatpush1.bf16.msra.mxu0 %v1444
      %1462 = vmatprep.subr.bf16.mxu0 0
      %1463 = vmatpush2.bf16.msra.mxu0 0
      %1464 = vmatprep.subr.bf16.mxu0 0
      %1465 = vmatpush2.bf16.msra.mxu0 0
      %1466 = vmatprep.subr.bf16.mxu0 0
      %1467 = vmatpush2.bf16.msra.mxu0 0
      %1468 = vmatprep.subr.bf16.mxu0 0
      %1469 = vmatpush2.bf16.msra.mxu0 0
      %1470 = vmatprep.subr.bf16.mxu0 0
      %1471 = vmatpush2.bf16.msra.mxu0 0
      %1472 = vmatprep.subr.bf16.mxu0 0
      %1473 = vmatpush2.bf16.msra.mxu0 0
      %1474 = vmatprep.subr.bf16.mxu0 0
      %1475 = vmatpush2.bf16.msra.mxu0 0
      %1476 = vmatprep.subr.bf16.mxu0 0
      %1477 = vmatpush2.bf16.msra.mxu0 0
      %1478 = vmatprep.mubr.bf16.mxu0 0
      %1479 = vmatmul.mubr.bf16.gmra.mxu0 %v1390
      %v1480 = vpop.f32.mrf.mxu0
      %v1481 = vadd.f32 0.0, %v1480
      %v1482 = vpop.f32.mrf.mxu0
      %v1483 = vpop.f32.mrf.mxu0
      %v1484 = vadd.f32 0.0, %v1483
      %v1485 = vpop.f32.mrf.mxu0
      %1486 = vmatprep.mubr.bf16.mxu0 0
      %1487 = vmatmul.mubr.bf16.gmra.mxu0 %v1393
      %v1488 = vpop.f32.mrf.mxu0
      %v1489 = vadd.f32 0.0, %v1488
      %v1490 = vpop.f32.mrf.mxu0
      %v1491 = vpop.f32.mrf.mxu0
      %v1492 = vadd.f32 0.0, %v1491
      %v1493 = vpop.f32.mrf.mxu0
      %1494 = vmatprep.mubr.bf16.mxu0 0
      %1495 = vmatmul.mubr.bf16.gmra.mxu0 %v1396
      %v1496 = vpop.f32.mrf.mxu0
      %v1497 = vadd.f32 0.0, %v1496
      %v1498 = vpop.f32.mrf.mxu0
      %v1499 = vpop.f32.mrf.mxu0
      %v1500 = vadd.f32 0.0, %v1499
      %v1501 = vpop.f32.mrf.mxu0
      %1502 = vmatprep.mubr.bf16.mxu0 0
      %1503 = vmatmul.mubr.bf16.gmra.mxu0 %v1399
      %v1504 = vpop.f32.mrf.mxu0
      %v1505 = vadd.f32 0.0, %v1504
      %v1506 = vpop.f32.mrf.mxu0
      %v1507 = vpop.f32.mrf.mxu0
      %v1508 = vadd.f32 0.0, %v1507
      %v1509 = vpop.f32.mrf.mxu0
      %1510 = vmatprep.mubr.bf16.mxu0 0
      %1511 = vmatmul.mubr.bf16.gmra.mxu0 %v1402
      %v1512 = vpop.f32.mrf.mxu0
      %v1513 = vadd.f32 0.0, %v1512
      %v1514 = vpop.f32.mrf.mxu0
      %v1515 = vpop.f32.mrf.mxu0
      %v1516 = vadd.f32 0.0, %v1515
      %v1517 = vpop.f32.mrf.mxu0
      %1518 = vmatprep.mubr.bf16.mxu0 0
      %1519 = vmatmul.mubr.bf16.gmra.mxu0 %v1405
      %v1520 = vpop.f32.mrf.mxu0
      %v1521 = vadd.f32 0.0, %v1520
      %v1522 = vpop.f32.mrf.mxu0
      %v1523 = vpop.f32.mrf.mxu0
      %v1524 = vadd.f32 0.0, %v1523
      %v1525 = vpop.f32.mrf.mxu0
      %1526 = vmatprep.mubr.bf16.mxu0 0
      %1527 = vmatmul.mubr.bf16.gmra.mxu0 %v1408
      %v1528 = vpop.f32.mrf.mxu0
      %v1529 = vadd.f32 0.0, %v1528
      %v1530 = vpop.f32.mrf.mxu0
      %v1531 = vpop.f32.mrf.mxu0
      %v1532 = vadd.f32 0.0, %v1531
      %v1533 = vpop.f32.mrf.mxu0
      %1534 = vmatprep.mubr.bf16.mxu0 0
      %1535 = vmatmul.mubr.bf16.gmra.mxu0 %v1411
      %v1536 = vpop.f32.mrf.mxu0
      %v1537 = vadd.f32 0.0, %v1536
      %v1538 = vpop.f32.mrf.mxu0
      %v1539 = vpop.f32.mrf.mxu0
      %v1540 = vadd.f32 0.0, %v1539
      %v1541 = vpop.f32.mrf.mxu0
      %1542 = vmatprep.mubr.bf16.mxu0 0
      %1543 = vmatmul.mubr.bf16.gmra.mxu0 %v1414
      %v1544 = vpop.f32.mrf.mxu0
      %v1545 = vadd.f32 0.0, %v1544
      %v1546 = vpop.f32.mrf.mxu0
      %v1547 = vpop.f32.mrf.mxu0
      %v1548 = vadd.f32 0.0, %v1547
      %v1549 = vpop.f32.mrf.mxu0
      %1550 = vmatprep.mubr.bf16.mxu0 0
      %1551 = vmatmul.mubr.bf16.gmra.mxu0 %v1417
      %v1552 = vpop.f32.mrf.mxu0
      %v1553 = vadd.f32 0.0, %v1552
      %v1554 = vpop.f32.mrf.mxu0
      %v1555 = vpop.f32.mrf.mxu0
      %v1556 = vadd.f32 0.0, %v1555
      %v1557 = vpop.f32.mrf.mxu0
      %1558 = vmatprep.mubr.bf16.mxu0 0
      %1559 = vmatmul.mubr.bf16.gmra.mxu0 %v1420
      %v1560 = vpop.f32.mrf.mxu0
      %v1561 = vadd.f32 0.0, %v1560
      %v1562 = vpop.f32.mrf.mxu0
      %v1563 = vpop.f32.mrf.mxu0
      %v1564 = vadd.f32 0.0, %v1563
      %v1565 = vpop.f32.mrf.mxu0
      %1566 = vmatprep.mubr.bf16.mxu0 0
      %1567 = vmatmul.mubr.bf16.gmra.mxu0 %v1423
      %v1568 = vpop.f32.mrf.mxu0
      %v1569 = vadd.f32 0.0, %v1568
      %v1570 = vpop.f32.mrf.mxu0
      %v1571 = vpop.f32.mrf.mxu0
      %v1572 = vadd.f32 0.0, %v1571
      %v1573 = vpop.f32.mrf.mxu0
      %1574 = vmatprep.mubr.bf16.mxu0 0
      %1575 = vmatmul.mubr.bf16.gmra.mxu0 %v1426
      %v1576 = vpop.f32.mrf.mxu0
      %v1577 = vadd.f32 0.0, %v1576
      %v1578 = vpop.f32.mrf.mxu0
      %v1579 = vpop.f32.mrf.mxu0
      %v1580 = vadd.f32 0.0, %v1579
      %v1581 = vpop.f32.mrf.mxu0
      %1582 = vmatprep.mubr.bf16.mxu0 0
      %1583 = vmatmul.mubr.bf16.gmra.mxu0 %v1429
      %v1584 = vpop.f32.mrf.mxu0
      %v1585 = vadd.f32 0.0, %v1584
      %v1586 = vpop.f32.mrf.mxu0
      %v1587 = vpop.f32.mrf.mxu0
      %v1588 = vadd.f32 0.0, %v1587
      %v1589 = vpop.f32.mrf.mxu0
      %1590 = vmatprep.mubr.bf16.mxu0 0
      %1591 = vmatmul.mubr.bf16.gmra.mxu0 %v1432
      %v1592 = vpop.f32.mrf.mxu0
      %v1593 = vadd.f32 0.0, %v1592
      %v1594 = vpop.f32.mrf.mxu0
      %v1595 = vpop.f32.mrf.mxu0
      %v1596 = vadd.f32 0.0, %v1595
      %v1597 = vpop.f32.mrf.mxu0
      %1598 = vmatprep.mubr.bf16.mxu0 0
      %1599 = vmatmul.mubr.bf16.gmra.mxu0 %v1435
      %v1600 = vpop.f32.mrf.mxu0
      %v1601 = vadd.f32 0.0, %v1600
      %v1602 = vpop.f32.mrf.mxu0
      %v1603 = vpop.f32.mrf.mxu0
      %v1604 = vadd.f32 0.0, %v1603
      %v1605 = vpop.f32.mrf.mxu0
      %1606 = vmatprep.mubr.bf16.mxu0 0
      %1607 = vmatmul.mubr.bf16.gmra.mxu0 %v1438
      %v1608 = vpop.f32.mrf.mxu0
      %v1609 = vadd.f32 0.0, %v1608
      %v1610 = vpop.f32.mrf.mxu0
      %v1611 = vpop.f32.mrf.mxu0
      %v1612 = vadd.f32 0.0, %v1611
      %v1613 = vpop.f32.mrf.mxu0
      %1614 = vmatprep.mubr.bf16.mxu0 0
      %1615 = vmatmul.mubr.bf16.gmra.mxu0 %v1441
      %v1616 = vpop.f32.mrf.mxu0
      %v1617 = vadd.f32 0.0, %v1616
      %v1618 = vpop.f32.mrf.mxu0
      %v1619 = vpop.f32.mrf.mxu0
      %v1620 = vadd.f32 0.0, %v1619
      %v1621 = vpop.f32.mrf.mxu0
      %1622 = vdwg.mxu0
      %v1623 = vadd.f32 %v1184, %v1481
      %v1624 = vadd.f32 %v1185, %v1484
      %v1625 = vadd.f32 %v1186, %v1489
      %v1626 = vadd.f32 %v1187, %v1492
      %v1627 = vadd.f32 %v1188, %v1497
      %v1628 = vadd.f32 %v1189, %v1500
      %v1629 = vadd.f32 %v1190, %v1505
      %v1630 = vadd.f32 %v1191, %v1508
      %v1631 = vadd.f32 %v1192, %v1513
      %v1632 = vadd.f32 %v1193, %v1516
      %v1633 = vadd.f32 %v1194, %v1521
      %v1634 = vadd.f32 %v1195, %v1524
      %v1635 = vadd.f32 %v1196, %v1529
      %v1636 = vadd.f32 %v1197, %v1532
      %v1637 = vadd.f32 %v1198, %v1537
      %v1638 = vadd.f32 %v1199, %v1540
      %v1639 = vadd.f32 %v1200, %v1545
      %v1640 = vadd.f32 %v1201, %v1548
      %v1641 = vadd.f32 %v1202, %v1553
      %v1642 = vadd.f32 %v1203, %v1556
      %v1643 = vadd.f32 %v1204, %v1561
      %v1644 = vadd.f32 %v1205, %v1564
      %v1645 = vadd.f32 %v1206, %v1569
      %v1646 = vadd.f32 %v1207, %v1572
      %v1647 = vadd.f32 %v1208, %v1577
      %v1648 = vadd.f32 %v1209, %v1580
      %v1649 = vadd.f32 %v1210, %v1585
      %v1650 = vadd.f32 %v1211, %v1588
      %v1651 = vadd.f32 %v1212, %v1593
      %v1652 = vadd.f32 %v1213, %v1596
      %v1653 = vadd.f32 %v1214, %v1601
      %v1654 = vadd.f32 %v1215, %v1604
      %v1655 = vadd.f32 %v1216, %v1609
      %v1656 = vadd.f32 %v1217, %v1612
      %v1657 = vadd.f32 %v1218, %v1617
      %v1658 = vadd.f32 %v1219, %v1620
      %v1659 = vld [vmem:[%s165 + $0x98] sm:$0x3]
      %s1660 = scalar_lea.vmem %s1, 8
      %v1661 = vld [vmem:[%s1660] sm:$0x3]
      %v1663 = vunpack.c.l.b16 %v1659
      %v1664 = vpack.c.b16 %v1663, %v1663
      %vm1665 = vsmask.f32 6400
      %v1667 = vshrl.u32 %v1333, 16
      %v1669 = vrot.slane %v1667, 1
      %v1670 = vshll.u32 %v1333, 16
      %v1672 = vrot.slane %v1670, 2
      %v1673 = vor.u32 %v1669, %v1672
      %v1675 = vshrl.u32 %v1334, 16
      %v1677 = vrot.slane %v1675, 1
      %v1678 = vshll.u32 %v1334, 16
      %v1680 = vrot.slane %v1678, 2
      %v1681 = vor.u32 %v1677, %v1680
      %v1682 = vsel %vm1665, %v1673, %v1681
      %v1684 = vshrl.u32 %v1335, 16
      %v1686 = vrot.slane %v1684, 1
      %v1687 = vshll.u32 %v1335, 16
      %v1689 = vrot.slane %v1687, 2
      %v1690 = vor.u32 %v1686, %v1689
      %v1691 = vsel %vm1665, %v1681, %v1690
      %v1693 = vshrl.u32 %v1336, 16
      %v1695 = vrot.slane %v1693, 1
      %v1696 = vshll.u32 %v1336, 16
      %v1698 = vrot.slane %v1696, 2
      %v1699 = vor.u32 %v1695, %v1698
      %v1700 = vsel %vm1665, %v1690, %v1699
      %v1702 = vshrl.u32 %v1337, 16
      %v1704 = vrot.slane %v1702, 1
      %v1705 = vshll.u32 %v1337, 16
      %v1707 = vrot.slane %v1705, 2
      %v1708 = vor.u32 %v1704, %v1707
      %v1709 = vsel %vm1665, %v1699, %v1708
      %v1711 = vshrl.u32 %v1338, 16
      %v1713 = vrot.slane %v1711, 1
      %v1714 = vshll.u32 %v1338, 16
      %v1716 = vrot.slane %v1714, 2
      %v1717 = vor.u32 %v1713, %v1716
      %v1718 = vsel %vm1665, %v1708, %v1717
      %v1720 = vshrl.u32 %v1339, 16
      %v1722 = vrot.slane %v1720, 1
      %v1723 = vshll.u32 %v1339, 16
      %v1725 = vrot.slane %v1723, 2
      %v1726 = vor.u32 %v1722, %v1725
      %v1727 = vsel %vm1665, %v1717, %v1726
      %v1729 = vshrl.u32 %v1340, 16
      %v1731 = vrot.slane %v1729, 1
      %v1732 = vshll.u32 %v1340, 16
      %v1734 = vrot.slane %v1732, 2
      %v1735 = vor.u32 %v1731, %v1734
      %v1736 = vsel %vm1665, %v1726, %v1735
      %v1738 = vshrl.u32 %v1341, 16
      %v1740 = vrot.slane %v1738, 1
      %v1741 = vshll.u32 %v1341, 16
      %v1743 = vrot.slane %v1741, 2
      %v1744 = vor.u32 %v1740, %v1743
      %v1745 = vsel %vm1665, %v1735, %v1744
      %v1747 = vshrl.u32 %v1342, 16
      %v1749 = vrot.slane %v1747, 1
      %v1750 = vshll.u32 %v1342, 16
      %v1752 = vrot.slane %v1750, 2
      %v1753 = vor.u32 %v1749, %v1752
      %v1754 = vsel %vm1665, %v1744, %v1753
      %v1756 = vshrl.u32 %v1343, 16
      %v1758 = vrot.slane %v1756, 1
      %v1759 = vshll.u32 %v1343, 16
      %v1761 = vrot.slane %v1759, 2
      %v1762 = vor.u32 %v1758, %v1761
      %v1763 = vsel %vm1665, %v1753, %v1762
      %v1765 = vshrl.u32 %v1344, 16
      %v1767 = vrot.slane %v1765, 1
      %v1768 = vshll.u32 %v1344, 16
      %v1770 = vrot.slane %v1768, 2
      %v1771 = vor.u32 %v1767, %v1770
      %v1772 = vsel %vm1665, %v1762, %v1771
      %v1774 = vshrl.u32 %v1345, 16
      %v1776 = vrot.slane %v1774, 1
      %v1777 = vshll.u32 %v1345, 16
      %v1779 = vrot.slane %v1777, 2
      %v1780 = vor.u32 %v1776, %v1779
      %v1781 = vsel %vm1665, %v1771, %v1780
      %v1783 = vshrl.u32 %v1346, 16
      %v1785 = vrot.slane %v1783, 1
      %v1786 = vshll.u32 %v1346, 16
      %v1788 = vrot.slane %v1786, 2
      %v1789 = vor.u32 %v1785, %v1788
      %v1790 = vsel %vm1665, %v1780, %v1789
      %v1792 = vshrl.u32 %v1347, 16
      %v1794 = vrot.slane %v1792, 1
      %v1795 = vshll.u32 %v1347, 16
      %v1797 = vrot.slane %v1795, 2
      %v1798 = vor.u32 %v1794, %v1797
      %v1799 = vsel %vm1665, %v1789, %v1798
      %v1801 = vshrl.u32 %v1348, 16
      %v1803 = vrot.slane %v1801, 1
      %v1804 = vshll.u32 %v1348, 16
      %v1806 = vrot.slane %v1804, 2
      %v1807 = vor.u32 %v1803, %v1806
      %v1808 = vsel %vm1665, %v1798, %v1807
      %v1810 = vshrl.u32 %v1349, 16
      %v1812 = vrot.slane %v1810, 1
      %v1813 = vshll.u32 %v1349, 16
      %v1815 = vrot.slane %v1813, 2
      %v1816 = vor.u32 %v1812, %v1815
      %v1817 = vsel %vm1665, %v1807, %v1816
      %v1819 = vshrl.u32 %v1350, 16
      %v1821 = vrot.slane %v1819, 1
      %v1822 = vshll.u32 %v1350, 16
      %v1824 = vrot.slane %v1822, 2
      %v1825 = vor.u32 %v1821, %v1824
      %v1826 = vsel %vm1665, %v1816, %v1825
      %v1828 = vshrl.u32 %v1664, 16
      %v1830 = vrot.slane %v1828, 1
      %v1831 = vshll.u32 %v1664, 16
      %v1833 = vrot.slane %v1831, 2
      %v1834 = vor.u32 %v1830, %v1833
      %v1835 = vsel %vm1665, %v1825, %v1834
      %v1837 = vsel %vm454, %v1682, 0
      %v1840 = vsel %vm454, %v1691, 0
      %v1843 = vsel %vm454, %v1700, 0
      %v1846 = vsel %vm454, %v1709, 0
      %v1849 = vsel %vm454, %v1718, 0
      %v1852 = vsel %vm454, %v1727, 0
      %v1855 = vsel %vm454, %v1736, 0
      %v1858 = vsel %vm454, %v1745, 0
      %v1861 = vsel %vm454, %v1754, 0
      %v1864 = vsel %vm454, %v1763, 0
      %v1867 = vsel %vm454, %v1772, 0
      %v1870 = vsel %vm454, %v1781, 0
      %v1873 = vsel %vm454, %v1790, 0
      %v1876 = vsel %vm454, %v1799, 0
      %v1879 = vsel %vm454, %v1808, 0
      %v1882 = vsel %vm454, %v1817, 0
      %v1885 = vsel %vm454, %v1826, 0
      %v1888 = vsel %vm454, %v1835, 0
      %v1891 = vsel %vm509, %v1661, 0
      %1893 = vmatprep.subr.bf16.mxu0 0
      %1894 = vmatpush1.bf16.msra.mxu0 0
      %1895 = vmatprep.subr.bf16.mxu0 0
      %1896 = vmatpush1.bf16.msra.mxu0 0
      %1897 = vmatprep.subr.bf16.mxu0 0
      %1898 = vmatpush1.bf16.msra.mxu0 0
      %1899 = vmatprep.subr.bf16.mxu0 0
      %1900 = vmatpush1.bf16.msra.mxu0 0
      %1901 = vmatprep.subr.bf16.mxu0 0
      %1902 = vmatpush1.bf16.msra.mxu0 0
      %1903 = vmatprep.subr.bf16.mxu0 0
      %1904 = vmatpush1.bf16.msra.mxu0 0
      %1905 = vmatprep.subr.bf16.mxu0 0
      %1906 = vmatpush1.bf16.msra.mxu0 0
      %1907 = vmatprep.subr.bf16.mxu0 0
      %1908 = vmatpush1.bf16.msra.mxu0 %v1891
      %1909 = vmatprep.subr.bf16.mxu0 0
      %1910 = vmatpush2.bf16.msra.mxu0 0
      %1911 = vmatprep.subr.bf16.mxu0 0
      %1912 = vmatpush2.bf16.msra.mxu0 0
      %1913 = vmatprep.subr.bf16.mxu0 0
      %1914 = vmatpush2.bf16.msra.mxu0 0
      %1915 = vmatprep.subr.bf16.mxu0 0
      %1916 = vmatpush2.bf16.msra.mxu0 0
      %1917 = vmatprep.subr.bf16.mxu0 0
      %1918 = vmatpush2.bf16.msra.mxu0 0
      %1919 = vmatprep.subr.bf16.mxu0 0
      %1920 = vmatpush2.bf16.msra.mxu0 0
      %1921 = vmatprep.subr.bf16.mxu0 0
      %1922 = vmatpush2.bf16.msra.mxu0 0
      %1923 = vmatprep.subr.bf16.mxu0 0
      %1924 = vmatpush2.bf16.msra.mxu0 0
      %1925 = vmatprep.mubr.bf16.mxu0 0
      %1926 = vmatmul.mubr.bf16.gmra.mxu0 %v1837
      %v1927 = vpop.f32.mrf.mxu0
      %v1928 = vadd.f32 0.0, %v1927
      %v1929 = vpop.f32.mrf.mxu0
      %v1930 = vpop.f32.mrf.mxu0
      %v1931 = vadd.f32 0.0, %v1930
      %v1932 = vpop.f32.mrf.mxu0
      %1933 = vmatprep.mubr.bf16.mxu0 0
      %1934 = vmatmul.mubr.bf16.gmra.mxu0 %v1840
      %v1935 = vpop.f32.mrf.mxu0
      %v1936 = vadd.f32 0.0, %v1935
      %v1937 = vpop.f32.mrf.mxu0
      %v1938 = vpop.f32.mrf.mxu0
      %v1939 = vadd.f32 0.0, %v1938
      %v1940 = vpop.f32.mrf.mxu0
      %1941 = vmatprep.mubr.bf16.mxu0 0
      %1942 = vmatmul.mubr.bf16.gmra.mxu0 %v1843
      %v1943 = vpop.f32.mrf.mxu0
      %v1944 = vadd.f32 0.0, %v1943
      %v1945 = vpop.f32.mrf.mxu0
      %v1946 = vpop.f32.mrf.mxu0
      %v1947 = vadd.f32 0.0, %v1946
      %v1948 = vpop.f32.mrf.mxu0
      %1949 = vmatprep.mubr.bf16.mxu0 0
      %1950 = vmatmul.mubr.bf16.gmra.mxu0 %v1846
      %v1951 = vpop.f32.mrf.mxu0
      %v1952 = vadd.f32 0.0, %v1951
      %v1953 = vpop.f32.mrf.mxu0
      %v1954 = vpop.f32.mrf.mxu0
      %v1955 = vadd.f32 0.0, %v1954
      %v1956 = vpop.f32.mrf.mxu0
      %1957 = vmatprep.mubr.bf16.mxu0 0
      %1958 = vmatmul.mubr.bf16.gmra.mxu0 %v1849
      %v1959 = vpop.f32.mrf.mxu0
      %v1960 = vadd.f32 0.0, %v1959
      %v1961 = vpop.f32.mrf.mxu0
      %v1962 = vpop.f32.mrf.mxu0
      %v1963 = vadd.f32 0.0, %v1962
      %v1964 = vpop.f32.mrf.mxu0
      %1965 = vmatprep.mubr.bf16.mxu0 0
      %1966 = vmatmul.mubr.bf16.gmra.mxu0 %v1852
      %v1967 = vpop.f32.mrf.mxu0
      %v1968 = vadd.f32 0.0, %v1967
      %v1969 = vpop.f32.mrf.mxu0
      %v1970 = vpop.f32.mrf.mxu0
      %v1971 = vadd.f32 0.0, %v1970
      %v1972 = vpop.f32.mrf.mxu0
      %1973 = vmatprep.mubr.bf16.mxu0 0
      %1974 = vmatmul.mubr.bf16.gmra.mxu0 %v1855
      %v1975 = vpop.f32.mrf.mxu0
      %v1976 = vadd.f32 0.0, %v1975
      %v1977 = vpop.f32.mrf.mxu0
      %v1978 = vpop.f32.mrf.mxu0
      %v1979 = vadd.f32 0.0, %v1978
      %v1980 = vpop.f32.mrf.mxu0
      %1981 = vmatprep.mubr.bf16.mxu0 0
      %1982 = vmatmul.mubr.bf16.gmra.mxu0 %v1858
      %v1983 = vpop.f32.mrf.mxu0
      %v1984 = vadd.f32 0.0, %v1983
      %v1985 = vpop.f32.mrf.mxu0
      %v1986 = vpop.f32.mrf.mxu0
      %v1987 = vadd.f32 0.0, %v1986
      %v1988 = vpop.f32.mrf.mxu0
      %1989 = vmatprep.mubr.bf16.mxu0 0
      %1990 = vmatmul.mubr.bf16.gmra.mxu0 %v1861
      %v1991 = vpop.f32.mrf.mxu0
      %v1992 = vadd.f32 0.0, %v1991
      %v1993 = vpop.f32.mrf.mxu0
      %v1994 = vpop.f32.mrf.mxu0
      %v1995 = vadd.f32 0.0, %v1994
      %v1996 = vpop.f32.mrf.mxu0
      %1997 = vmatprep.mubr.bf16.mxu0 0
      %1998 = vmatmul.mubr.bf16.gmra.mxu0 %v1864
      %v1999 = vpop.f32.mrf.mxu0
      %v2000 = vadd.f32 0.0, %v1999
      %v2001 = vpop.f32.mrf.mxu0
      %v2002 = vpop.f32.mrf.mxu0
      %v2003 = vadd.f32 0.0, %v2002
      %v2004 = vpop.f32.mrf.mxu0
      %2005 = vmatprep.mubr.bf16.mxu0 0
      %2006 = vmatmul.mubr.bf16.gmra.mxu0 %v1867
      %v2007 = vpop.f32.mrf.mxu0
      %v2008 = vadd.f32 0.0, %v2007
      %v2009 = vpop.f32.mrf.mxu0
      %v2010 = vpop.f32.mrf.mxu0
      %v2011 = vadd.f32 0.0, %v2010
      %v2012 = vpop.f32.mrf.mxu0
      %2013 = vmatprep.mubr.bf16.mxu0 0
      %2014 = vmatmul.mubr.bf16.gmra.mxu0 %v1870
      %v2015 = vpop.f32.mrf.mxu0
      %v2016 = vadd.f32 0.0, %v2015
      %v2017 = vpop.f32.mrf.mxu0
      %v2018 = vpop.f32.mrf.mxu0
      %v2019 = vadd.f32 0.0, %v2018
      %v2020 = vpop.f32.mrf.mxu0
      %2021 = vmatprep.mubr.bf16.mxu0 0
      %2022 = vmatmul.mubr.bf16.gmra.mxu0 %v1873
      %v2023 = vpop.f32.mrf.mxu0
      %v2024 = vadd.f32 0.0, %v2023
      %v2025 = vpop.f32.mrf.mxu0
      %v2026 = vpop.f32.mrf.mxu0
      %v2027 = vadd.f32 0.0, %v2026
      %v2028 = vpop.f32.mrf.mxu0
      %2029 = vmatprep.mubr.bf16.mxu0 0
      %2030 = vmatmul.mubr.bf16.gmra.mxu0 %v1876
      %v2031 = vpop.f32.mrf.mxu0
      %v2032 = vadd.f32 0.0, %v2031
      %v2033 = vpop.f32.mrf.mxu0
      %v2034 = vpop.f32.mrf.mxu0
      %v2035 = vadd.f32 0.0, %v2034
      %v2036 = vpop.f32.mrf.mxu0
      %2037 = vmatprep.mubr.bf16.mxu0 0
      %2038 = vmatmul.mubr.bf16.gmra.mxu0 %v1879
      %v2039 = vpop.f32.mrf.mxu0
      %v2040 = vadd.f32 0.0, %v2039
      %v2041 = vpop.f32.mrf.mxu0
      %v2042 = vpop.f32.mrf.mxu0
      %v2043 = vadd.f32 0.0, %v2042
      %v2044 = vpop.f32.mrf.mxu0
      %2045 = vmatprep.mubr.bf16.mxu0 0
      %2046 = vmatmul.mubr.bf16.gmra.mxu0 %v1882
      %v2047 = vpop.f32.mrf.mxu0
      %v2048 = vadd.f32 0.0, %v2047
      %v2049 = vpop.f32.mrf.mxu0
      %v2050 = vpop.f32.mrf.mxu0
      %v2051 = vadd.f32 0.0, %v2050
      %v2052 = vpop.f32.mrf.mxu0
      %2053 = vmatprep.mubr.bf16.mxu0 0
      %2054 = vmatmul.mubr.bf16.gmra.mxu0 %v1885
      %v2055 = vpop.f32.mrf.mxu0
      %v2056 = vadd.f32 0.0, %v2055
      %v2057 = vpop.f32.mrf.mxu0
      %v2058 = vpop.f32.mrf.mxu0
      %v2059 = vadd.f32 0.0, %v2058
      %v2060 = vpop.f32.mrf.mxu0
      %2061 = vmatprep.mubr.bf16.mxu0 0
      %2062 = vmatmul.mubr.bf16.gmra.mxu0 %v1888
      %v2063 = vpop.f32.mrf.mxu0
      %v2064 = vadd.f32 0.0, %v2063
      %v2065 = vpop.f32.mrf.mxu0
      %v2066 = vpop.f32.mrf.mxu0
      %v2067 = vadd.f32 0.0, %v2066
      %v2068 = vpop.f32.mrf.mxu0
      %2069 = vdwg.mxu0
      %v2070 = vadd.f32 %v1623, %v1928
      %v2071 = vadd.f32 %v1624, %v1931
      %v2072 = vadd.f32 %v1625, %v1936
      %v2073 = vadd.f32 %v1626, %v1939
      %v2074 = vadd.f32 %v1627, %v1944
      %v2075 = vadd.f32 %v1628, %v1947
      %v2076 = vadd.f32 %v1629, %v1952
      %v2077 = vadd.f32 %v1630, %v1955
      %v2078 = vadd.f32 %v1631, %v1960
      %v2079 = vadd.f32 %v1632, %v1963
      %v2080 = vadd.f32 %v1633, %v1968
      %v2081 = vadd.f32 %v1634, %v1971
      %v2082 = vadd.f32 %v1635, %v1976
      %v2083 = vadd.f32 %v1636, %v1979
      %v2084 = vadd.f32 %v1637, %v1984
      %v2085 = vadd.f32 %v1638, %v1987
      %v2086 = vadd.f32 %v1639, %v1992
      %v2087 = vadd.f32 %v1640, %v1995
      %v2088 = vadd.f32 %v1641, %v2000
      %v2089 = vadd.f32 %v1642, %v2003
      %v2090 = vadd.f32 %v1643, %v2008
      %v2091 = vadd.f32 %v1644, %v2011
      %v2092 = vadd.f32 %v1645, %v2016
      %v2093 = vadd.f32 %v1646, %v2019
      %v2094 = vadd.f32 %v1647, %v2024
      %v2095 = vadd.f32 %v1648, %v2027
      %v2096 = vadd.f32 %v1649, %v2032
      %v2097 = vadd.f32 %v1650, %v2035
      %v2098 = vadd.f32 %v1651, %v2040
      %v2099 = vadd.f32 %v1652, %v2043
      %v2100 = vadd.f32 %v1653, %v2048
      %v2101 = vadd.f32 %v1654, %v2051
      %v2102 = vadd.f32 %v1655, %v2056
      %v2103 = vadd.f32 %v1656, %v2059
      %v2104 = vadd.f32 %v1657, %v2064
      %v2105 = vadd.f32 %v1658, %v2067
      %v2106 = vld [vmem:[%s165 + $0x8] sm:$0xc]
      %s2107 = scalar_lea.vmem %s1, 10
      %v2108 = vld [vmem:[%s2107] sm:$0x3]
      %v2110 = vunpack.c.l.b16 %v2106
      %v2111 = vpack.c.b16 %v1297, %v2110
      %vm2112 = vcmask 1045504
      %v2113 = vrot.slane %v2111, 2
      %v2114 = vrot.slane %v1334, 2
      %v2115 = vsel %vm2112, %v2113, %v2114
      %v2116 = vrot.slane %v1335, 2
      %v2117 = vsel %vm2112, %v2114, %v2116
      %v2118 = vrot.slane %v1336, 2
      %v2119 = vsel %vm2112, %v2116, %v2118
      %v2120 = vrot.slane %v1337, 2
      %v2121 = vsel %vm2112, %v2118, %v2120
      %v2122 = vrot.slane %v1338, 2
      %v2123 = vsel %vm2112, %v2120, %v2122
      %v2124 = vrot.slane %v1339, 2
      %v2125 = vsel %vm2112, %v2122, %v2124
      %v2126 = vrot.slane %v1340, 2
      %v2127 = vsel %vm2112, %v2124, %v2126
      %v2128 = vrot.slane %v1341, 2
      %v2129 = vsel %vm2112, %v2126, %v2128
      %v2130 = vrot.slane %v1342, 2
      %v2131 = vsel %vm2112, %v2128, %v2130
      %v2132 = vrot.slane %v1343, 2
      %v2133 = vsel %vm2112, %v2130, %v2132
      %v2134 = vrot.slane %v1344, 2
      %v2135 = vsel %vm2112, %v2132, %v2134
      %v2136 = vrot.slane %v1345, 2
      %v2137 = vsel %vm2112, %v2134, %v2136
      %v2138 = vrot.slane %v1346, 2
      %v2139 = vsel %vm2112, %v2136, %v2138
      %v2140 = vrot.slane %v1347, 2
      %v2141 = vsel %vm2112, %v2138, %v2140
      %v2142 = vrot.slane %v1348, 2
      %v2143 = vsel %vm2112, %v2140, %v2142
      %v2144 = vrot.slane %v1349, 2
      %v2145 = vsel %vm2112, %v2142, %v2144
      %v2146 = vrot.slane %v1350, 2
      %v2147 = vsel %vm2112, %v2144, %v2146
      %v2148 = vrot.slane %v1664, 2
      %v2149 = vsel %vm2112, %v2146, %v2148
      %v2151 = vsel %vm454, %v2115, 0
      %v2154 = vsel %vm454, %v2117, 0
      %v2157 = vsel %vm454, %v2119, 0
      %v2160 = vsel %vm454, %v2121, 0
      %v2163 = vsel %vm454, %v2123, 0
      %v2166 = vsel %vm454, %v2125, 0
      %v2169 = vsel %vm454, %v2127, 0
      %v2172 = vsel %vm454, %v2129, 0
      %v2175 = vsel %vm454, %v2131, 0
      %v2178 = vsel %vm454, %v2133, 0
      %v2181 = vsel %vm454, %v2135, 0
      %v2184 = vsel %vm454, %v2137, 0
      %v2187 = vsel %vm454, %v2139, 0
      %v2190 = vsel %vm454, %v2141, 0
      %v2193 = vsel %vm454, %v2143, 0
      %v2196 = vsel %vm454, %v2145, 0
      %v2199 = vsel %vm454, %v2147, 0
      %v2202 = vsel %vm454, %v2149, 0
      %v2205 = vsel %vm509, %v2108, 0
      %2207 = vmatprep.subr.bf16.mxu0 0
      %2208 = vmatpush1.bf16.msra.mxu0 0
      %2209 = vmatprep.subr.bf16.mxu0 0
      %2210 = vmatpush1.bf16.msra.mxu0 0
      %2211 = vmatprep.subr.bf16.mxu0 0
      %2212 = vmatpush1.bf16.msra.mxu0 0
      %2213 = vmatprep.subr.bf16.mxu0 0
      %2214 = vmatpush1.bf16.msra.mxu0 0
      %2215 = vmatprep.subr.bf16.mxu0 0
      %2216 = vmatpush1.bf16.msra.mxu0 0
      %2217 = vmatprep.subr.bf16.mxu0 0
      %2218 = vmatpush1.bf16.msra.mxu0 0
      %2219 = vmatprep.subr.bf16.mxu0 0
      %2220 = vmatpush1.bf16.msra.mxu0 0
      %2221 = vmatprep.subr.bf16.mxu0 0
      %2222 = vmatpush1.bf16.msra.mxu0 %v2205
      %2223 = vmatprep.subr.bf16.mxu0 0
      %2224 = vmatpush2.bf16.msra.mxu0 0
      %2225 = vmatprep.subr.bf16.mxu0 0
      %2226 = vmatpush2.bf16.msra.mxu0 0
      %2227 = vmatprep.subr.bf16.mxu0 0
      %2228 = vmatpush2.bf16.msra.mxu0 0
      %2229 = vmatprep.subr.bf16.mxu0 0
      %2230 = vmatpush2.bf16.msra.mxu0 0
      %2231 = vmatprep.subr.bf16.mxu0 0
      %2232 = vmatpush2.bf16.msra.mxu0 0
      %2233 = vmatprep.subr.bf16.mxu0 0
      %2234 = vmatpush2.bf16.msra.mxu0 0
      %2235 = vmatprep.subr.bf16.mxu0 0
      %2236 = vmatpush2.bf16.msra.mxu0 0
      %2237 = vmatprep.subr.bf16.mxu0 0
      %2238 = vmatpush2.bf16.msra.mxu0 0
      %2239 = vmatprep.mubr.bf16.mxu0 0
      %2240 = vmatmul.mubr.bf16.gmra.mxu0 %v2151
      %v2241 = vpop.f32.mrf.mxu0
      %v2242 = vadd.f32 0.0, %v2241
      %v2243 = vpop.f32.mrf.mxu0
      %v2244 = vpop.f32.mrf.mxu0
      %v2245 = vadd.f32 0.0, %v2244
      %v2246 = vpop.f32.mrf.mxu0
      %2247 = vmatprep.mubr.bf16.mxu0 0
      %2248 = vmatmul.mubr.bf16.gmra.mxu0 %v2154
      %v2249 = vpop.f32.mrf.mxu0
      %v2250 = vadd.f32 0.0, %v2249
      %v2251 = vpop.f32.mrf.mxu0
      %v2252 = vpop.f32.mrf.mxu0
      %v2253 = vadd.f32 0.0, %v2252
      %v2254 = vpop.f32.mrf.mxu0
      %2255 = vmatprep.mubr.bf16.mxu0 0
      %2256 = vmatmul.mubr.bf16.gmra.mxu0 %v2157
      %v2257 = vpop.f32.mrf.mxu0
      %v2258 = vadd.f32 0.0, %v2257
      %v2259 = vpop.f32.mrf.mxu0
      %v2260 = vpop.f32.mrf.mxu0
      %v2261 = vadd.f32 0.0, %v2260
      %v2262 = vpop.f32.mrf.mxu0
      %2263 = vmatprep.mubr.bf16.mxu0 0
      %2264 = vmatmul.mubr.bf16.gmra.mxu0 %v2160
      %v2265 = vpop.f32.mrf.mxu0
      %v2266 = vadd.f32 0.0, %v2265
      %v2267 = vpop.f32.mrf.mxu0
      %v2268 = vpop.f32.mrf.mxu0
      %v2269 = vadd.f32 0.0, %v2268
      %v2270 = vpop.f32.mrf.mxu0
      %2271 = vmatprep.mubr.bf16.mxu0 0
      %2272 = vmatmul.mubr.bf16.gmra.mxu0 %v2163
      %v2273 = vpop.f32.mrf.mxu0
      %v2274 = vadd.f32 0.0, %v2273
      %v2275 = vpop.f32.mrf.mxu0
      %v2276 = vpop.f32.mrf.mxu0
      %v2277 = vadd.f32 0.0, %v2276
      %v2278 = vpop.f32.mrf.mxu0
      %2279 = vmatprep.mubr.bf16.mxu0 0
      %2280 = vmatmul.mubr.bf16.gmra.mxu0 %v2166
      %v2281 = vpop.f32.mrf.mxu0
      %v2282 = vadd.f32 0.0, %v2281
      %v2283 = vpop.f32.mrf.mxu0
      %v2284 = vpop.f32.mrf.mxu0
      %v2285 = vadd.f32 0.0, %v2284
      %v2286 = vpop.f32.mrf.mxu0
      %2287 = vmatprep.mubr.bf16.mxu0 0
      %2288 = vmatmul.mubr.bf16.gmra.mxu0 %v2169
      %v2289 = vpop.f32.mrf.mxu0
      %v2290 = vadd.f32 0.0, %v2289
      %v2291 = vpop.f32.mrf.mxu0
      %v2292 = vpop.f32.mrf.mxu0
      %v2293 = vadd.f32 0.0, %v2292
      %v2294 = vpop.f32.mrf.mxu0
      %2295 = vmatprep.mubr.bf16.mxu0 0
      %2296 = vmatmul.mubr.bf16.gmra.mxu0 %v2172
      %v2297 = vpop.f32.mrf.mxu0
      %v2298 = vadd.f32 0.0, %v2297
      %v2299 = vpop.f32.mrf.mxu0
      %v2300 = vpop.f32.mrf.mxu0
      %v2301 = vadd.f32 0.0, %v2300
      %v2302 = vpop.f32.mrf.mxu0
      %2303 = vmatprep.mubr.bf16.mxu0 0
      %2304 = vmatmul.mubr.bf16.gmra.mxu0 %v2175
      %v2305 = vpop.f32.mrf.mxu0
      %v2306 = vadd.f32 0.0, %v2305
      %v2307 = vpop.f32.mrf.mxu0
      %v2308 = vpop.f32.mrf.mxu0
      %v2309 = vadd.f32 0.0, %v2308
      %v2310 = vpop.f32.mrf.mxu0
      %2311 = vmatprep.mubr.bf16.mxu0 0
      %2312 = vmatmul.mubr.bf16.gmra.mxu0 %v2178
      %v2313 = vpop.f32.mrf.mxu0
      %v2314 = vadd.f32 0.0, %v2313
      %v2315 = vpop.f32.mrf.mxu0
      %v2316 = vpop.f32.mrf.mxu0
      %v2317 = vadd.f32 0.0, %v2316
      %v2318 = vpop.f32.mrf.mxu0
      %2319 = vmatprep.mubr.bf16.mxu0 0
      %2320 = vmatmul.mubr.bf16.gmra.mxu0 %v2181
      %v2321 = vpop.f32.mrf.mxu0
      %v2322 = vadd.f32 0.0, %v2321
      %v2323 = vpop.f32.mrf.mxu0
      %v2324 = vpop.f32.mrf.mxu0
      %v2325 = vadd.f32 0.0, %v2324
      %v2326 = vpop.f32.mrf.mxu0
      %2327 = vmatprep.mubr.bf16.mxu0 0
      %2328 = vmatmul.mubr.bf16.gmra.mxu0 %v2184
      %v2329 = vpop.f32.mrf.mxu0
      %v2330 = vadd.f32 0.0, %v2329
      %v2331 = vpop.f32.mrf.mxu0
      %v2332 = vpop.f32.mrf.mxu0
      %v2333 = vadd.f32 0.0, %v2332
      %v2334 = vpop.f32.mrf.mxu0
      %2335 = vmatprep.mubr.bf16.mxu0 0
      %2336 = vmatmul.mubr.bf16.gmra.mxu0 %v2187
      %v2337 = vpop.f32.mrf.mxu0
      %v2338 = vadd.f32 0.0, %v2337
      %v2339 = vpop.f32.mrf.mxu0
      %v2340 = vpop.f32.mrf.mxu0
      %v2341 = vadd.f32 0.0, %v2340
      %v2342 = vpop.f32.mrf.mxu0
      %2343 = vmatprep.mubr.bf16.mxu0 0
      %2344 = vmatmul.mubr.bf16.gmra.mxu0 %v2190
      %v2345 = vpop.f32.mrf.mxu0
      %v2346 = vadd.f32 0.0, %v2345
      %v2347 = vpop.f32.mrf.mxu0
      %v2348 = vpop.f32.mrf.mxu0
      %v2349 = vadd.f32 0.0, %v2348
      %v2350 = vpop.f32.mrf.mxu0
      %2351 = vmatprep.mubr.bf16.mxu0 0
      %2352 = vmatmul.mubr.bf16.gmra.mxu0 %v2193
      %v2353 = vpop.f32.mrf.mxu0
      %v2354 = vadd.f32 0.0, %v2353
      %v2355 = vpop.f32.mrf.mxu0
      %v2356 = vpop.f32.mrf.mxu0
      %v2357 = vadd.f32 0.0, %v2356
      %v2358 = vpop.f32.mrf.mxu0
      %2359 = vmatprep.mubr.bf16.mxu0 0
      %2360 = vmatmul.mubr.bf16.gmra.mxu0 %v2196
      %v2361 = vpop.f32.mrf.mxu0
      %v2362 = vadd.f32 0.0, %v2361
      %v2363 = vpop.f32.mrf.mxu0
      %v2364 = vpop.f32.mrf.mxu0
      %v2365 = vadd.f32 0.0, %v2364
      %v2366 = vpop.f32.mrf.mxu0
      %2367 = vmatprep.mubr.bf16.mxu0 0
      %2368 = vmatmul.mubr.bf16.gmra.mxu0 %v2199
      %v2369 = vpop.f32.mrf.mxu0
      %v2370 = vadd.f32 0.0, %v2369
      %v2371 = vpop.f32.mrf.mxu0
      %v2372 = vpop.f32.mrf.mxu0
      %v2373 = vadd.f32 0.0, %v2372
      %v2374 = vpop.f32.mrf.mxu0
      %2375 = vmatprep.mubr.bf16.mxu0 0
      %2376 = vmatmul.mubr.bf16.gmra.mxu0 %v2202
      %v2377 = vpop.f32.mrf.mxu0
      %v2378 = vadd.f32 0.0, %v2377
      %v2379 = vpop.f32.mrf.mxu0
      %v2380 = vpop.f32.mrf.mxu0
      %v2381 = vadd.f32 0.0, %v2380
      %v2382 = vpop.f32.mrf.mxu0
      %2383 = vdwg.mxu0
      %v2384 = vadd.f32 %v2070, %v2242
      %v2385 = vadd.f32 %v2071, %v2245
      %v2386 = vadd.f32 %v2072, %v2250
      %v2387 = vadd.f32 %v2073, %v2253
      %v2388 = vadd.f32 %v2074, %v2258
      %v2389 = vadd.f32 %v2075, %v2261
      %v2390 = vadd.f32 %v2076, %v2266
      %v2391 = vadd.f32 %v2077, %v2269
      %v2392 = vadd.f32 %v2078, %v2274
      %v2393 = vadd.f32 %v2079, %v2277
      %v2394 = vadd.f32 %v2080, %v2282
      %v2395 = vadd.f32 %v2081, %v2285
      %v2396 = vadd.f32 %v2082, %v2290
      %v2397 = vadd.f32 %v2083, %v2293
      %v2398 = vadd.f32 %v2084, %v2298
      %v2399 = vadd.f32 %v2085, %v2301
      %v2400 = vadd.f32 %v2086, %v2306
      %v2401 = vadd.f32 %v2087, %v2309
      %v2402 = vadd.f32 %v2088, %v2314
      %v2403 = vadd.f32 %v2089, %v2317
      %v2404 = vadd.f32 %v2090, %v2322
      %v2405 = vadd.f32 %v2091, %v2325
      %v2406 = vadd.f32 %v2092, %v2330
      %v2407 = vadd.f32 %v2093, %v2333
      %v2408 = vadd.f32 %v2094, %v2338
      %v2409 = vadd.f32 %v2095, %v2341
      %v2410 = vadd.f32 %v2096, %v2346
      %v2411 = vadd.f32 %v2097, %v2349
      %v2412 = vadd.f32 %v2098, %v2354
      %v2413 = vadd.f32 %v2099, %v2357
      %v2414 = vadd.f32 %v2100, %v2362
      %v2415 = vadd.f32 %v2101, %v2365
      %v2416 = vadd.f32 %v2102, %v2370
      %v2417 = vadd.f32 %v2103, %v2373
      %v2418 = vadd.f32 %v2104, %v2378
      %v2419 = vadd.f32 %v2105, %v2381
      %v2420 = vld [vmem:[%s165 + $0x10] sm:$0xc]
      %v2421 = vld [vmem:[%s165 + $0x14] sm:$0xf]
      %v2422 = vld [vmem:[%s165 + $0x18] sm:$0xf]
      %v2423 = vld [vmem:[%s165 + $0x1c] sm:$0xf]
      %v2424 = vld [vmem:[%s165 + $0x20] sm:$0xf]
      %v2425 = vld [vmem:[%s165 + $0x24] sm:$0xf]
      %v2426 = vld [vmem:[%s165 + $0x28] sm:$0xf]
      %v2427 = vld [vmem:[%s165 + $0x2c] sm:$0xf]
      %v2428 = vld [vmem:[%s165 + $0x30] sm:$0xf]
      %v2429 = vld [vmem:[%s165 + $0x34] sm:$0xf]
      %v2430 = vld [vmem:[%s165 + $0x38] sm:$0xf]
      %v2431 = vld [vmem:[%s165 + $0x3c] sm:$0xf]
      %v2432 = vld [vmem:[%s165 + $0x40] sm:$0xf]
      %v2433 = vld [vmem:[%s165 + $0x44] sm:$0xf]
      %v2434 = vld [vmem:[%s165 + $0x48] sm:$0xf]
      %v2435 = vld [vmem:[%s165 + $0x4c] sm:$0xf]
      %v2436 = vld [vmem:[%s165 + $0x50] sm:$0xf]
      %v2437 = vld [vmem:[%s165 + $0x54] sm:$0xf]
      %v2438 = vld [vmem:[%s165 + $0x58] sm:$0xf]
      %v2439 = vld [vmem:[%s165 + $0x5c] sm:$0xf]
      %v2440 = vld [vmem:[%s165 + $0x60] sm:$0xf]
      %v2441 = vld [vmem:[%s165 + $0x64] sm:$0xf]
      %v2442 = vld [vmem:[%s165 + $0x68] sm:$0xf]
      %v2443 = vld [vmem:[%s165 + $0x6c] sm:$0xf]
      %v2444 = vld [vmem:[%s165 + $0x70] sm:$0xf]
      %v2445 = vld [vmem:[%s165 + $0x74] sm:$0xf]
      %v2446 = vld [vmem:[%s165 + $0x78] sm:$0xf]
      %v2447 = vld [vmem:[%s165 + $0x7c] sm:$0xf]
      %v2448 = vld [vmem:[%s165 + $0x80] sm:$0xf]
      %v2449 = vld [vmem:[%s165 + $0x84] sm:$0xf]
      %v2450 = vld [vmem:[%s165 + $0x88] sm:$0xf]
      %v2451 = vld [vmem:[%s165 + $0x8c] sm:$0xf]
      %v2452 = vld [vmem:[%s165 + $0x90] sm:$0xf]
      %v2453 = vld [vmem:[%s165 + $0x94] sm:$0xf]
      %v2454 = vld [vmem:[%s165 + $0x98] sm:$0xf]
      %v2455 = vld [vmem:[%s165 + $0x9c] sm:$0xf]
      %v2456 = vld [vmem:[%s165 + $0xa0] sm:$0x3]
      %s2457 = scalar_lea.vmem %s1, 12
      %v2458 = vld [vmem:[%s2457] sm:$0x3]
      %v2496 = vunpack.c.l.b16 %v2420
      %v2497 = vunpack.c.l.b16 %v2421
      %v2498 = vunpack.c.l.b16 %v2422
      %v2499 = vunpack.c.l.b16 %v2423
      %v2500 = vunpack.c.l.b16 %v2424
      %v2501 = vunpack.c.l.b16 %v2425
      %v2502 = vunpack.c.l.b16 %v2426
      %v2503 = vunpack.c.l.b16 %v2427
      %v2504 = vunpack.c.l.b16 %v2428
      %v2505 = vunpack.c.l.b16 %v2429
      %v2506 = vunpack.c.l.b16 %v2430
      %v2507 = vunpack.c.l.b16 %v2431
      %v2508 = vunpack.c.l.b16 %v2432
      %v2509 = vunpack.c.l.b16 %v2433
      %v2510 = vunpack.c.l.b16 %v2434
      %v2511 = vunpack.c.l.b16 %v2435
      %v2512 = vunpack.c.l.b16 %v2436
      %v2513 = vunpack.c.l.b16 %v2437
      %v2514 = vunpack.c.l.b16 %v2438
      %v2515 = vunpack.c.l.b16 %v2439
      %v2516 = vunpack.c.l.b16 %v2440
      %v2517 = vunpack.c.l.b16 %v2441
      %v2518 = vunpack.c.l.b16 %v2442
      %v2519 = vunpack.c.l.b16 %v2443
      %v2520 = vunpack.c.l.b16 %v2444
      %v2521 = vunpack.c.l.b16 %v2445
      %v2522 = vunpack.c.l.b16 %v2446
      %v2523 = vunpack.c.l.b16 %v2447
      %v2524 = vunpack.c.l.b16 %v2448
      %v2525 = vunpack.c.l.b16 %v2449
      %v2526 = vunpack.c.l.b16 %v2450
      %v2527 = vunpack.c.l.b16 %v2451
      %v2528 = vunpack.c.l.b16 %v2452
      %v2529 = vunpack.c.l.b16 %v2453
      %v2530 = vunpack.c.l.b16 %v2454
      %v2531 = vunpack.c.l.b16 %v2455
      %v2532 = vunpack.c.l.b16 %v2456
      %v2533 = vpack.c.b16 %v2497, %v2496
      %v2534 = vpack.c.b16 %v2499, %v2498
      %v2535 = vpack.c.b16 %v2501, %v2500
      %v2536 = vpack.c.b16 %v2503, %v2502
      %v2537 = vpack.c.b16 %v2505, %v2504
      %v2538 = vpack.c.b16 %v2507, %v2506
      %v2539 = vpack.c.b16 %v2509, %v2508
      %v2540 = vpack.c.b16 %v2511, %v2510
      %v2541 = vpack.c.b16 %v2513, %v2512
      %v2542 = vpack.c.b16 %v2515, %v2514
      %v2543 = vpack.c.b16 %v2517, %v2516
      %v2544 = vpack.c.b16 %v2519, %v2518
      %v2545 = vpack.c.b16 %v2521, %v2520
      %v2546 = vpack.c.b16 %v2523, %v2522
      %v2547 = vpack.c.b16 %v2525, %v2524
      %v2548 = vpack.c.b16 %v2527, %v2526
      %v2549 = vpack.c.b16 %v2529, %v2528
      %v2550 = vpack.c.b16 %v2531, %v2530
      %v2551 = vpack.c.b16 %v2532, %v2532
      %v2552 = vrot.slane %v2533, 2
      %v2553 = vrot.slane %v2534, 2
      %v2554 = vsel %vm2112, %v2552, %v2553
      %v2555 = vrot.slane %v2535, 2
      %v2556 = vsel %vm2112, %v2553, %v2555
      %v2557 = vrot.slane %v2536, 2
      %v2558 = vsel %vm2112, %v2555, %v2557
      %v2559 = vrot.slane %v2537, 2
      %v2560 = vsel %vm2112, %v2557, %v2559
      %v2561 = vrot.slane %v2538, 2
      %v2562 = vsel %vm2112, %v2559, %v2561
      %v2563 = vrot.slane %v2539, 2
      %v2564 = vsel %vm2112, %v2561, %v2563
      %v2565 = vrot.slane %v2540, 2
      %v2566 = vsel %vm2112, %v2563, %v2565
      %v2567 = vrot.slane %v2541, 2
      %v2568 = vsel %vm2112, %v2565, %v2567
      %v2569 = vrot.slane %v2542, 2
      %v2570 = vsel %vm2112, %v2567, %v2569
      %v2571 = vrot.slane %v2543, 2
      %v2572 = vsel %vm2112, %v2569, %v2571
      %v2573 = vrot.slane %v2544, 2
      %v2574 = vsel %vm2112, %v2571, %v2573
      %v2575 = vrot.slane %v2545, 2
      %v2576 = vsel %vm2112, %v2573, %v2575
      %v2577 = vrot.slane %v2546, 2
      %v2578 = vsel %vm2112, %v2575, %v2577
      %v2579 = vrot.slane %v2547, 2
      %v2580 = vsel %vm2112, %v2577, %v2579
      %v2581 = vrot.slane %v2548, 2
      %v2582 = vsel %vm2112, %v2579, %v2581
      %v2583 = vrot.slane %v2549, 2
      %v2584 = vsel %vm2112, %v2581, %v2583
      %v2585 = vrot.slane %v2550, 2
      %v2586 = vsel %vm2112, %v2583, %v2585
      %v2587 = vrot.slane %v2551, 2
      %v2588 = vsel %vm2112, %v2585, %v2587
      %v2590 = vsel %vm454, %v2554, 0
      %v2593 = vsel %vm454, %v2556, 0
      %v2596 = vsel %vm454, %v2558, 0
      %v2599 = vsel %vm454, %v2560, 0
      %v2602 = vsel %vm454, %v2562, 0
      %v2605 = vsel %vm454, %v2564, 0
      %v2608 = vsel %vm454, %v2566, 0
      %v2611 = vsel %vm454, %v2568, 0
      %v2614 = vsel %vm454, %v2570, 0
      %v2617 = vsel %vm454, %v2572, 0
      %v2620 = vsel %vm454, %v2574, 0
      %v2623 = vsel %vm454, %v2576, 0
      %v2626 = vsel %vm454, %v2578, 0
      %v2629 = vsel %vm454, %v2580, 0
      %v2632 = vsel %vm454, %v2582, 0
      %v2635 = vsel %vm454, %v2584, 0
      %v2638 = vsel %vm454, %v2586, 0
      %v2641 = vsel %vm454, %v2588, 0
      %v2644 = vsel %vm509, %v2458, 0
      %2646 = vmatprep.subr.bf16.mxu0 0
      %2647 = vmatpush1.bf16.msra.mxu0 0
      %2648 = vmatprep.subr.bf16.mxu0 0
      %2649 = vmatpush1.bf16.msra.mxu0 0
      %2650 = vmatprep.subr.bf16.mxu0 0
      %2651 = vmatpush1.bf16.msra.mxu0 0
      %2652 = vmatprep.subr.bf16.mxu0 0
      %2653 = vmatpush1.bf16.msra.mxu0 0
      %2654 = vmatprep.subr.bf16.mxu0 0
      %2655 = vmatpush1.bf16.msra.mxu0 0
      %2656 = vmatprep.subr.bf16.mxu0 0
      %2657 = vmatpush1.bf16.msra.mxu0 0
      %2658 = vmatprep.subr.bf16.mxu0 0
      %2659 = vmatpush1.bf16.msra.mxu0 0
      %2660 = vmatprep.subr.bf16.mxu0 0
      %2661 = vmatpush1.bf16.msra.mxu0 %v2644
      %2662 = vmatprep.subr.bf16.mxu0 0
      %2663 = vmatpush2.bf16.msra.mxu0 0
      %2664 = vmatprep.subr.bf16.mxu0 0
      %2665 = vmatpush2.bf16.msra.mxu0 0
      %2666 = vmatprep.subr.bf16.mxu0 0
      %2667 = vmatpush2.bf16.msra.mxu0 0
      %2668 = vmatprep.subr.bf16.mxu0 0
      %2669 = vmatpush2.bf16.msra.mxu0 0
      %2670 = vmatprep.subr.bf16.mxu0 0
      %2671 = vmatpush2.bf16.msra.mxu0 0
      %2672 = vmatprep.subr.bf16.mxu0 0
      %2673 = vmatpush2.bf16.msra.mxu0 0
      %2674 = vmatprep.subr.bf16.mxu0 0
      %2675 = vmatpush2.bf16.msra.mxu0 0
      %2676 = vmatprep.subr.bf16.mxu0 0
      %2677 = vmatpush2.bf16.msra.mxu0 0
      %2678 = vmatprep.mubr.bf16.mxu0 0
      %2679 = vmatmul.mubr.bf16.gmra.mxu0 %v2590
      %v2680 = vpop.f32.mrf.mxu0
      %v2681 = vadd.f32 0.0, %v2680
      %v2682 = vpop.f32.mrf.mxu0
      %v2683 = vpop.f32.mrf.mxu0
      %v2684 = vadd.f32 0.0, %v2683
      %v2685 = vpop.f32.mrf.mxu0
      %2686 = vmatprep.mubr.bf16.mxu0 0
      %2687 = vmatmul.mubr.bf16.gmra.mxu0 %v2593
      %v2688 = vpop.f32.mrf.mxu0
      %v2689 = vadd.f32 0.0, %v2688
      %v2690 = vpop.f32.mrf.mxu0
      %v2691 = vpop.f32.mrf.mxu0
      %v2692 = vadd.f32 0.0, %v2691
      %v2693 = vpop.f32.mrf.mxu0
      %2694 = vmatprep.mubr.bf16.mxu0 0
      %2695 = vmatmul.mubr.bf16.gmra.mxu0 %v2596
      %v2696 = vpop.f32.mrf.mxu0
      %v2697 = vadd.f32 0.0, %v2696
      %v2698 = vpop.f32.mrf.mxu0
      %v2699 = vpop.f32.mrf.mxu0
      %v2700 = vadd.f32 0.0, %v2699
      %v2701 = vpop.f32.mrf.mxu0
      %2702 = vmatprep.mubr.bf16.mxu0 0
      %2703 = vmatmul.mubr.bf16.gmra.mxu0 %v2599
      %v2704 = vpop.f32.mrf.mxu0
      %v2705 = vadd.f32 0.0, %v2704
      %v2706 = vpop.f32.mrf.mxu0
      %v2707 = vpop.f32.mrf.mxu0
      %v2708 = vadd.f32 0.0, %v2707
      %v2709 = vpop.f32.mrf.mxu0
      %2710 = vmatprep.mubr.bf16.mxu0 0
      %2711 = vmatmul.mubr.bf16.gmra.mxu0 %v2602
      %v2712 = vpop.f32.mrf.mxu0
      %v2713 = vadd.f32 0.0, %v2712
      %v2714 = vpop.f32.mrf.mxu0
      %v2715 = vpop.f32.mrf.mxu0
      %v2716 = vadd.f32 0.0, %v2715
      %v2717 = vpop.f32.mrf.mxu0
      %2718 = vmatprep.mubr.bf16.mxu0 0
      %2719 = vmatmul.mubr.bf16.gmra.mxu0 %v2605
      %v2720 = vpop.f32.mrf.mxu0
      %v2721 = vadd.f32 0.0, %v2720
      %v2722 = vpop.f32.mrf.mxu0
      %v2723 = vpop.f32.mrf.mxu0
      %v2724 = vadd.f32 0.0, %v2723
      %v2725 = vpop.f32.mrf.mxu0
      %2726 = vmatprep.mubr.bf16.mxu0 0
      %2727 = vmatmul.mubr.bf16.gmra.mxu0 %v2608
      %v2728 = vpop.f32.mrf.mxu0
      %v2729 = vadd.f32 0.0, %v2728
      %v2730 = vpop.f32.mrf.mxu0
      %v2731 = vpop.f32.mrf.mxu0
      %v2732 = vadd.f32 0.0, %v2731
      %v2733 = vpop.f32.mrf.mxu0
      %2734 = vmatprep.mubr.bf16.mxu0 0
      %2735 = vmatmul.mubr.bf16.gmra.mxu0 %v2611
      %v2736 = vpop.f32.mrf.mxu0
      %v2737 = vadd.f32 0.0, %v2736
      %v2738 = vpop.f32.mrf.mxu0
      %v2739 = vpop.f32.mrf.mxu0
      %v2740 = vadd.f32 0.0, %v2739
      %v2741 = vpop.f32.mrf.mxu0
      %2742 = vmatprep.mubr.bf16.mxu0 0
      %2743 = vmatmul.mubr.bf16.gmra.mxu0 %v2614
      %v2744 = vpop.f32.mrf.mxu0
      %v2745 = vadd.f32 0.0, %v2744
      %v2746 = vpop.f32.mrf.mxu0
      %v2747 = vpop.f32.mrf.mxu0
      %v2748 = vadd.f32 0.0, %v2747
      %v2749 = vpop.f32.mrf.mxu0
      %2750 = vmatprep.mubr.bf16.mxu0 0
      %2751 = vmatmul.mubr.bf16.gmra.mxu0 %v2617
      %v2752 = vpop.f32.mrf.mxu0
      %v2753 = vadd.f32 0.0, %v2752
      %v2754 = vpop.f32.mrf.mxu0
      %v2755 = vpop.f32.mrf.mxu0
      %v2756 = vadd.f32 0.0, %v2755
      %v2757 = vpop.f32.mrf.mxu0
      %2758 = vmatprep.mubr.bf16.mxu0 0
      %2759 = vmatmul.mubr.bf16.gmra.mxu0 %v2620
      %v2760 = vpop.f32.mrf.mxu0
      %v2761 = vadd.f32 0.0, %v2760
      %v2762 = vpop.f32.mrf.mxu0
      %v2763 = vpop.f32.mrf.mxu0
      %v2764 = vadd.f32 0.0, %v2763
      %v2765 = vpop.f32.mrf.mxu0
      %2766 = vmatprep.mubr.bf16.mxu0 0
      %2767 = vmatmul.mubr.bf16.gmra.mxu0 %v2623
      %v2768 = vpop.f32.mrf.mxu0
      %v2769 = vadd.f32 0.0, %v2768
      %v2770 = vpop.f32.mrf.mxu0
      %v2771 = vpop.f32.mrf.mxu0
      %v2772 = vadd.f32 0.0, %v2771
      %v2773 = vpop.f32.mrf.mxu0
      %2774 = vmatprep.mubr.bf16.mxu0 0
      %2775 = vmatmul.mubr.bf16.gmra.mxu0 %v2626
      %v2776 = vpop.f32.mrf.mxu0
      %v2777 = vadd.f32 0.0, %v2776
      %v2778 = vpop.f32.mrf.mxu0
      %v2779 = vpop.f32.mrf.mxu0
      %v2780 = vadd.f32 0.0, %v2779
      %v2781 = vpop.f32.mrf.mxu0
      %2782 = vmatprep.mubr.bf16.mxu0 0
      %2783 = vmatmul.mubr.bf16.gmra.mxu0 %v2629
      %v2784 = vpop.f32.mrf.mxu0
      %v2785 = vadd.f32 0.0, %v2784
      %v2786 = vpop.f32.mrf.mxu0
      %v2787 = vpop.f32.mrf.mxu0
      %v2788 = vadd.f32 0.0, %v2787
      %v2789 = vpop.f32.mrf.mxu0
      %2790 = vmatprep.mubr.bf16.mxu0 0
      %2791 = vmatmul.mubr.bf16.gmra.mxu0 %v2632
      %v2792 = vpop.f32.mrf.mxu0
      %v2793 = vadd.f32 0.0, %v2792
      %v2794 = vpop.f32.mrf.mxu0
      %v2795 = vpop.f32.mrf.mxu0
      %v2796 = vadd.f32 0.0, %v2795
      %v2797 = vpop.f32.mrf.mxu0
      %2798 = vmatprep.mubr.bf16.mxu0 0
      %2799 = vmatmul.mubr.bf16.gmra.mxu0 %v2635
      %v2800 = vpop.f32.mrf.mxu0
      %v2801 = vadd.f32 0.0, %v2800
      %v2802 = vpop.f32.mrf.mxu0
      %v2803 = vpop.f32.mrf.mxu0
      %v2804 = vadd.f32 0.0, %v2803
      %v2805 = vpop.f32.mrf.mxu0
      %2806 = vmatprep.mubr.bf16.mxu0 0
      %2807 = vmatmul.mubr.bf16.gmra.mxu0 %v2638
      %v2808 = vpop.f32.mrf.mxu0
      %v2809 = vadd.f32 0.0, %v2808
      %v2810 = vpop.f32.mrf.mxu0
      %v2811 = vpop.f32.mrf.mxu0
      %v2812 = vadd.f32 0.0, %v2811
      %v2813 = vpop.f32.mrf.mxu0
      %2814 = vmatprep.mubr.bf16.mxu0 0
      %2815 = vmatmul.mubr.bf16.gmra.mxu0 %v2641
      %v2816 = vpop.f32.mrf.mxu0
      %v2817 = vadd.f32 0.0, %v2816
      %v2818 = vpop.f32.mrf.mxu0
      %v2819 = vpop.f32.mrf.mxu0
      %v2820 = vadd.f32 0.0, %v2819
      %v2821 = vpop.f32.mrf.mxu0
      %2822 = vdwg.mxu0
      %v2823 = vadd.f32 %v2384, %v2681
      %v2824 = vadd.f32 %v2385, %v2684
      %v2825 = vadd.f32 %v2386, %v2689
      %v2826 = vadd.f32 %v2387, %v2692
      %v2827 = vadd.f32 %v2388, %v2697
      %v2828 = vadd.f32 %v2389, %v2700
      %v2829 = vadd.f32 %v2390, %v2705
      %v2830 = vadd.f32 %v2391, %v2708
      %v2831 = vadd.f32 %v2392, %v2713
      %v2832 = vadd.f32 %v2393, %v2716
      %v2833 = vadd.f32 %v2394, %v2721
      %v2834 = vadd.f32 %v2395, %v2724
      %v2835 = vadd.f32 %v2396, %v2729
      %v2836 = vadd.f32 %v2397, %v2732
      %v2837 = vadd.f32 %v2398, %v2737
      %v2838 = vadd.f32 %v2399, %v2740
      %v2839 = vadd.f32 %v2400, %v2745
      %v2840 = vadd.f32 %v2401, %v2748
      %v2841 = vadd.f32 %v2402, %v2753
      %v2842 = vadd.f32 %v2403, %v2756
      %v2843 = vadd.f32 %v2404, %v2761
      %v2844 = vadd.f32 %v2405, %v2764
      %v2845 = vadd.f32 %v2406, %v2769
      %v2846 = vadd.f32 %v2407, %v2772
      %v2847 = vadd.f32 %v2408, %v2777
      %v2848 = vadd.f32 %v2409, %v2780
      %v2849 = vadd.f32 %v2410, %v2785
      %v2850 = vadd.f32 %v2411, %v2788
      %v2851 = vadd.f32 %v2412, %v2793
      %v2852 = vadd.f32 %v2413, %v2796
      %v2853 = vadd.f32 %v2414, %v2801
      %v2854 = vadd.f32 %v2415, %v2804
      %v2855 = vadd.f32 %v2416, %v2809
      %v2856 = vadd.f32 %v2417, %v2812
      %v2857 = vadd.f32 %v2418, %v2817
      %v2858 = vadd.f32 %v2419, %v2820
      %v2859 = vld [vmem:[%s165 + $0xa0] sm:$0x7]
      %s2860 = scalar_lea.vmem %s1, 14
      %v2861 = vld [vmem:[%s2860] sm:$0x3]
      %v2863 = vunpack.c.l.b16 %v2859
      %v2864 = vpack.c.b16 %v2863, %v2863
      %vm2865 = vsmask.f32 5376
      %v2867 = vshrl.u32 %v2533, 16
      %v2869 = vrot.slane %v2867, 2
      %v2870 = vshll.u32 %v2533, 16
      %v2872 = vrot.slane %v2870, 3
      %v2873 = vor.u32 %v2869, %v2872
      %v2875 = vshrl.u32 %v2534, 16
      %v2877 = vrot.slane %v2875, 2
      %v2878 = vshll.u32 %v2534, 16
      %v2880 = vrot.slane %v2878, 3
      %v2881 = vor.u32 %v2877, %v2880
      %v2882 = vsel %vm2865, %v2873, %v2881
      %v2884 = vshrl.u32 %v2535, 16
      %v2886 = vrot.slane %v2884, 2
      %v2887 = vshll.u32 %v2535, 16
      %v2889 = vrot.slane %v2887, 3
      %v2890 = vor.u32 %v2886, %v2889
      %v2891 = vsel %vm2865, %v2881, %v2890
      %v2893 = vshrl.u32 %v2536, 16
      %v2895 = vrot.slane %v2893, 2
      %v2896 = vshll.u32 %v2536, 16
      %v2898 = vrot.slane %v2896, 3
      %v2899 = vor.u32 %v2895, %v2898
      %v2900 = vsel %vm2865, %v2890, %v2899
      %v2902 = vshrl.u32 %v2537, 16
      %v2904 = vrot.slane %v2902, 2
      %v2905 = vshll.u32 %v2537, 16
      %v2907 = vrot.slane %v2905, 3
      %v2908 = vor.u32 %v2904, %v2907
      %v2909 = vsel %vm2865, %v2899, %v2908
      %v2911 = vshrl.u32 %v2538, 16
      %v2913 = vrot.slane %v2911, 2
      %v2914 = vshll.u32 %v2538, 16
      %v2916 = vrot.slane %v2914, 3
      %v2917 = vor.u32 %v2913, %v2916
      %v2918 = vsel %vm2865, %v2908, %v2917
      %v2920 = vshrl.u32 %v2539, 16
      %v2922 = vrot.slane %v2920, 2
      %v2923 = vshll.u32 %v2539, 16
      %v2925 = vrot.slane %v2923, 3
      %v2926 = vor.u32 %v2922, %v2925
      %v2927 = vsel %vm2865, %v2917, %v2926
      %v2929 = vshrl.u32 %v2540, 16
      %v2931 = vrot.slane %v2929, 2
      %v2932 = vshll.u32 %v2540, 16
      %v2934 = vrot.slane %v2932, 3
      %v2935 = vor.u32 %v2931, %v2934
      %v2936 = vsel %vm2865, %v2926, %v2935
      %v2938 = vshrl.u32 %v2541, 16
      %v2940 = vrot.slane %v2938, 2
      %v2941 = vshll.u32 %v2541, 16
      %v2943 = vrot.slane %v2941, 3
      %v2944 = vor.u32 %v2940, %v2943
      %v2945 = vsel %vm2865, %v2935, %v2944
      %v2947 = vshrl.u32 %v2542, 16
      %v2949 = vrot.slane %v2947, 2
      %v2950 = vshll.u32 %v2542, 16
      %v2952 = vrot.slane %v2950, 3
      %v2953 = vor.u32 %v2949, %v2952
      %v2954 = vsel %vm2865, %v2944, %v2953
      %v2956 = vshrl.u32 %v2543, 16
      %v2958 = vrot.slane %v2956, 2
      %v2959 = vshll.u32 %v2543, 16
      %v2961 = vrot.slane %v2959, 3
      %v2962 = vor.u32 %v2958, %v2961
      %v2963 = vsel %vm2865, %v2953, %v2962
      %v2965 = vshrl.u32 %v2544, 16
      %v2967 = vrot.slane %v2965, 2
      %v2968 = vshll.u32 %v2544, 16
      %v2970 = vrot.slane %v2968, 3
      %v2971 = vor.u32 %v2967, %v2970
      %v2972 = vsel %vm2865, %v2962, %v2971
      %v2974 = vshrl.u32 %v2545, 16
      %v2976 = vrot.slane %v2974, 2
      %v2977 = vshll.u32 %v2545, 16
      %v2979 = vrot.slane %v2977, 3
      %v2980 = vor.u32 %v2976, %v2979
      %v2981 = vsel %vm2865, %v2971, %v2980
      %v2983 = vshrl.u32 %v2546, 16
      %v2985 = vrot.slane %v2983, 2
      %v2986 = vshll.u32 %v2546, 16
      %v2988 = vrot.slane %v2986, 3
      %v2989 = vor.u32 %v2985, %v2988
      %v2990 = vsel %vm2865, %v2980, %v2989
      %v2992 = vshrl.u32 %v2547, 16
      %v2994 = vrot.slane %v2992, 2
      %v2995 = vshll.u32 %v2547, 16
      %v2997 = vrot.slane %v2995, 3
      %v2998 = vor.u32 %v2994, %v2997
      %v2999 = vsel %vm2865, %v2989, %v2998
      %v3001 = vshrl.u32 %v2548, 16
      %v3003 = vrot.slane %v3001, 2
      %v3004 = vshll.u32 %v2548, 16
      %v3006 = vrot.slane %v3004, 3
      %v3007 = vor.u32 %v3003, %v3006
      %v3008 = vsel %vm2865, %v2998, %v3007
      %v3010 = vshrl.u32 %v2549, 16
      %v3012 = vrot.slane %v3010, 2
      %v3013 = vshll.u32 %v2549, 16
      %v3015 = vrot.slane %v3013, 3
      %v3016 = vor.u32 %v3012, %v3015
      %v3017 = vsel %vm2865, %v3007, %v3016
      %v3019 = vshrl.u32 %v2550, 16
      %v3021 = vrot.slane %v3019, 2
      %v3022 = vshll.u32 %v2550, 16
      %v3024 = vrot.slane %v3022, 3
      %v3025 = vor.u32 %v3021, %v3024
      %v3026 = vsel %vm2865, %v3016, %v3025
      %v3028 = vshrl.u32 %v2864, 16
      %v3030 = vrot.slane %v3028, 2
      %v3031 = vshll.u32 %v2864, 16
      %v3033 = vrot.slane %v3031, 3
      %v3034 = vor.u32 %v3030, %v3033
      %v3035 = vsel %vm2865, %v3025, %v3034
      %v3037 = vsel %vm454, %v2882, 0
      %v3040 = vsel %vm454, %v2891, 0
      %v3043 = vsel %vm454, %v2900, 0
      %v3046 = vsel %vm454, %v2909, 0
      %v3049 = vsel %vm454, %v2918, 0
      %v3052 = vsel %vm454, %v2927, 0
      %v3055 = vsel %vm454, %v2936, 0
      %v3058 = vsel %vm454, %v2945, 0
      %v3061 = vsel %vm454, %v2954, 0
      %v3064 = vsel %vm454, %v2963, 0
      %v3067 = vsel %vm454, %v2972, 0
      %v3070 = vsel %vm454, %v2981, 0
      %v3073 = vsel %vm454, %v2990, 0
      %v3076 = vsel %vm454, %v2999, 0
      %v3079 = vsel %vm454, %v3008, 0
      %v3082 = vsel %vm454, %v3017, 0
      %v3085 = vsel %vm454, %v3026, 0
      %v3088 = vsel %vm454, %v3035, 0
      %v3091 = vsel %vm509, %v2861, 0
      %3093 = vmatprep.subr.bf16.mxu0 0
      %3094 = vmatpush1.bf16.msra.mxu0 0
      %3095 = vmatprep.subr.bf16.mxu0 0
      %3096 = vmatpush1.bf16.msra.mxu0 0
      %3097 = vmatprep.subr.bf16.mxu0 0
      %3098 = vmatpush1.bf16.msra.mxu0 0
      %3099 = vmatprep.subr.bf16.mxu0 0
      %3100 = vmatpush1.bf16.msra.mxu0 0
      %3101 = vmatprep.subr.bf16.mxu0 0
      %3102 = vmatpush1.bf16.msra.mxu0 0
      %3103 = vmatprep.subr.bf16.mxu0 0
      %3104 = vmatpush1.bf16.msra.mxu0 0
      %3105 = vmatprep.subr.bf16.mxu0 0
      %3106 = vmatpush1.bf16.msra.mxu0 0
      %3107 = vmatprep.subr.bf16.mxu0 0
      %3108 = vmatpush1.bf16.msra.mxu0 %v3091
      %3109 = vmatprep.subr.bf16.mxu0 0
      %3110 = vmatpush2.bf16.msra.mxu0 0
      %3111 = vmatprep.subr.bf16.mxu0 0
      %3112 = vmatpush2.bf16.msra.mxu0 0
      %3113 = vmatprep.subr.bf16.mxu0 0
      %3114 = vmatpush2.bf16.msra.mxu0 0
      %3115 = vmatprep.subr.bf16.mxu0 0
      %3116 = vmatpush2.bf16.msra.mxu0 0
      %3117 = vmatprep.subr.bf16.mxu0 0
      %3118 = vmatpush2.bf16.msra.mxu0 0
      %3119 = vmatprep.subr.bf16.mxu0 0
      %3120 = vmatpush2.bf16.msra.mxu0 0
      %3121 = vmatprep.subr.bf16.mxu0 0
      %3122 = vmatpush2.bf16.msra.mxu0 0
      %3123 = vmatprep.subr.bf16.mxu0 0
      %3124 = vmatpush2.bf16.msra.mxu0 0
      %3125 = vmatprep.mubr.bf16.mxu0 0
      %3126 = vmatmul.mubr.bf16.gmra.mxu0 %v3037
      %v3127 = vpop.f32.mrf.mxu0
      %v3128 = vadd.f32 0.0, %v3127
      %v3129 = vpop.f32.mrf.mxu0
      %v3130 = vpop.f32.mrf.mxu0
      %v3131 = vadd.f32 0.0, %v3130
      %v3132 = vpop.f32.mrf.mxu0
      %3133 = vmatprep.mubr.bf16.mxu0 0
      %3134 = vmatmul.mubr.bf16.gmra.mxu0 %v3040
      %v3135 = vpop.f32.mrf.mxu0
      %v3136 = vadd.f32 0.0, %v3135
      %v3137 = vpop.f32.mrf.mxu0
      %v3138 = vpop.f32.mrf.mxu0
      %v3139 = vadd.f32 0.0, %v3138
      %v3140 = vpop.f32.mrf.mxu0
      %3141 = vmatprep.mubr.bf16.mxu0 0
      %3142 = vmatmul.mubr.bf16.gmra.mxu0 %v3043
      %v3143 = vpop.f32.mrf.mxu0
      %v3144 = vadd.f32 0.0, %v3143
      %v3145 = vpop.f32.mrf.mxu0
      %v3146 = vpop.f32.mrf.mxu0
      %v3147 = vadd.f32 0.0, %v3146
      %v3148 = vpop.f32.mrf.mxu0
      %3149 = vmatprep.mubr.bf16.mxu0 0
      %3150 = vmatmul.mubr.bf16.gmra.mxu0 %v3046
      %v3151 = vpop.f32.mrf.mxu0
      %v3152 = vadd.f32 0.0, %v3151
      %v3153 = vpop.f32.mrf.mxu0
      %v3154 = vpop.f32.mrf.mxu0
      %v3155 = vadd.f32 0.0, %v3154
      %v3156 = vpop.f32.mrf.mxu0
      %3157 = vmatprep.mubr.bf16.mxu0 0
      %3158 = vmatmul.mubr.bf16.gmra.mxu0 %v3049
      %v3159 = vpop.f32.mrf.mxu0
      %v3160 = vadd.f32 0.0, %v3159
      %v3161 = vpop.f32.mrf.mxu0
      %v3162 = vpop.f32.mrf.mxu0
      %v3163 = vadd.f32 0.0, %v3162
      %v3164 = vpop.f32.mrf.mxu0
      %3165 = vmatprep.mubr.bf16.mxu0 0
      %3166 = vmatmul.mubr.bf16.gmra.mxu0 %v3052
      %v3167 = vpop.f32.mrf.mxu0
      %v3168 = vadd.f32 0.0, %v3167
      %v3169 = vpop.f32.mrf.mxu0
      %v3170 = vpop.f32.mrf.mxu0
      %v3171 = vadd.f32 0.0, %v3170
      %v3172 = vpop.f32.mrf.mxu0
      %3173 = vmatprep.mubr.bf16.mxu0 0
      %3174 = vmatmul.mubr.bf16.gmra.mxu0 %v3055
      %v3175 = vpop.f32.mrf.mxu0
      %v3176 = vadd.f32 0.0, %v3175
      %v3177 = vpop.f32.mrf.mxu0
      %v3178 = vpop.f32.mrf.mxu0
      %v3179 = vadd.f32 0.0, %v3178
      %v3180 = vpop.f32.mrf.mxu0
      %3181 = vmatprep.mubr.bf16.mxu0 0
      %3182 = vmatmul.mubr.bf16.gmra.mxu0 %v3058
      %v3183 = vpop.f32.mrf.mxu0
      %v3184 = vadd.f32 0.0, %v3183
      %v3185 = vpop.f32.mrf.mxu0
      %v3186 = vpop.f32.mrf.mxu0
      %v3187 = vadd.f32 0.0, %v3186
      %v3188 = vpop.f32.mrf.mxu0
      %3189 = vmatprep.mubr.bf16.mxu0 0
      %3190 = vmatmul.mubr.bf16.gmra.mxu0 %v3061
      %v3191 = vpop.f32.mrf.mxu0
      %v3192 = vadd.f32 0.0, %v3191
      %v3193 = vpop.f32.mrf.mxu0
      %v3194 = vpop.f32.mrf.mxu0
      %v3195 = vadd.f32 0.0, %v3194
      %v3196 = vpop.f32.mrf.mxu0
      %3197 = vmatprep.mubr.bf16.mxu0 0
      %3198 = vmatmul.mubr.bf16.gmra.mxu0 %v3064
      %v3199 = vpop.f32.mrf.mxu0
      %v3200 = vadd.f32 0.0, %v3199
      %v3201 = vpop.f32.mrf.mxu0
      %v3202 = vpop.f32.mrf.mxu0
      %v3203 = vadd.f32 0.0, %v3202
      %v3204 = vpop.f32.mrf.mxu0
      %3205 = vmatprep.mubr.bf16.mxu0 0
      %3206 = vmatmul.mubr.bf16.gmra.mxu0 %v3067
      %v3207 = vpop.f32.mrf.mxu0
      %v3208 = vadd.f32 0.0, %v3207
      %v3209 = vpop.f32.mrf.mxu0
      %v3210 = vpop.f32.mrf.mxu0
      %v3211 = vadd.f32 0.0, %v3210
      %v3212 = vpop.f32.mrf.mxu0
      %3213 = vmatprep.mubr.bf16.mxu0 0
      %3214 = vmatmul.mubr.bf16.gmra.mxu0 %v3070
      %v3215 = vpop.f32.mrf.mxu0
      %v3216 = vadd.f32 0.0, %v3215
      %v3217 = vpop.f32.mrf.mxu0
      %v3218 = vpop.f32.mrf.mxu0
      %v3219 = vadd.f32 0.0, %v3218
      %v3220 = vpop.f32.mrf.mxu0
      %3221 = vmatprep.mubr.bf16.mxu0 0
      %3222 = vmatmul.mubr.bf16.gmra.mxu0 %v3073
      %v3223 = vpop.f32.mrf.mxu0
      %v3224 = vadd.f32 0.0, %v3223
      %v3225 = vpop.f32.mrf.mxu0
      %v3226 = vpop.f32.mrf.mxu0
      %v3227 = vadd.f32 0.0, %v3226
      %v3228 = vpop.f32.mrf.mxu0
      %3229 = vmatprep.mubr.bf16.mxu0 0
      %3230 = vmatmul.mubr.bf16.gmra.mxu0 %v3076
      %v3231 = vpop.f32.mrf.mxu0
      %v3232 = vadd.f32 0.0, %v3231
      %v3233 = vpop.f32.mrf.mxu0
      %v3234 = vpop.f32.mrf.mxu0
      %v3235 = vadd.f32 0.0, %v3234
      %v3236 = vpop.f32.mrf.mxu0
      %3237 = vmatprep.mubr.bf16.mxu0 0
      %3238 = vmatmul.mubr.bf16.gmra.mxu0 %v3079
      %v3239 = vpop.f32.mrf.mxu0
      %v3240 = vadd.f32 0.0, %v3239
      %v3241 = vpop.f32.mrf.mxu0
      %v3242 = vpop.f32.mrf.mxu0
      %v3243 = vadd.f32 0.0, %v3242
      %v3244 = vpop.f32.mrf.mxu0
      %3245 = vmatprep.mubr.bf16.mxu0 0
      %3246 = vmatmul.mubr.bf16.gmra.mxu0 %v3082
      %v3247 = vpop.f32.mrf.mxu0
      %v3248 = vadd.f32 0.0, %v3247
      %v3249 = vpop.f32.mrf.mxu0
      %v3250 = vpop.f32.mrf.mxu0
      %v3251 = vadd.f32 0.0, %v3250
      %v3252 = vpop.f32.mrf.mxu0
      %3253 = vmatprep.mubr.bf16.mxu0 0
      %3254 = vmatmul.mubr.bf16.gmra.mxu0 %v3085
      %v3255 = vpop.f32.mrf.mxu0
      %v3256 = vadd.f32 0.0, %v3255
      %v3257 = vpop.f32.mrf.mxu0
      %v3258 = vpop.f32.mrf.mxu0
      %v3259 = vadd.f32 0.0, %v3258
      %v3260 = vpop.f32.mrf.mxu0
      %3261 = vmatprep.mubr.bf16.mxu0 0
      %3262 = vmatmul.mubr.bf16.gmra.mxu0 %v3088
      %v3263 = vpop.f32.mrf.mxu0
      %v3264 = vadd.f32 0.0, %v3263
      %v3265 = vpop.f32.mrf.mxu0
      %v3266 = vpop.f32.mrf.mxu0
      %v3267 = vadd.f32 0.0, %v3266
      %v3268 = vpop.f32.mrf.mxu0
      %3269 = vdwg.mxu0
      %v3270 = vadd.f32 %v2823, %v3128
      %v3271 = vadd.f32 %v2824, %v3131
      %v3272 = vadd.f32 %v2825, %v3136
      %v3273 = vadd.f32 %v2826, %v3139
      %v3274 = vadd.f32 %v2827, %v3144
      %v3275 = vadd.f32 %v2828, %v3147
      %v3276 = vadd.f32 %v2829, %v3152
      %v3277 = vadd.f32 %v2830, %v3155
      %v3278 = vadd.f32 %v2831, %v3160
      %v3279 = vadd.f32 %v2832, %v3163
      %v3280 = vadd.f32 %v2833, %v3168
      %v3281 = vadd.f32 %v2834, %v3171
      %v3282 = vadd.f32 %v2835, %v3176
      %v3283 = vadd.f32 %v2836, %v3179
      %v3284 = vadd.f32 %v2837, %v3184
      %v3285 = vadd.f32 %v2838, %v3187
      %v3286 = vadd.f32 %v2839, %v3192
      %v3287 = vadd.f32 %v2840, %v3195
      %v3288 = vadd.f32 %v2841, %v3200
      %v3289 = vadd.f32 %v2842, %v3203
      %v3290 = vadd.f32 %v2843, %v3208
      %v3291 = vadd.f32 %v2844, %v3211
      %v3292 = vadd.f32 %v2845, %v3216
      %v3293 = vadd.f32 %v2846, %v3219
      %v3294 = vadd.f32 %v2847, %v3224
      %v3295 = vadd.f32 %v2848, %v3227
      %v3296 = vadd.f32 %v2849, %v3232
      %v3297 = vadd.f32 %v2850, %v3235
      %v3298 = vadd.f32 %v2851, %v3240
      %v3299 = vadd.f32 %v2852, %v3243
      %v3300 = vadd.f32 %v2853, %v3248
      %v3301 = vadd.f32 %v2854, %v3251
      %v3302 = vadd.f32 %v2855, %v3256
      %v3303 = vadd.f32 %v2856, %v3259
      %v3304 = vadd.f32 %v2857, %v3264
      %v3305 = vadd.f32 %v2858, %v3267
      %v3306 = vld [vmem:[%s165 + $0x10] sm:$0x8]
      %s3307 = scalar_lea.vmem %s1, 16
      %v3308 = vld [vmem:[%s3307] sm:$0x3]
      %v3310 = vunpack.c.l.b16 %v3306
      %v3311 = vpack.c.b16 %v2497, %v3310
      %vm3312 = vcmask 1044480
      %v3313 = vrot.slane %v3311, 3
      %v3314 = vrot.slane %v2534, 3
      %v3315 = vsel %vm3312, %v3313, %v3314
      %v3316 = vrot.slane %v2535, 3
      %v3317 = vsel %vm3312, %v3314, %v3316
      %v3318 = vrot.slane %v2536, 3
      %v3319 = vsel %vm3312, %v3316, %v3318
      %v3320 = vrot.slane %v2537, 3
      %v3321 = vsel %vm3312, %v3318, %v3320
      %v3322 = vrot.slane %v2538, 3
      %v3323 = vsel %vm3312, %v3320, %v3322
      %v3324 = vrot.slane %v2539, 3
      %v3325 = vsel %vm3312, %v3322, %v3324
      %v3326 = vrot.slane %v2540, 3
      %v3327 = vsel %vm3312, %v3324, %v3326
      %v3328 = vrot.slane %v2541, 3
      %v3329 = vsel %vm3312, %v3326, %v3328
      %v3330 = vrot.slane %v2542, 3
      %v3331 = vsel %vm3312, %v3328, %v3330
      %v3332 = vrot.slane %v2543, 3
      %v3333 = vsel %vm3312, %v3330, %v3332
      %v3334 = vrot.slane %v2544, 3
      %v3335 = vsel %vm3312, %v3332, %v3334
      %v3336 = vrot.slane %v2545, 3
      %v3337 = vsel %vm3312, %v3334, %v3336
      %v3338 = vrot.slane %v2546, 3
      %v3339 = vsel %vm3312, %v3336, %v3338
      %v3340 = vrot.slane %v2547, 3
      %v3341 = vsel %vm3312, %v3338, %v3340
      %v3342 = vrot.slane %v2548, 3
      %v3343 = vsel %vm3312, %v3340, %v3342
      %v3344 = vrot.slane %v2549, 3
      %v3345 = vsel %vm3312, %v3342, %v3344
      %v3346 = vrot.slane %v2550, 3
      %v3347 = vsel %vm3312, %v3344, %v3346
      %v3348 = vrot.slane %v2864, 3
      %v3349 = vsel %vm3312, %v3346, %v3348
      %v3351 = vsel %vm454, %v3315, 0
      %v3354 = vsel %vm454, %v3317, 0
      %v3357 = vsel %vm454, %v3319, 0
      %v3360 = vsel %vm454, %v3321, 0
      %v3363 = vsel %vm454, %v3323, 0
      %v3366 = vsel %vm454, %v3325, 0
      %v3369 = vsel %vm454, %v3327, 0
      %v3372 = vsel %vm454, %v3329, 0
      %v3375 = vsel %vm454, %v3331, 0
      %v3378 = vsel %vm454, %v3333, 0
      %v3381 = vsel %vm454, %v3335, 0
      %v3384 = vsel %vm454, %v3337, 0
      %v3387 = vsel %vm454, %v3339, 0
      %v3390 = vsel %vm454, %v3341, 0
      %v3393 = vsel %vm454, %v3343, 0
      %v3396 = vsel %vm454, %v3345, 0
      %v3399 = vsel %vm454, %v3347, 0
      %v3402 = vsel %vm454, %v3349, 0
      %v3405 = vsel %vm509, %v3308, 0
      %3407 = vmatprep.subr.bf16.mxu0 0
      %3408 = vmatpush1.bf16.msra.mxu0 0
      %3409 = vmatprep.subr.bf16.mxu0 0
      %3410 = vmatpush1.bf16.msra.mxu0 0
      %3411 = vmatprep.subr.bf16.mxu0 0
      %3412 = vmatpush1.bf16.msra.mxu0 0
      %3413 = vmatprep.subr.bf16.mxu0 0
      %3414 = vmatpush1.bf16.msra.mxu0 0
      %3415 = vmatprep.subr.bf16.mxu0 0
      %3416 = vmatpush1.bf16.msra.mxu0 0
      %3417 = vmatprep.subr.bf16.mxu0 0
      %3418 = vmatpush1.bf16.msra.mxu0 0
      %3419 = vmatprep.subr.bf16.mxu0 0
      %3420 = vmatpush1.bf16.msra.mxu0 0
      %3421 = vmatprep.subr.bf16.mxu0 0
      %3422 = vmatpush1.bf16.msra.mxu0 %v3405
      %3423 = vmatprep.subr.bf16.mxu0 0
      %3424 = vmatpush2.bf16.msra.mxu0 0
      %3425 = vmatprep.subr.bf16.mxu0 0
      %3426 = vmatpush2.bf16.msra.mxu0 0
      %3427 = vmatprep.subr.bf16.mxu0 0
      %3428 = vmatpush2.bf16.msra.mxu0 0
      %3429 = vmatprep.subr.bf16.mxu0 0
      %3430 = vmatpush2.bf16.msra.mxu0 0
      %3431 = vmatprep.subr.bf16.mxu0 0
      %3432 = vmatpush2.bf16.msra.mxu0 0
      %3433 = vmatprep.subr.bf16.mxu0 0
      %3434 = vmatpush2.bf16.msra.mxu0 0
      %3435 = vmatprep.subr.bf16.mxu0 0
      %3436 = vmatpush2.bf16.msra.mxu0 0
      %3437 = vmatprep.subr.bf16.mxu0 0
      %3438 = vmatpush2.bf16.msra.mxu0 0
      %3439 = vmatprep.mubr.bf16.mxu0 0
      %3440 = vmatmul.mubr.bf16.gmra.mxu0 %v3351
      %v3441 = vpop.f32.mrf.mxu0
      %v3442 = vadd.f32 0.0, %v3441
      %v3443 = vpop.f32.mrf.mxu0
      %v3444 = vpop.f32.mrf.mxu0
      %v3445 = vadd.f32 0.0, %v3444
      %v3446 = vpop.f32.mrf.mxu0
      %3447 = vmatprep.mubr.bf16.mxu0 0
      %3448 = vmatmul.mubr.bf16.gmra.mxu0 %v3354
      %v3449 = vpop.f32.mrf.mxu0
      %v3450 = vadd.f32 0.0, %v3449
      %v3451 = vpop.f32.mrf.mxu0
      %v3452 = vpop.f32.mrf.mxu0
      %v3453 = vadd.f32 0.0, %v3452
      %v3454 = vpop.f32.mrf.mxu0
      %3455 = vmatprep.mubr.bf16.mxu0 0
      %3456 = vmatmul.mubr.bf16.gmra.mxu0 %v3357
      %v3457 = vpop.f32.mrf.mxu0
      %v3458 = vadd.f32 0.0, %v3457
      %v3459 = vpop.f32.mrf.mxu0
      %v3460 = vpop.f32.mrf.mxu0
      %v3461 = vadd.f32 0.0, %v3460
      %v3462 = vpop.f32.mrf.mxu0
      %3463 = vmatprep.mubr.bf16.mxu0 0
      %3464 = vmatmul.mubr.bf16.gmra.mxu0 %v3360
      %v3465 = vpop.f32.mrf.mxu0
      %v3466 = vadd.f32 0.0, %v3465
      %v3467 = vpop.f32.mrf.mxu0
      %v3468 = vpop.f32.mrf.mxu0
      %v3469 = vadd.f32 0.0, %v3468
      %v3470 = vpop.f32.mrf.mxu0
      %3471 = vmatprep.mubr.bf16.mxu0 0
      %3472 = vmatmul.mubr.bf16.gmra.mxu0 %v3363
      %v3473 = vpop.f32.mrf.mxu0
      %v3474 = vadd.f32 0.0, %v3473
      %v3475 = vpop.f32.mrf.mxu0
      %v3476 = vpop.f32.mrf.mxu0
      %v3477 = vadd.f32 0.0, %v3476
      %v3478 = vpop.f32.mrf.mxu0
      %3479 = vmatprep.mubr.bf16.mxu0 0
      %3480 = vmatmul.mubr.bf16.gmra.mxu0 %v3366
      %v3481 = vpop.f32.mrf.mxu0
      %v3482 = vadd.f32 0.0, %v3481
      %v3483 = vpop.f32.mrf.mxu0
      %v3484 = vpop.f32.mrf.mxu0
      %v3485 = vadd.f32 0.0, %v3484
      %v3486 = vpop.f32.mrf.mxu0
      %3487 = vmatprep.mubr.bf16.mxu0 0
      %3488 = vmatmul.mubr.bf16.gmra.mxu0 %v3369
      %v3489 = vpop.f32.mrf.mxu0
      %v3490 = vadd.f32 0.0, %v3489
      %v3491 = vpop.f32.mrf.mxu0
      %v3492 = vpop.f32.mrf.mxu0
      %v3493 = vadd.f32 0.0, %v3492
      %v3494 = vpop.f32.mrf.mxu0
      %3495 = vmatprep.mubr.bf16.mxu0 0
      %3496 = vmatmul.mubr.bf16.gmra.mxu0 %v3372
      %v3497 = vpop.f32.mrf.mxu0
      %v3498 = vadd.f32 0.0, %v3497
      %v3499 = vpop.f32.mrf.mxu0
      %v3500 = vpop.f32.mrf.mxu0
      %v3501 = vadd.f32 0.0, %v3500
      %v3502 = vpop.f32.mrf.mxu0
      %3503 = vmatprep.mubr.bf16.mxu0 0
      %3504 = vmatmul.mubr.bf16.gmra.mxu0 %v3375
      %v3505 = vpop.f32.mrf.mxu0
      %v3506 = vadd.f32 0.0, %v3505
      %v3507 = vpop.f32.mrf.mxu0
      %v3508 = vpop.f32.mrf.mxu0
      %v3509 = vadd.f32 0.0, %v3508
      %v3510 = vpop.f32.mrf.mxu0
      %3511 = vmatprep.mubr.bf16.mxu0 0
      %3512 = vmatmul.mubr.bf16.gmra.mxu0 %v3378
      %v3513 = vpop.f32.mrf.mxu0
      %v3514 = vadd.f32 0.0, %v3513
      %v3515 = vpop.f32.mrf.mxu0
      %v3516 = vpop.f32.mrf.mxu0
      %v3517 = vadd.f32 0.0, %v3516
      %v3518 = vpop.f32.mrf.mxu0
      %3519 = vmatprep.mubr.bf16.mxu0 0
      %3520 = vmatmul.mubr.bf16.gmra.mxu0 %v3381
      %v3521 = vpop.f32.mrf.mxu0
      %v3522 = vadd.f32 0.0, %v3521
      %v3523 = vpop.f32.mrf.mxu0
      %v3524 = vpop.f32.mrf.mxu0
      %v3525 = vadd.f32 0.0, %v3524
      %v3526 = vpop.f32.mrf.mxu0
      %3527 = vmatprep.mubr.bf16.mxu0 0
      %3528 = vmatmul.mubr.bf16.gmra.mxu0 %v3384
      %v3529 = vpop.f32.mrf.mxu0
      %v3530 = vadd.f32 0.0, %v3529
      %v3531 = vpop.f32.mrf.mxu0
      %v3532 = vpop.f32.mrf.mxu0
      %v3533 = vadd.f32 0.0, %v3532
      %v3534 = vpop.f32.mrf.mxu0
      %3535 = vmatprep.mubr.bf16.mxu0 0
      %3536 = vmatmul.mubr.bf16.gmra.mxu0 %v3387
      %v3537 = vpop.f32.mrf.mxu0
      %v3538 = vadd.f32 0.0, %v3537
      %v3539 = vpop.f32.mrf.mxu0
      %v3540 = vpop.f32.mrf.mxu0
      %v3541 = vadd.f32 0.0, %v3540
      %v3542 = vpop.f32.mrf.mxu0
      %3543 = vmatprep.mubr.bf16.mxu0 0
      %3544 = vmatmul.mubr.bf16.gmra.mxu0 %v3390
      %v3545 = vpop.f32.mrf.mxu0
      %v3546 = vadd.f32 0.0, %v3545
      %v3547 = vpop.f32.mrf.mxu0
      %v3548 = vpop.f32.mrf.mxu0
      %v3549 = vadd.f32 0.0, %v3548
      %v3550 = vpop.f32.mrf.mxu0
      %3551 = vmatprep.mubr.bf16.mxu0 0
      %3552 = vmatmul.mubr.bf16.gmra.mxu0 %v3393
      %v3553 = vpop.f32.mrf.mxu0
      %v3554 = vadd.f32 0.0, %v3553
      %v3555 = vpop.f32.mrf.mxu0
      %v3556 = vpop.f32.mrf.mxu0
      %v3557 = vadd.f32 0.0, %v3556
      %v3558 = vpop.f32.mrf.mxu0
      %3559 = vmatprep.mubr.bf16.mxu0 0
      %3560 = vmatmul.mubr.bf16.gmra.mxu0 %v3396
      %v3561 = vpop.f32.mrf.mxu0
      %v3562 = vadd.f32 0.0, %v3561
      %v3563 = vpop.f32.mrf.mxu0
      %v3564 = vpop.f32.mrf.mxu0
      %v3565 = vadd.f32 0.0, %v3564
      %v3566 = vpop.f32.mrf.mxu0
      %3567 = vmatprep.mubr.bf16.mxu0 0
      %3568 = vmatmul.mubr.bf16.gmra.mxu0 %v3399
      %v3569 = vpop.f32.mrf.mxu0
      %v3570 = vadd.f32 0.0, %v3569
      %v3571 = vpop.f32.mrf.mxu0
      %v3572 = vpop.f32.mrf.mxu0
      %v3573 = vadd.f32 0.0, %v3572
      %v3574 = vpop.f32.mrf.mxu0
      %3575 = vmatprep.mubr.bf16.mxu0 0
      %3576 = vmatmul.mubr.bf16.gmra.mxu0 %v3402
      %v3577 = vpop.f32.mrf.mxu0
      %v3578 = vadd.f32 0.0, %v3577
      %v3579 = vpop.f32.mrf.mxu0
      %v3580 = vpop.f32.mrf.mxu0
      %v3581 = vadd.f32 0.0, %v3580
      %v3582 = vpop.f32.mrf.mxu0
      %3583 = vdwg.mxu0
      %v3584 = vadd.f32 %v3270, %v3442
      %v3585 = vadd.f32 %v3271, %v3445
      %v3586 = vadd.f32 %v3272, %v3450
      %v3587 = vadd.f32 %v3273, %v3453
      %v3588 = vadd.f32 %v3274, %v3458
      %v3589 = vadd.f32 %v3275, %v3461
      %v3590 = vadd.f32 %v3276, %v3466
      %v3591 = vadd.f32 %v3277, %v3469
      %v3592 = vadd.f32 %v3278, %v3474
      %v3593 = vadd.f32 %v3279, %v3477
      %v3594 = vadd.f32 %v3280, %v3482
      %v3595 = vadd.f32 %v3281, %v3485
      %v3596 = vadd.f32 %v3282, %v3490
      %v3597 = vadd.f32 %v3283, %v3493
      %v3598 = vadd.f32 %v3284, %v3498
      %v3599 = vadd.f32 %v3285, %v3501
      %v3600 = vadd.f32 %v3286, %v3506
      %v3601 = vadd.f32 %v3287, %v3509
      %v3602 = vadd.f32 %v3288, %v3514
      %v3603 = vadd.f32 %v3289, %v3517
      %v3604 = vadd.f32 %v3290, %v3522
      %v3605 = vadd.f32 %v3291, %v3525
      %v3606 = vadd.f32 %v3292, %v3530
      %v3607 = vadd.f32 %v3293, %v3533
      %v3608 = vadd.f32 %v3294, %v3538
      %v3609 = vadd.f32 %v3295, %v3541
      %v3610 = vadd.f32 %v3296, %v3546
      %v3611 = vadd.f32 %v3297, %v3549
      %v3612 = vadd.f32 %v3298, %v3554
      %v3613 = vadd.f32 %v3299, %v3557
      %v3614 = vadd.f32 %v3300, %v3562
      %v3615 = vadd.f32 %v3301, %v3565
      %v3616 = vadd.f32 %v3302, %v3570
      %v3617 = vadd.f32 %v3303, %v3573
      %v3618 = vadd.f32 %v3304, %v3578
      %v3619 = vadd.f32 %v3305, %v3581
      %v3620 = vld [vmem:[%s2] sm:$0x1]
      %v3622 = vlaneseq
      %v3623 = vshrl.u32 %v3622, 7
      %v3624 = vsub.s32 0, %v3623
      %v3625 = vrot.slane %v3620, %v3624
      %v3627 = vadd.f32 %v3584, %v3625
      %v3628 = vadd.f32 %v3585, %v3625
      %v3629 = vadd.f32 %v3586, %v3625
      %v3630 = vadd.f32 %v3587, %v3625
      %v3631 = vadd.f32 %v3588, %v3625
      %v3632 = vadd.f32 %v3589, %v3625
      %v3633 = vadd.f32 %v3590, %v3625
      %v3634 = vadd.f32 %v3591, %v3625
      %v3635 = vadd.f32 %v3592, %v3625
      %v3636 = vadd.f32 %v3593, %v3625
      %v3637 = vadd.f32 %v3594, %v3625
      %v3638 = vadd.f32 %v3595, %v3625
      %v3639 = vadd.f32 %v3596, %v3625
      %v3640 = vadd.f32 %v3597, %v3625
      %v3641 = vadd.f32 %v3598, %v3625
      %v3642 = vadd.f32 %v3599, %v3625
      %v3643 = vadd.f32 %v3600, %v3625
      %v3644 = vadd.f32 %v3601, %v3625
      %v3645 = vadd.f32 %v3602, %v3625
      %v3646 = vadd.f32 %v3603, %v3625
      %v3647 = vadd.f32 %v3604, %v3625
      %v3648 = vadd.f32 %v3605, %v3625
      %v3649 = vadd.f32 %v3606, %v3625
      %v3650 = vadd.f32 %v3607, %v3625
      %v3651 = vadd.f32 %v3608, %v3625
      %v3652 = vadd.f32 %v3609, %v3625
      %v3653 = vadd.f32 %v3610, %v3625
      %v3654 = vadd.f32 %v3611, %v3625
      %v3655 = vadd.f32 %v3612, %v3625
      %v3656 = vadd.f32 %v3613, %v3625
      %v3657 = vadd.f32 %v3614, %v3625
      %v3658 = vadd.f32 %v3615, %v3625
      %v3659 = vadd.f32 %v3616, %v3625
      %v3660 = vadd.f32 %v3617, %v3625
      %v3661 = vadd.f32 %v3618, %v3625
      %v3662 = vadd.f32 %v3619, %v3625
      %v3663 = vmax.f32 %v3627, 0.0
      %v3664 = vmax.f32 %v3628, 0.0
      %v3665 = vmax.f32 %v3629, 0.0
      %v3666 = vmax.f32 %v3630, 0.0
      %v3667 = vmax.f32 %v3631, 0.0
      %v3668 = vmax.f32 %v3632, 0.0
      %v3669 = vmax.f32 %v3633, 0.0
      %v3670 = vmax.f32 %v3634, 0.0
      %v3671 = vmax.f32 %v3635, 0.0
      %v3672 = vmax.f32 %v3636, 0.0
      %v3673 = vmax.f32 %v3637, 0.0
      %v3674 = vmax.f32 %v3638, 0.0
      %v3675 = vmax.f32 %v3639, 0.0
      %v3676 = vmax.f32 %v3640, 0.0
      %v3677 = vmax.f32 %v3641, 0.0
      %v3678 = vmax.f32 %v3642, 0.0
      %v3679 = vmax.f32 %v3643, 0.0
      %v3680 = vmax.f32 %v3644, 0.0
      %v3681 = vmax.f32 %v3645, 0.0
      %v3682 = vmax.f32 %v3646, 0.0
      %v3683 = vmax.f32 %v3647, 0.0
      %v3684 = vmax.f32 %v3648, 0.0
      %v3685 = vmax.f32 %v3649, 0.0
      %v3686 = vmax.f32 %v3650, 0.0
      %v3687 = vmax.f32 %v3651, 0.0
      %v3688 = vmax.f32 %v3652, 0.0
      %v3689 = vmax.f32 %v3653, 0.0
      %v3690 = vmax.f32 %v3654, 0.0
      %v3691 = vmax.f32 %v3655, 0.0
      %v3692 = vmax.f32 %v3656, 0.0
      %v3693 = vmax.f32 %v3657, 0.0
      %v3694 = vmax.f32 %v3658, 0.0
      %v3695 = vmax.f32 %v3659, 0.0
      %v3696 = vmax.f32 %v3660, 0.0
      %v3697 = vmax.f32 %v3661, 0.0
      %v3698 = vmax.f32 %v3662, 0.0
      %3699 = vst [vmem:[%s170] sm:$0xff] %v3663
      %3700 = vst [vmem:[%s170 + $0x8] sm:$0xff] %v3664
      %3701 = vst [vmem:[%s170 + $0x10] sm:$0xff] %v3665
      %3702 = vst [vmem:[%s170 + $0x18] sm:$0xff] %v3666
      %3703 = vst [vmem:[%s170 + $0x20] sm:$0xff] %v3667
      %3704 = vst [vmem:[%s170 + $0x28] sm:$0xff] %v3668
      %3705 = vst [vmem:[%s170 + $0x30] sm:$0xff] %v3669
      %3706 = vst [vmem:[%s170 + $0x38] sm:$0xff] %v3670
      %3707 = vst [vmem:[%s170 + $0x40] sm:$0xff] %v3671
      %3708 = vst [vmem:[%s170 + $0x48] sm:$0xff] %v3672
      %3709 = vst [vmem:[%s170 + $0x50] sm:$0xff] %v3673
      %3710 = vst [vmem:[%s170 + $0x58] sm:$0xff] %v3674
      %3711 = vst [vmem:[%s170 + $0x60] sm:$0xff] %v3675
      %3712 = vst [vmem:[%s170 + $0x68] sm:$0xff] %v3676
      %3713 = vst [vmem:[%s170 + $0x70] sm:$0xff] %v3677
      %3714 = vst [vmem:[%s170 + $0x78] sm:$0xff] %v3678
      %3715 = vst [vmem:[%s170 + $0x80] sm:$0xff] %v3679
      %3716 = vst [vmem:[%s170 + $0x88] sm:$0xff] %v3680
      %3717 = vst [vmem:[%s170 + $0x90] sm:$0xff] %v3681
      %3718 = vst [vmem:[%s170 + $0x98] sm:$0xff] %v3682
      %3719 = vst [vmem:[%s170 + $0xa0] sm:$0xff] %v3683
      %3720 = vst [vmem:[%s170 + $0xa8] sm:$0xff] %v3684
      %3721 = vst [vmem:[%s170 + $0xb0] sm:$0xff] %v3685
      %3722 = vst [vmem:[%s170 + $0xb8] sm:$0xff] %v3686
      %3723 = vst [vmem:[%s170 + $0xc0] sm:$0xff] %v3687
      %3724 = vst [vmem:[%s170 + $0xc8] sm:$0xff] %v3688
      %3725 = vst [vmem:[%s170 + $0xd0] sm:$0xff] %v3689
      %3726 = vst [vmem:[%s170 + $0xd8] sm:$0xff] %v3690
      %3727 = vst [vmem:[%s170 + $0xe0] sm:$0xff] %v3691
      %3728 = vst [vmem:[%s170 + $0xe8] sm:$0xff] %v3692
      %3729 = vst [vmem:[%s170 + $0xf0] sm:$0xff] %v3693
      %3730 = vst [vmem:[%s170 + $0xf8] sm:$0xff] %v3694
      %3731 = vst [vmem:[%s170 + $0x100] sm:$0xff] %v3695
      %3732 = vst [vmem:[%s170 + $0x108] sm:$0xff] %v3696
      %3733 = vst [vmem:[%s170 + $0x110] sm:$0xff] %v3697
      %3734 = vst [vmem:[%s170 + $0x118] sm:$0xff] %v3698
      %p3735 = scmp.lt.s32.totalorder %s14, 1
      %s3736 = scalar_select %p3735, %s14, 1
      %s3737 = smul.addr %s3736, 36
      %s3738 = smul.addr %s3737, 8
      %s3739 = scalar_lea.vmem %s3, %s3738
      // Predicated region
      $region33: #{basic_conv2d.1} parent=31 // pred_check
        %p3740 = pneg %p100
      $region34: #{basic_conv2d.1} parent=31 // pred_check_branch
        %3742 = sbr.rel (%p3740) target = $region36
      $region35: #{basic_conv2d.1} parent=31 // pred_region
        _
      $region36: #{basic_conv2d.1} parent=31 // pred_fallthru
        _
    $region32: #{basic_conv2d.1} parent=5 // pred_fallthru
      _
    %p3743 = scmp.le.s32.totalorder 2, %s9
    // Predicated region
    $region37: #{basic_conv2d.1} parent=5 // pred_check
      %p3744 = pneg %p3743
    $region38: #{basic_conv2d.1} parent=5 // pred_check_branch
      %3746 = sbr.rel (%p3744) target = $region40
    $region39: #{basic_conv2d.1} parent=5 // pred_region
      %s3747 = ssub.s32 %s9, 2
      // Predicated region
      $region41: #{basic_conv2d.1} parent=39 // pred_check
        %p3748 = pneg %p106
      $region42: #{basic_conv2d.1} parent=39 // pred_check_branch
        %3750 = sbr.rel (%p3748) target = $region44
      $region43: #{basic_conv2d.1} parent=39 // pred_region
        %p3751 = scmp.lt.s32.totalorder %s15, 1
        %s3752 = scalar_select %p3751, %s15, 1
        %s3753 = smul.addr %s3752, 36
        %s3754 = smul.addr %s3753, 8
        %s3755 = scalar_lea.vmem %s3, %s3754
      $region44: #{basic_conv2d.1} parent=39 // pred_fallthru
        _
    $region40: #{basic_conv2d.1} parent=5 // pred_fallthru
      _
  $region6: #{basic_conv2d.1} parent=0 // loop_footer
    %s13 = sadd.s32 1, %s9
  $region7: #{basic_conv2d.1} parent=0 // loop_footer_branch
    %8 = sbr.rel target = $region3
  $region8: #{basic_conv2d.1} parent=0 // loop_exit
    _

</llo_original>
